<compile_context>
chip_gen: v7x
topology: tpu7x:2x2x1
jax: 0.10.0
libtpu: 0.0.40
codegen_flags: <defaults>
</compile_context>

<pallas_src>
import math

import jax
import jax.numpy as jnp
from jax.experimental import pallas as pl
from jax.experimental.pallas import tpu as pltpu

LANE = 128  # activations, weights and biases are all padded to the lane width


# ---------------------------------------------------------------------------
# Host-side weight packing (everything lane-dense, zero outside logical block)
# ---------------------------------------------------------------------------
def _pack_taps(w):
    """(K, cin, cout) conv taps -> (K, LANE, LANE); zero outside [0:cin, 0:cout]."""
    K, cin, cout = w.shape
    assert cin <= LANE and cout <= LANE  # TODO(synk): tile channels > 128
    return jnp.zeros((K, LANE, LANE), jnp.float32).at[:, :cin, :cout].set(w)


def _pack_mat(w):
    """(cin, cout) 1x1 conv -> (LANE, LANE); zero outside [0:cin, 0:cout]."""
    cin, cout = w.shape
    assert cin <= LANE and cout <= LANE
    return jnp.zeros((LANE, LANE), jnp.float32).at[:cin, :cout].set(w)


def _pack_bias(b):
    return jnp.pad(b.astype(jnp.float32), (0, LANE - b.shape[0])).reshape(1, LANE)


# ---------------------------------------------------------------------------
# Fused TCN kernel (all residual blocks, whole batch, one invocation)
# ---------------------------------------------------------------------------
def _make_fused_tcn_kernel(meta, B, L, K, maxpad):
    n_layers = len(meta)
    BL = B * L

    def kernel(*refs):
        x_ref = refs[0]
        out_ref = refs[-2]
        pad_ref = refs[-1]          # VMEM scratch (B, maxpad+L, LANE), lane-dense
        wrefs = refs[1:-2]

        # Hoisted zero tile, reused for the pad-row fill and the conv2 re-pad
        # (JAX does not CSE broadcast_in_dim -> build it once).
        zpad = jnp.zeros((B, maxpad, LANE), jnp.float32)

        def dconv(xpad, w_ref, b_ref, d):
            # xpad: (B, maxpad+L, LANE) value; activation body lives in rows
            # [maxpad, maxpad+L) of each sample, rows [maxpad-p, maxpad) are zero.
            # One 128-wide MXU matmul per tap over the WHOLE batch (M = B*L);
            # tap results are single lane-dense vreg columns summed on the VPU.
            p = d * (K - 1)
            base = maxpad - p
            acc = None
            for k in range(K):
                xk = xpad[:, base + k * d: base + k * d + L, :]     # (B, L, LANE)
                zk = jnp.dot(xk.reshape(BL, LANE), w_ref[k],
                             preferred_element_type=jnp.float32)    # (BL, LANE)
                acc = zk if acc is None else acc + zk
            return acc + b_ref[...]                                  # bias once

        # Causal pad rows: zeroed ONCE, full lanes, all samples; no conv ever
        # writes rows [0, maxpad) again (invariant required for causality).
        if maxpad > 0:
            pad_ref[:, 0:maxpad, :] = zpad
        # Input is lane-padded to 128 on the host -> unmasked full-lane store.
        pad_ref[:, maxpad:maxpad + L, :] = x_ref[...]

        widx = 0
        for li, m in enumerate(meta):
            d = m["dilation"]
            w1, b1 = wrefs[widx], wrefs[widx + 1]
            w2, b2 = wrefs[widx + 2], wrefs[widx + 3]
            widx += 4
            if m["has_w3"]:
                w3, b3 = wrefs[widx], wrefs[widx + 1]
                widx += 2

            xin = pad_ref[...]                                # (B, maxpad+L, LANE)
            x_body = xin[:, maxpad:, :].reshape(BL, LANE)     # residual input

            # conv1 -> ReLU  (dropout p=0.0 => identity)
            h = jnp.maximum(dconv(xin, w1, b1, d), 0.0)
            # TODO(synk): stochastic dropout would use pltpu.prng_seed +
            # pltpu.stateful_bernoulli; identity here (eval mode / p=0).

            # conv2 input re-padded as a VALUE (h never stored to VMEM)
            hpad = jnp.concatenate([zpad, h.reshape(B, L, LANE)], axis=1)
            y = dconv(hpad, w2, b2, d)
            if m["relu2"]:
                y = jnp.maximum(y, 0.0)

            # residual connection: 1x1 conv if channel counts differ, otherwise a
            # plain lane-dense add (activations carry exact zeros beyond cout).
            if m["has_w3"]:
                res = jnp.dot(x_body, w3[...],
                              preferred_element_type=jnp.float32) + b3[...]
            else:
                res = x_body
            y = y + res

            if li == n_layers - 1:
                out_ref[...] = y.reshape(B, L, LANE)          # lane-dense store
            else:
                pad_ref[:, maxpad:maxpad + L, :] = y.reshape(B, L, LANE)

    return kernel


def tcn_forward(x, blocks, kernel_size):
    """x: (B, L, input_size) float32 -> (B, L, target_size*nr_params).

    Whole TCN forward in a single pallas_call.
    """
    B, L, c0 = x.shape
    K = kernel_size
    maxpad = max(p["dilation"] * (K - 1) for p in blocks)

    # Lane-pad the input on the host so every in-kernel store is full-lane.
    x_lane = jnp.pad(x.astype(jnp.float32), ((0, 0), (0, 0), (0, LANE - c0)))

    args = [x_lane]
    in_specs = [pl.BlockSpec((B, L, LANE), lambda i: (0, 0, 0))]

    def add3(a):
        args.append(a)
        in_specs.append(pl.BlockSpec(a.shape, lambda i: (0, 0, 0)))

    def add2(a):
        args.append(a)
        in_specs.append(pl.BlockSpec(a.shape, lambda i: (0, 0)))

    meta = []
    for p in blocks:
        add3(_pack_taps(p["w1"]))
        add2(_pack_bias(p["b1"]))
        add3(_pack_taps(p["w2"]))
        add2(_pack_bias(p["b2"]))
        has_w3 = "w3" in p
        if has_w3:
            add2(_pack_mat(p["w3"]))
            add2(_pack_bias(p["b3"]))
        meta.append(dict(dilation=p["dilation"], relu2=p["relu2"], has_w3=has_w3))

    cout_last = blocks[-1]["w2"].shape[2]
    kernel = _make_fused_tcn_kernel(meta, B, L, K, maxpad)

    out_padded = pl.pallas_call(
        kernel,
        out_shape=jax.ShapeDtypeStruct((B, L, LANE), jnp.float32),
        grid_spec=pltpu.PrefetchScalarGridSpec(
            num_scalar_prefetch=0,
            grid=(1,),   # toy size: total work << per-step overhead; at scale on
                         # v7x put B on a "parallel" grid axis to use both TCs.
            in_specs=in_specs,
            out_specs=pl.BlockSpec((B, L, LANE), lambda i: (0, 0, 0)),
            scratch_shapes=[pltpu.VMEM((B, maxpad + L, LANE), jnp.float32)],
        ),
        compiler_params=pltpu.CompilerParams(dimension_semantics=("arbitrary",)),
    )(*args)
    return out_padded[:, :, :cout_last]


# ---------------------------------------------------------------------------
# Parameter construction (deterministic, PyTorch Conv1d-style uniform init)
# ---------------------------------------------------------------------------
def init_conv_params(key, cin, cout, ksize):
    bound = 1.0 / math.sqrt(cin * ksize)
    kw, kb = jax.random.split(key)
    # stored as (K, Cin, Cout) == PyTorch (Cout, Cin, K) transposed
    w = jax.random.uniform(kw, (ksize, cin, cout), jnp.float32, -bound, bound)
    b = jax.random.uniform(kb, (cout,), jnp.float32, -bound, bound)
    return w, b


def build_tcn_params(key, input_size, input_chunk_length, kernel_size, num_filters,
                     num_layers=None, target_size=1, nr_params=1, dilation_base=2):
    if num_layers is None and dilation_base > 1:
        num_layers = math.ceil(math.log(
            (input_chunk_length - 1) * (dilation_base - 1) / (kernel_size - 1) / 2 + 1,
            dilation_base))
    elif num_layers is None:
        num_layers = math.ceil((input_chunk_length - 1) / (kernel_size - 1) / 2)

    blocks = []
    for i in range(num_layers):
        input_dim = input_size if i == 0 else num_filters
        output_dim = target_size * nr_params if i == num_layers - 1 else num_filters
        key, k1, k2, k3 = jax.random.split(key, 4)
        w1, b1 = init_conv_params(k1, input_dim, num_filters, kernel_size)
        w2, b2 = init_conv_params(k2, num_filters, output_dim, kernel_size)
        p = {"w1": w1, "b1": b1, "w2": w2, "b2": b2,
             "dilation": dilation_base ** i, "relu2": i < num_layers - 1}
        if input_dim != output_dim:
            w3, b3 = init_conv_params(k3, input_dim, output_dim, 1)
            p["w3"] = w3[0]          # (Cin, Cout) 1x1 conv
            p["b3"] = b3
        blocks.append(p)
    # TODO(synk): weight_norm reparameterization not modeled (weight_norm=False).
    return blocks, num_layers


# ---------------------------------------------------------------------------
# Pure-JAX reference (same math, no Pallas) for validation
# ---------------------------------------------------------------------------
def _conv1d_causal_ref(x, w, b, dilation):
    K = w.shape[0]
    pad = dilation * (K - 1)
    L = x.shape[1]
    xp = jnp.pad(x, ((0, 0), (pad, 0), (0, 0)))
    out = jnp.zeros((x.shape[0], L, w.shape[2]), jnp.float32) + b
    for k in range(K):
        out = out + jnp.einsum("blc,cf->blf",
                               xp[:, k * dilation:k * dilation + L, :], w[k])
    return out


def tcn_forward_ref(x, blocks, kernel_size):
    for p in blocks:
        res = x
        h = jnp.maximum(_conv1d_causal_ref(x, p["w1"], p["b1"], p["dilation"]), 0.0)
        y = _conv1d_causal_ref(h, p["w2"], p["b2"], p["dilation"])
        if p["relu2"]:
            y = jnp.maximum(y, 0.0)
        if "w3" in p:
            res = jnp.einsum("blc,cf->blf", res, p["w3"]) + p["b3"]
        x = y + res
    return x


# ---------------------------------------------------------------------------
if __name__ == "__main__":
    key = jax.random.PRNGKey(0)
    kx, kp = jax.random.split(key)

    # Small TCN config: input_size=4, input_chunk_length=16, kernel_size=3,
    # num_filters=8, num_layers=None (-> 3), dropout=0.0, target_size=1,
    # nr_params=1, dilation_base=2, weight_norm=False.
    B, L, C = 2, 16, 4
    kernel_size = 3
    num_filters = 8

    x = jax.random.normal(kx, (B, L, C), jnp.float32)  # (batch, time, features)
    blocks, num_layers = build_tcn_params(
        kp, input_size=C, input_chunk_length=L, kernel_size=kernel_size,
        num_filters=num_filters, num_layers=None, target_size=1, nr_params=1,
        dilation_base=2)

    out = tcn_forward(x, blocks, kernel_size)
    out = jax.block_until_ready(out)

    ref = tcn_forward_ref(x, blocks, kernel_size)
    assert out.shape == (B, L, 1), out.shape
    assert jnp.allclose(out, ref, atol=1e-5, rtol=1e-5), \
        float(jnp.max(jnp.abs(out - ref)))

    print("KERNEL_OK")
</pallas_src>

<mosaic_0001>
module attributes {stable_mosaic.version = 11 : i64} {
  func.func @kernel(%arg0: i32, %arg1: memref<2x16x128xf32, #tpu.memory_space<vmem>>, %arg2: memref<3x128x128xf32, #tpu.memory_space<vmem>>, %arg3: memref<1x128xf32, #tpu.memory_space<vmem>>, %arg4: memref<3x128x128xf32, #tpu.memory_space<vmem>>, %arg5: memref<1x128xf32, #tpu.memory_space<vmem>>, %arg6: memref<128x128xf32, #tpu.memory_space<vmem>>, %arg7: memref<1x128xf32, #tpu.memory_space<vmem>>, %arg8: memref<3x128x128xf32, #tpu.memory_space<vmem>>, %arg9: memref<1x128xf32, #tpu.memory_space<vmem>>, %arg10: memref<3x128x128xf32, #tpu.memory_space<vmem>>, %arg11: memref<1x128xf32, #tpu.memory_space<vmem>>, %arg12: memref<3x128x128xf32, #tpu.memory_space<vmem>>, %arg13: memref<1x128xf32, #tpu.memory_space<vmem>>, %arg14: memref<3x128x128xf32, #tpu.memory_space<vmem>>, %arg15: memref<1x128xf32, #tpu.memory_space<vmem>>, %arg16: memref<128x128xf32, #tpu.memory_space<vmem>>, %arg17: memref<1x128xf32, #tpu.memory_space<vmem>>, %arg18: memref<2x16x128xf32, #tpu.memory_space<vmem>>, %arg19: memref<2x24x128xf32, #tpu.memory_space<vmem>>) attributes {dimension_semantics = [#tpu.dimension_semantics<arbitrary>], iteration_bounds = array<i64: 1>, scalar_prefetch = 0 : i64, scratch_operands = 1 : i64, tpu.core_type = #tpu.core_type<tc>, window_params = [{pipeline_mode = #tpu.pipeline_mode<synchronous>, transform_indices = @transform_0, window_bounds = array<i64: 2, 16, 128>}, {pipeline_mode = #tpu.pipeline_mode<synchronous>, transform_indices = @transform_1, window_bounds = array<i64: 3, 128, 128>}, {pipeline_mode = #tpu.pipeline_mode<synchronous>, transform_indices = @transform_2, window_bounds = array<i64: 1, 128>}, {pipeline_mode = #tpu.pipeline_mode<synchronous>, transform_indices = @transform_3, window_bounds = array<i64: 3, 128, 128>}, {pipeline_mode = #tpu.pipeline_mode<synchronous>, transform_indices = @transform_4, window_bounds = array<i64: 1, 128>}, {pipeline_mode = #tpu.pipeline_mode<synchronous>, transform_indices = @transform_5, window_bounds = array<i64: 128, 128>}, {pipeline_mode = #tpu.pipeline_mode<synchronous>, transform_indices = @transform_6, window_bounds = array<i64: 1, 128>}, {pipeline_mode = #tpu.pipeline_mode<synchronous>, transform_indices = @transform_7, window_bounds = array<i64: 3, 128, 128>}, {pipeline_mode = #tpu.pipeline_mode<synchronous>, transform_indices = @transform_8, window_bounds = array<i64: 1, 128>}, {pipeline_mode = #tpu.pipeline_mode<synchronous>, transform_indices = @transform_9, window_bounds = array<i64: 3, 128, 128>}, {pipeline_mode = #tpu.pipeline_mode<synchronous>, transform_indices = @transform_10, window_bounds = array<i64: 1, 128>}, {pipeline_mode = #tpu.pipeline_mode<synchronous>, transform_indices = @transform_11, window_bounds = array<i64: 3, 128, 128>}, {pipeline_mode = #tpu.pipeline_mode<synchronous>, transform_indices = @transform_12, window_bounds = array<i64: 1, 128>}, {pipeline_mode = #tpu.pipeline_mode<synchronous>, transform_indices = @transform_13, window_bounds = array<i64: 3, 128, 128>}, {pipeline_mode = #tpu.pipeline_mode<synchronous>, transform_indices = @transform_14, window_bounds = array<i64: 1, 128>}, {pipeline_mode = #tpu.pipeline_mode<synchronous>, transform_indices = @transform_15, window_bounds = array<i64: 128, 128>}, {pipeline_mode = #tpu.pipeline_mode<synchronous>, transform_indices = @transform_16, window_bounds = array<i64: 1, 128>}, {pipeline_mode = #tpu.pipeline_mode<synchronous>, transform_indices = @transform_17, window_bounds = array<i64: 2, 16, 128>}]} {
    %cst = arith.constant 0.000000e+00 : f32
    %0 = vector.broadcast %cst : f32 to vector<2x8x128xf32>
    %c0 = arith.constant 0 : index
    %c0_0 = arith.constant 0 : index
    %c0_1 = arith.constant 0 : index
    %1 = vector.load %arg19[%c0, %c0_0, %c0_1] : memref<2x24x128xf32, #tpu.memory_space<vmem>>, vector<2x8x128xf32>
    tpu.vector_store %arg19[%c0, %c0_0, %c0_1], %0 {strides = array<i32>} : memref<2x24x128xf32, #tpu.memory_space<vmem>>, vector<2x8x128xf32>,
    %c0_2 = arith.constant 0 : index
    %c0_3 = arith.constant 0 : index
    %c0_4 = arith.constant 0 : index
    %2 = vector.load %arg1[%c0_2, %c0_3, %c0_4] : memref<2x16x128xf32, #tpu.memory_space<vmem>>, vector<2x16x128xf32>
    %c0_5 = arith.constant 0 : index
    %c8 = arith.constant 8 : index
    %c0_6 = arith.constant 0 : index
    %3 = vector.load %arg19[%c0_5, %c8, %c0_6] : memref<2x24x128xf32, #tpu.memory_space<vmem>>, vector<2x16x128xf32>
    tpu.vector_store %arg19[%c0_5, %c8, %c0_6], %2 {strides = array<i32>} : memref<2x24x128xf32, #tpu.memory_space<vmem>>, vector<2x16x128xf32>,
    %c0_7 = arith.constant 0 : index
    %c0_8 = arith.constant 0 : index
    %c0_9 = arith.constant 0 : index
    %4 = vector.load %arg19[%c0_7, %c0_8, %c0_9] : memref<2x24x128xf32, #tpu.memory_space<vmem>>, vector<2x24x128xf32>
    %5 = vector.extract_strided_slice %4 {offsets = [0, 8, 0], sizes = [2, 16, 128], strides = [1, 1, 1]} : vector<2x24x128xf32> to vector<2x16x128xf32>
    %6 = vector.shape_cast %5 : vector<2x16x128xf32> to vector<32x128xf32>
    %7 = vector.extract_strided_slice %4 {offsets = [0, 6, 0], sizes = [2, 16, 128], strides = [1, 1, 1]} : vector<2x24x128xf32> to vector<2x16x128xf32>
    %8 = vector.shape_cast %7 : vector<2x16x128xf32> to vector<32x128xf32>
    %c0_10 = arith.constant 0 : index
    %c0_11 = arith.constant 0 : index
    %c0_12 = arith.constant 0 : index
    %9 = vector.load %arg2[%c0_10, %c0_11, %c0_12] : memref<3x128x128xf32, #tpu.memory_space<vmem>>, vector<1x128x128xf32>
    %10 = vector.shape_cast %9 : vector<1x128x128xf32> to vector<128x128xf32>
    %cst_13 = arith.constant dense<0.000000e+00> : vector<32x128xf32>
    %11 = tpu.matmul %8, %10, %cst_13 {dimension_numbers = #tpu.dot_dimension_numbers<[1], [0], [0], [1], [0, 0, 1, 1], [], []>} : vector<32x128xf32>, vector<128x128xf32>, vector<32x128xf32> -> vector<32x128xf32>
    %12 = vector.extract_strided_slice %4 {offsets = [0, 7, 0], sizes = [2, 16, 128], strides = [1, 1, 1]} : vector<2x24x128xf32> to vector<2x16x128xf32>
    %13 = vector.shape_cast %12 : vector<2x16x128xf32> to vector<32x128xf32>
    %c1 = arith.constant 1 : index
    %c0_14 = arith.constant 0 : index
    %c0_15 = arith.constant 0 : index
    %14 = vector.load %arg2[%c1, %c0_14, %c0_15] : memref<3x128x128xf32, #tpu.memory_space<vmem>>, vector<1x128x128xf32>
    %15 = vector.shape_cast %14 : vector<1x128x128xf32> to vector<128x128xf32>
    %cst_16 = arith.constant dense<0.000000e+00> : vector<32x128xf32>
    %16 = tpu.matmul %13, %15, %cst_16 {dimension_numbers = #tpu.dot_dimension_numbers<[1], [0], [0], [1], [0, 0, 1, 1], [], []>} : vector<32x128xf32>, vector<128x128xf32>, vector<32x128xf32> -> vector<32x128xf32>
    %17 = arith.addf %11, %16 : vector<32x128xf32>
    %18 = vector.extract_strided_slice %4 {offsets = [0, 8, 0], sizes = [2, 16, 128], strides = [1, 1, 1]} : vector<2x24x128xf32> to vector<2x16x128xf32>
    %19 = vector.shape_cast %18 : vector<2x16x128xf32> to vector<32x128xf32>
    %c2 = arith.constant 2 : index
    %c0_17 = arith.constant 0 : index
    %c0_18 = arith.constant 0 : index
    %20 = vector.load %arg2[%c2, %c0_17, %c0_18] : memref<3x128x128xf32, #tpu.memory_space<vmem>>, vector<1x128x128xf32>
    %21 = vector.shape_cast %20 : vector<1x128x128xf32> to vector<128x128xf32>
    %cst_19 = arith.constant dense<0.000000e+00> : vector<32x128xf32>
    %22 = tpu.matmul %19, %21, %cst_19 {dimension_numbers = #tpu.dot_dimension_numbers<[1], [0], [0], [1], [0, 0, 1, 1], [], []>} : vector<32x128xf32>, vector<128x128xf32>, vector<32x128xf32> -> vector<32x128xf32>
    %23 = arith.addf %17, %22 : vector<32x128xf32>
    %c0_20 = arith.constant 0 : index
    %c0_21 = arith.constant 0 : index
    %24 = vector.load %arg3[%c0_20, %c0_21] : memref<1x128xf32, #tpu.memory_space<vmem>>, vector<1x128xf32>
    %25 = vector.broadcast %24 : vector<1x128xf32> to vector<32x128xf32>
    %26 = arith.addf %23, %25 : vector<32x128xf32>
    %cst_22 = arith.constant 0.000000e+00 : f32
    %27 = vector.broadcast %cst_22 : f32 to vector<32x128xf32>
    %28 = arith.maximumf %26, %27 : vector<32x128xf32>
    %29 = vector.shape_cast %28 : vector<32x128xf32> to vector<2x16x128xf32>
    %30 = tpu.concatenate %0, %29 in 1 : vector<2x8x128xf32>, vector<2x16x128xf32> -> vector<2x24x128xf32>
    %31 = vector.extract_strided_slice %30 {offsets = [0, 6, 0], sizes = [2, 16, 128], strides = [1, 1, 1]} : vector<2x24x128xf32> to vector<2x16x128xf32>
    %32 = vector.shape_cast %31 : vector<2x16x128xf32> to vector<32x128xf32>
    %c0_23 = arith.constant 0 : index
    %c0_24 = arith.constant 0 : index
    %c0_25 = arith.constant 0 : index
    %33 = vector.load %arg4[%c0_23, %c0_24, %c0_25] : memref<3x128x128xf32, #tpu.memory_space<vmem>>, vector<1x128x128xf32>
    %34 = vector.shape_cast %33 : vector<1x128x128xf32> to vector<128x128xf32>
    %cst_26 = arith.constant dense<0.000000e+00> : vector<32x128xf32>
    %35 = tpu.matmul %32, %34, %cst_26 {dimension_numbers = #tpu.dot_dimension_numbers<[1], [0], [0], [1], [0, 0, 1, 1], [], []>} : vector<32x128xf32>, vector<128x128xf32>, vector<32x128xf32> -> vector<32x128xf32>
    %36 = vector.extract_strided_slice %30 {offsets = [0, 7, 0], sizes = [2, 16, 128], strides = [1, 1, 1]} : vector<2x24x128xf32> to vector<2x16x128xf32>
    %37 = vector.shape_cast %36 : vector<2x16x128xf32> to vector<32x128xf32>
    %c1_27 = arith.constant 1 : index
    %c0_28 = arith.constant 0 : index
    %c0_29 = arith.constant 0 : index
    %38 = vector.load %arg4[%c1_27, %c0_28, %c0_29] : memref<3x128x128xf32, #tpu.memory_space<vmem>>, vector<1x128x128xf32>
    %39 = vector.shape_cast %38 : vector<1x128x128xf32> to vector<128x128xf32>
    %cst_30 = arith.constant dense<0.000000e+00> : vector<32x128xf32>
    %40 = tpu.matmul %37, %39, %cst_30 {dimension_numbers = #tpu.dot_dimension_numbers<[1], [0], [0], [1], [0, 0, 1, 1], [], []>} : vector<32x128xf32>, vector<128x128xf32>, vector<32x128xf32> -> vector<32x128xf32>
    %41 = arith.addf %35, %40 : vector<32x128xf32>
    %42 = vector.extract_strided_slice %30 {offsets = [0, 8, 0], sizes = [2, 16, 128], strides = [1, 1, 1]} : vector<2x24x128xf32> to vector<2x16x128xf32>
    %43 = vector.shape_cast %42 : vector<2x16x128xf32> to vector<32x128xf32>
    %c2_31 = arith.constant 2 : index
    %c0_32 = arith.constant 0 : index
    %c0_33 = arith.constant 0 : index
    %44 = vector.load %arg4[%c2_31, %c0_32, %c0_33] : memref<3x128x128xf32, #tpu.memory_space<vmem>>, vector<1x128x128xf32>
    %45 = vector.shape_cast %44 : vector<1x128x128xf32> to vector<128x128xf32>
    %cst_34 = arith.constant dense<0.000000e+00> : vector<32x128xf32>
    %46 = tpu.matmul %43, %45, %cst_34 {dimension_numbers = #tpu.dot_dimension_numbers<[1], [0], [0], [1], [0, 0, 1, 1], [], []>} : vector<32x128xf32>, vector<128x128xf32>, vector<32x128xf32> -> vector<32x128xf32>
    %47 = arith.addf %41, %46 : vector<32x128xf32>
    %c0_35 = arith.constant 0 : index
    %c0_36 = arith.constant 0 : index
    %48 = vector.load %arg5[%c0_35, %c0_36] : memref<1x128xf32, #tpu.memory_space<vmem>>, vector<1x128xf32>
    %49 = vector.broadcast %48 : vector<1x128xf32> to vector<32x128xf32>
    %50 = arith.addf %47, %49 : vector<32x128xf32>
    %cst_37 = arith.constant 0.000000e+00 : f32
    %51 = vector.broadcast %cst_37 : f32 to vector<32x128xf32>
    %52 = arith.maximumf %50, %51 : vector<32x128xf32>
    %c0_38 = arith.constant 0 : index
    %c0_39 = arith.constant 0 : index
    %53 = vector.load %arg6[%c0_38, %c0_39] : memref<128x128xf32, #tpu.memory_space<vmem>>, vector<128x128xf32>
    %cst_40 = arith.constant dense<0.000000e+00> : vector<32x128xf32>
    %54 = tpu.matmul %6, %53, %cst_40 {dimension_numbers = #tpu.dot_dimension_numbers<[1], [0], [0], [1], [0, 0, 1, 1], [], []>} : vector<32x128xf32>, vector<128x128xf32>, vector<32x128xf32> -> vector<32x128xf32>
    %c0_41 = arith.constant 0 : index
    %c0_42 = arith.constant 0 : index
    %55 = vector.load %arg7[%c0_41, %c0_42] : memref<1x128xf32, #tpu.memory_space<vmem>>, vector<1x128xf32>
    %56 = vector.broadcast %55 : vector<1x128xf32> to vector<32x128xf32>
    %57 = arith.addf %54, %56 : vector<32x128xf32>
    %58 = arith.addf %52, %57 : vector<32x128xf32>
    %59 = vector.shape_cast %58 : vector<32x128xf32> to vector<2x16x128xf32>
    %c0_43 = arith.constant 0 : index
    %c8_44 = arith.constant 8 : index
    %c0_45 = arith.constant 0 : index
    %60 = vector.load %arg19[%c0_43, %c8_44, %c0_45] : memref<2x24x128xf32, #tpu.memory_space<vmem>>, vector<2x16x128xf32>
    tpu.vector_store %arg19[%c0_43, %c8_44, %c0_45], %59 {strides = array<i32>} : memref<2x24x128xf32, #tpu.memory_space<vmem>>, vector<2x16x128xf32>,
    %c0_46 = arith.constant 0 : index
    %c0_47 = arith.constant 0 : index
    %c0_48 = arith.constant 0 : index
    %61 = vector.load %arg19[%c0_46, %c0_47, %c0_48] : memref<2x24x128xf32, #tpu.memory_space<vmem>>, vector<2x24x128xf32>
    %62 = vector.extract_strided_slice %61 {offsets = [0, 8, 0], sizes = [2, 16, 128], strides = [1, 1, 1]} : vector<2x24x128xf32> to vector<2x16x128xf32>
    %63 = vector.shape_cast %62 : vector<2x16x128xf32> to vector<32x128xf32>
    %64 = vector.extract_strided_slice %61 {offsets = [0, 4, 0], sizes = [2, 16, 128], strides = [1, 1, 1]} : vector<2x24x128xf32> to vector<2x16x128xf32>
    %65 = vector.shape_cast %64 : vector<2x16x128xf32> to vector<32x128xf32>
    %c0_49 = arith.constant 0 : index
    %c0_50 = arith.constant 0 : index
    %c0_51 = arith.constant 0 : index
    %66 = vector.load %arg8[%c0_49, %c0_50, %c0_51] : memref<3x128x128xf32, #tpu.memory_space<vmem>>, vector<1x128x128xf32>
    %67 = vector.shape_cast %66 : vector<1x128x128xf32> to vector<128x128xf32>
    %cst_52 = arith.constant dense<0.000000e+00> : vector<32x128xf32>
    %68 = tpu.matmul %65, %67, %cst_52 {dimension_numbers = #tpu.dot_dimension_numbers<[1], [0], [0], [1], [0, 0, 1, 1], [], []>} : vector<32x128xf32>, vector<128x128xf32>, vector<32x128xf32> -> vector<32x128xf32>
    %69 = vector.extract_strided_slice %61 {offsets = [0, 6, 0], sizes = [2, 16, 128], strides = [1, 1, 1]} : vector<2x24x128xf32> to vector<2x16x128xf32>
    %70 = vector.shape_cast %69 : vector<2x16x128xf32> to vector<32x128xf32>
    %c1_53 = arith.constant 1 : index
    %c0_54 = arith.constant 0 : index
    %c0_55 = arith.constant 0 : index
    %71 = vector.load %arg8[%c1_53, %c0_54, %c0_55] : memref<3x128x128xf32, #tpu.memory_space<vmem>>, vector<1x128x128xf32>
    %72 = vector.shape_cast %71 : vector<1x128x128xf32> to vector<128x128xf32>
    %cst_56 = arith.constant dense<0.000000e+00> : vector<32x128xf32>
    %73 = tpu.matmul %70, %72, %cst_56 {dimension_numbers = #tpu.dot_dimension_numbers<[1], [0], [0], [1], [0, 0, 1, 1], [], []>} : vector<32x128xf32>, vector<128x128xf32>, vector<32x128xf32> -> vector<32x128xf32>
    %74 = arith.addf %68, %73 : vector<32x128xf32>
    %75 = vector.extract_strided_slice %61 {offsets = [0, 8, 0], sizes = [2, 16, 128], strides = [1, 1, 1]} : vector<2x24x128xf32> to vector<2x16x128xf32>
    %76 = vector.shape_cast %75 : vector<2x16x128xf32> to vector<32x128xf32>
    %c2_57 = arith.constant 2 : index
    %c0_58 = arith.constant 0 : index
    %c0_59 = arith.constant 0 : index
    %77 = vector.load %arg8[%c2_57, %c0_58, %c0_59] : memref<3x128x128xf32, #tpu.memory_space<vmem>>, vector<1x128x128xf32>
    %78 = vector.shape_cast %77 : vector<1x128x128xf32> to vector<128x128xf32>
    %cst_60 = arith.constant dense<0.000000e+00> : vector<32x128xf32>
    %79 = tpu.matmul %76, %78, %cst_60 {dimension_numbers = #tpu.dot_dimension_numbers<[1], [0], [0], [1], [0, 0, 1, 1], [], []>} : vector<32x128xf32>, vector<128x128xf32>, vector<32x128xf32> -> vector<32x128xf32>
    %80 = arith.addf %74, %79 : vector<32x128xf32>
    %c0_61 = arith.constant 0 : index
    %c0_62 = arith.constant 0 : index
    %81 = vector.load %arg9[%c0_61, %c0_62] : memref<1x128xf32, #tpu.memory_space<vmem>>, vector<1x128xf32>
    %82 = vector.broadcast %81 : vector<1x128xf32> to vector<32x128xf32>
    %83 = arith.addf %80, %82 : vector<32x128xf32>
    %cst_63 = arith.constant 0.000000e+00 : f32
    %84 = vector.broadcast %cst_63 : f32 to vector<32x128xf32>
    %85 = arith.maximumf %83, %84 : vector<32x128xf32>
    %86 = vector.shape_cast %85 : vector<32x128xf32> to vector<2x16x128xf32>
    %87 = tpu.concatenate %0, %86 in 1 : vector<2x8x128xf32>, vector<2x16x128xf32> -> vector<2x24x128xf32>
    %88 = vector.extract_strided_slice %87 {offsets = [0, 4, 0], sizes = [2, 16, 128], strides = [1, 1, 1]} : vector<2x24x128xf32> to vector<2x16x128xf32>
    %89 = vector.shape_cast %88 : vector<2x16x128xf32> to vector<32x128xf32>
    %c0_64 = arith.constant 0 : index
    %c0_65 = arith.constant 0 : index
    %c0_66 = arith.constant 0 : index
    %90 = vector.load %arg10[%c0_64, %c0_65, %c0_66] : memref<3x128x128xf32, #tpu.memory_space<vmem>>, vector<1x128x128xf32>
    %91 = vector.shape_cast %90 : vector<1x128x128xf32> to vector<128x128xf32>
    %cst_67 = arith.constant dense<0.000000e+00> : vector<32x128xf32>
    %92 = tpu.matmul %89, %91, %cst_67 {dimension_numbers = #tpu.dot_dimension_numbers<[1], [0], [0], [1], [0, 0, 1, 1], [], []>} : vector<32x128xf32>, vector<128x128xf32>, vector<32x128xf32> -> vector<32x128xf32>
    %93 = vector.extract_strided_slice %87 {offsets = [0, 6, 0], sizes = [2, 16, 128], strides = [1, 1, 1]} : vector<2x24x128xf32> to vector<2x16x128xf32>
    %94 = vector.shape_cast %93 : vector<2x16x128xf32> to vector<32x128xf32>
    %c1_68 = arith.constant 1 : index
    %c0_69 = arith.constant 0 : index
    %c0_70 = arith.constant 0 : index
    %95 = vector.load %arg10[%c1_68, %c0_69, %c0_70] : memref<3x128x128xf32, #tpu.memory_space<vmem>>, vector<1x128x128xf32>
    %96 = vector.shape_cast %95 : vector<1x128x128xf32> to vector<128x128xf32>
    %cst_71 = arith.constant dense<0.000000e+00> : vector<32x128xf32>
    %97 = tpu.matmul %94, %96, %cst_71 {dimension_numbers = #tpu.dot_dimension_numbers<[1], [0], [0], [1], [0, 0, 1, 1], [], []>} : vector<32x128xf32>, vector<128x128xf32>, vector<32x128xf32> -> vector<32x128xf32>
    %98 = arith.addf %92, %97 : vector<32x128xf32>
    %99 = vector.extract_strided_slice %87 {offsets = [0, 8, 0], sizes = [2, 16, 128], strides = [1, 1, 1]} : vector<2x24x128xf32> to vector<2x16x128xf32>
    %100 = vector.shape_cast %99 : vector<2x16x128xf32> to vector<32x128xf32>
    %c2_72 = arith.constant 2 : index
    %c0_73 = arith.constant 0 : index
    %c0_74 = arith.constant 0 : index
    %101 = vector.load %arg10[%c2_72, %c0_73, %c0_74] : memref<3x128x128xf32, #tpu.memory_space<vmem>>, vector<1x128x128xf32>
    %102 = vector.shape_cast %101 : vector<1x128x128xf32> to vector<128x128xf32>
    %cst_75 = arith.constant dense<0.000000e+00> : vector<32x128xf32>
    %103 = tpu.matmul %100, %102, %cst_75 {dimension_numbers = #tpu.dot_dimension_numbers<[1], [0], [0], [1], [0, 0, 1, 1], [], []>} : vector<32x128xf32>, vector<128x128xf32>, vector<32x128xf32> -> vector<32x128xf32>
    %104 = arith.addf %98, %103 : vector<32x128xf32>
    %c0_76 = arith.constant 0 : index
    %c0_77 = arith.constant 0 : index
    %105 = vector.load %arg11[%c0_76, %c0_77] : memref<1x128xf32, #tpu.memory_space<vmem>>, vector<1x128xf32>
    %106 = vector.broadcast %105 : vector<1x128xf32> to vector<32x128xf32>
    %107 = arith.addf %104, %106 : vector<32x128xf32>
    %cst_78 = arith.constant 0.000000e+00 : f32
    %108 = vector.broadcast %cst_78 : f32 to vector<32x128xf32>
    %109 = arith.maximumf %107, %108 : vector<32x128xf32>
    %110 = arith.addf %109, %63 : vector<32x128xf32>
    %111 = vector.shape_cast %110 : vector<32x128xf32> to vector<2x16x128xf32>
    %c0_79 = arith.constant 0 : index
    %c8_80 = arith.constant 8 : index
    %c0_81 = arith.constant 0 : index
    %112 = vector.load %arg19[%c0_79, %c8_80, %c0_81] : memref<2x24x128xf32, #tpu.memory_space<vmem>>, vector<2x16x128xf32>
    tpu.vector_store %arg19[%c0_79, %c8_80, %c0_81], %111 {strides = array<i32>} : memref<2x24x128xf32, #tpu.memory_space<vmem>>, vector<2x16x128xf32>,
    %c0_82 = arith.constant 0 : index
    %c0_83 = arith.constant 0 : index
    %c0_84 = arith.constant 0 : index
    %113 = vector.load %arg19[%c0_82, %c0_83, %c0_84] : memref<2x24x128xf32, #tpu.memory_space<vmem>>, vector<2x24x128xf32>
    %114 = vector.extract_strided_slice %113 {offsets = [0, 8, 0], sizes = [2, 16, 128], strides = [1, 1, 1]} : vector<2x24x128xf32> to vector<2x16x128xf32>
    %115 = vector.shape_cast %114 : vector<2x16x128xf32> to vector<32x128xf32>
    %116 = vector.extract_strided_slice %113 {offsets = [0, 0, 0], sizes = [2, 16, 128], strides = [1, 1, 1]} : vector<2x24x128xf32> to vector<2x16x128xf32>
    %117 = vector.shape_cast %116 : vector<2x16x128xf32> to vector<32x128xf32>
    %c0_85 = arith.constant 0 : index
    %c0_86 = arith.constant 0 : index
    %c0_87 = arith.constant 0 : index
    %118 = vector.load %arg12[%c0_85, %c0_86, %c0_87] : memref<3x128x128xf32, #tpu.memory_space<vmem>>, vector<1x128x128xf32>
    %119 = vector.shape_cast %118 : vector<1x128x128xf32> to vector<128x128xf32>
    %cst_88 = arith.constant dense<0.000000e+00> : vector<32x128xf32>
    %120 = tpu.matmul %117, %119, %cst_88 {dimension_numbers = #tpu.dot_dimension_numbers<[1], [0], [0], [1], [0, 0, 1, 1], [], []>} : vector<32x128xf32>, vector<128x128xf32>, vector<32x128xf32> -> vector<32x128xf32>
    %121 = vector.extract_strided_slice %113 {offsets = [0, 4, 0], sizes = [2, 16, 128], strides = [1, 1, 1]} : vector<2x24x128xf32> to vector<2x16x128xf32>
    %122 = vector.shape_cast %121 : vector<2x16x128xf32> to vector<32x128xf32>
    %c1_89 = arith.constant 1 : index
    %c0_90 = arith.constant 0 : index
    %c0_91 = arith.constant 0 : index
    %123 = vector.load %arg12[%c1_89, %c0_90, %c0_91] : memref<3x128x128xf32, #tpu.memory_space<vmem>>, vector<1x128x128xf32>
    %124 = vector.shape_cast %123 : vector<1x128x128xf32> to vector<128x128xf32>
    %cst_92 = arith.constant dense<0.000000e+00> : vector<32x128xf32>
    %125 = tpu.matmul %122, %124, %cst_92 {dimension_numbers = #tpu.dot_dimension_numbers<[1], [0], [0], [1], [0, 0, 1, 1], [], []>} : vector<32x128xf32>, vector<128x128xf32>, vector<32x128xf32> -> vector<32x128xf32>
    %126 = arith.addf %120, %125 : vector<32x128xf32>
    %127 = vector.extract_strided_slice %113 {offsets = [0, 8, 0], sizes = [2, 16, 128], strides = [1, 1, 1]} : vector<2x24x128xf32> to vector<2x16x128xf32>
    %128 = vector.shape_cast %127 : vector<2x16x128xf32> to vector<32x128xf32>
    %c2_93 = arith.constant 2 : index
    %c0_94 = arith.constant 0 : index
    %c0_95 = arith.constant 0 : index
    %129 = vector.load %arg12[%c2_93, %c0_94, %c0_95] : memref<3x128x128xf32, #tpu.memory_space<vmem>>, vector<1x128x128xf32>
    %130 = vector.shape_cast %129 : vector<1x128x128xf32> to vector<128x128xf32>
    %cst_96 = arith.constant dense<0.000000e+00> : vector<32x128xf32>
    %131 = tpu.matmul %128, %130, %cst_96 {dimension_numbers = #tpu.dot_dimension_numbers<[1], [0], [0], [1], [0, 0, 1, 1], [], []>} : vector<32x128xf32>, vector<128x128xf32>, vector<32x128xf32> -> vector<32x128xf32>
    %132 = arith.addf %126, %131 : vector<32x128xf32>
    %c0_97 = arith.constant 0 : index
    %c0_98 = arith.constant 0 : index
    %133 = vector.load %arg13[%c0_97, %c0_98] : memref<1x128xf32, #tpu.memory_space<vmem>>, vector<1x128xf32>
    %134 = vector.broadcast %133 : vector<1x128xf32> to vector<32x128xf32>
    %135 = arith.addf %132, %134 : vector<32x128xf32>
    %cst_99 = arith.constant 0.000000e+00 : f32
    %136 = vector.broadcast %cst_99 : f32 to vector<32x128xf32>
    %137 = arith.maximumf %135, %136 : vector<32x128xf32>
    %138 = vector.shape_cast %137 : vector<32x128xf32> to vector<2x16x128xf32>
    %139 = tpu.concatenate %0, %138 in 1 : vector<2x8x128xf32>, vector<2x16x128xf32> -> vector<2x24x128xf32>
    %140 = vector.extract_strided_slice %139 {offsets = [0, 0, 0], sizes = [2, 16, 128], strides = [1, 1, 1]} : vector<2x24x128xf32> to vector<2x16x128xf32>
    %141 = vector.shape_cast %140 : vector<2x16x128xf32> to vector<32x128xf32>
    %c0_100 = arith.constant 0 : index
    %c0_101 = arith.constant 0 : index
    %c0_102 = arith.constant 0 : index
    %142 = vector.load %arg14[%c0_100, %c0_101, %c0_102] : memref<3x128x128xf32, #tpu.memory_space<vmem>>, vector<1x128x128xf32>
    %143 = vector.shape_cast %142 : vector<1x128x128xf32> to vector<128x128xf32>
    %cst_103 = arith.constant dense<0.000000e+00> : vector<32x128xf32>
    %144 = tpu.matmul %141, %143, %cst_103 {dimension_numbers = #tpu.dot_dimension_numbers<[1], [0], [0], [1], [0, 0, 1, 1], [], []>} : vector<32x128xf32>, vector<128x128xf32>, vector<32x128xf32> -> vector<32x128xf32>
    %145 = vector.extract_strided_slice %139 {offsets = [0, 4, 0], sizes = [2, 16, 128], strides = [1, 1, 1]} : vector<2x24x128xf32> to vector<2x16x128xf32>
    %146 = vector.shape_cast %145 : vector<2x16x128xf32> to vector<32x128xf32>
    %c1_104 = arith.constant 1 : index
    %c0_105 = arith.constant 0 : index
    %c0_106 = arith.constant 0 : index
    %147 = vector.load %arg14[%c1_104, %c0_105, %c0_106] : memref<3x128x128xf32, #tpu.memory_space<vmem>>, vector<1x128x128xf32>
    %148 = vector.shape_cast %147 : vector<1x128x128xf32> to vector<128x128xf32>
    %cst_107 = arith.constant dense<0.000000e+00> : vector<32x128xf32>
    %149 = tpu.matmul %146, %148, %cst_107 {dimension_numbers = #tpu.dot_dimension_numbers<[1], [0], [0], [1], [0, 0, 1, 1], [], []>} : vector<32x128xf32>, vector<128x128xf32>, vector<32x128xf32> -> vector<32x128xf32>
    %150 = arith.addf %144, %149 : vector<32x128xf32>
    %151 = vector.extract_strided_slice %139 {offsets = [0, 8, 0], sizes = [2, 16, 128], strides = [1, 1, 1]} : vector<2x24x128xf32> to vector<2x16x128xf32>
    %152 = vector.shape_cast %151 : vector<2x16x128xf32> to vector<32x128xf32>
    %c2_108 = arith.constant 2 : index
    %c0_109 = arith.constant 0 : index
    %c0_110 = arith.constant 0 : index
    %153 = vector.load %arg14[%c2_108, %c0_109, %c0_110] : memref<3x128x128xf32, #tpu.memory_space<vmem>>, vector<1x128x128xf32>
    %154 = vector.shape_cast %153 : vector<1x128x128xf32> to vector<128x128xf32>
    %cst_111 = arith.constant dense<0.000000e+00> : vector<32x128xf32>
    %155 = tpu.matmul %152, %154, %cst_111 {dimension_numbers = #tpu.dot_dimension_numbers<[1], [0], [0], [1], [0, 0, 1, 1], [], []>} : vector<32x128xf32>, vector<128x128xf32>, vector<32x128xf32> -> vector<32x128xf32>
    %156 = arith.addf %150, %155 : vector<32x128xf32>
    %c0_112 = arith.constant 0 : index
    %c0_113 = arith.constant 0 : index
    %157 = vector.load %arg15[%c0_112, %c0_113] : memref<1x128xf32, #tpu.memory_space<vmem>>, vector<1x128xf32>
    %158 = vector.broadcast %157 : vector<1x128xf32> to vector<32x128xf32>
    %159 = arith.addf %156, %158 : vector<32x128xf32>
    %c0_114 = arith.constant 0 : index
    %c0_115 = arith.constant 0 : index
    %160 = vector.load %arg16[%c0_114, %c0_115] : memref<128x128xf32, #tpu.memory_space<vmem>>, vector<128x128xf32>
    %cst_116 = arith.constant dense<0.000000e+00> : vector<32x128xf32>
    %161 = tpu.matmul %115, %160, %cst_116 {dimension_numbers = #tpu.dot_dimension_numbers<[1], [0], [0], [1], [0, 0, 1, 1], [], []>} : vector<32x128xf32>, vector<128x128xf32>, vector<32x128xf32> -> vector<32x128xf32>
    %c0_117 = arith.constant 0 : index
    %c0_118 = arith.constant 0 : index
    %162 = vector.load %arg17[%c0_117, %c0_118] : memref<1x128xf32, #tpu.memory_space<vmem>>, vector<1x128xf32>
    %163 = vector.broadcast %162 : vector<1x128xf32> to vector<32x128xf32>
    %164 = arith.addf %161, %163 : vector<32x128xf32>
    %165 = arith.addf %159, %164 : vector<32x128xf32>
    %166 = vector.shape_cast %165 : vector<32x128xf32> to vector<2x16x128xf32>
    %c0_119 = arith.constant 0 : index
    %c0_120 = arith.constant 0 : index
    %c0_121 = arith.constant 0 : index
    %167 = vector.load %arg18[%c0_119, %c0_120, %c0_121] : memref<2x16x128xf32, #tpu.memory_space<vmem>>, vector<2x16x128xf32>
    tpu.vector_store %arg18[%c0_119, %c0_120, %c0_121], %166 {strides = array<i32>} : memref<2x16x128xf32, #tpu.memory_space<vmem>>, vector<2x16x128xf32>,
    return
  }
  func.func @transform_0(%arg0: i32) -> (i32, i32, i32) {
    %c0_i32 = arith.constant 0 : i32
    %c0_i32_0 = arith.constant 0 : i32
    %c0_i32_1 = arith.constant 0 : i32
    %c0_i32_2 = arith.constant 0 : i32
    return %c0_i32, %c0_i32_0, %c0_i32_1 : i32, i32, i32
  }
  func.func @transform_1(%arg0: i32) -> (i32, i32, i32) {
    %c0_i32 = arith.constant 0 : i32
    %c0_i32_0 = arith.constant 0 : i32
    %c0_i32_1 = arith.constant 0 : i32
    %c0_i32_2 = arith.constant 0 : i32
    return %c0_i32, %c0_i32_0, %c0_i32_1 : i32, i32, i32
  }
  func.func @transform_2(%arg0: i32) -> (i32, i32) {
    %c0_i32 = arith.constant 0 : i32
    %c0_i32_0 = arith.constant 0 : i32
    %c0_i32_1 = arith.constant 0 : i32
    return %c0_i32, %c0_i32_0 : i32, i32
  }
  func.func @transform_3(%arg0: i32) -> (i32, i32, i32) {
    %c0_i32 = arith.constant 0 : i32
    %c0_i32_0 = arith.constant 0 : i32
    %c0_i32_1 = arith.constant 0 : i32
    %c0_i32_2 = arith.constant 0 : i32
    return %c0_i32, %c0_i32_0, %c0_i32_1 : i32, i32, i32
  }
  func.func @transform_4(%arg0: i32) -> (i32, i32) {
    %c0_i32 = arith.constant 0 : i32
    %c0_i32_0 = arith.constant 0 : i32
    %c0_i32_1 = arith.constant 0 : i32
    return %c0_i32, %c0_i32_0 : i32, i32
  }
  func.func @transform_5(%arg0: i32) -> (i32, i32) {
    %c0_i32 = arith.constant 0 : i32
    %c0_i32_0 = arith.constant 0 : i32
    %c0_i32_1 = arith.constant 0 : i32
    return %c0_i32, %c0_i32_0 : i32, i32
  }
  func.func @transform_6(%arg0: i32) -> (i32, i32) {
    %c0_i32 = arith.constant 0 : i32
    %c0_i32_0 = arith.constant 0 : i32
    %c0_i32_1 = arith.constant 0 : i32
    return %c0_i32, %c0_i32_0 : i32, i32
  }
  func.func @transform_7(%arg0: i32) -> (i32, i32, i32) {
    %c0_i32 = arith.constant 0 : i32
    %c0_i32_0 = arith.constant 0 : i32
    %c0_i32_1 = arith.constant 0 : i32
    %c0_i32_2 = arith.constant 0 : i32
    return %c0_i32, %c0_i32_0, %c0_i32_1 : i32, i32, i32
  }
  func.func @transform_8(%arg0: i32) -> (i32, i32) {
    %c0_i32 = arith.constant 0 : i32
    %c0_i32_0 = arith.constant 0 : i32
    %c0_i32_1 = arith.constant 0 : i32
    return %c0_i32, %c0_i32_0 : i32, i32
  }
  func.func @transform_9(%arg0: i32) -> (i32, i32, i32) {
    %c0_i32 = arith.constant 0 : i32
    %c0_i32_0 = arith.constant 0 : i32
    %c0_i32_1 = arith.constant 0 : i32
    %c0_i32_2 = arith.constant 0 : i32
    return %c0_i32, %c0_i32_0, %c0_i32_1 : i32, i32, i32
  }
  func.func @transform_10(%arg0: i32) -> (i32, i32) {
    %c0_i32 = arith.constant 0 : i32
    %c0_i32_0 = arith.constant 0 : i32
    %c0_i32_1 = arith.constant 0 : i32
    return %c0_i32, %c0_i32_0 : i32, i32
  }
  func.func @transform_11(%arg0: i32) -> (i32, i32, i32) {
    %c0_i32 = arith.constant 0 : i32
    %c0_i32_0 = arith.constant 0 : i32
    %c0_i32_1 = arith.constant 0 : i32
    %c0_i32_2 = arith.constant 0 : i32
    return %c0_i32, %c0_i32_0, %c0_i32_1 : i32, i32, i32
  }
  func.func @transform_12(%arg0: i32) -> (i32, i32) {
    %c0_i32 = arith.constant 0 : i32
    %c0_i32_0 = arith.constant 0 : i32
    %c0_i32_1 = arith.constant 0 : i32
    return %c0_i32, %c0_i32_0 : i32, i32
  }
  func.func @transform_13(%arg0: i32) -> (i32, i32, i32) {
    %c0_i32 = arith.constant 0 : i32
    %c0_i32_0 = arith.constant 0 : i32
    %c0_i32_1 = arith.constant 0 : i32
    %c0_i32_2 = arith.constant 0 : i32
    return %c0_i32, %c0_i32_0, %c0_i32_1 : i32, i32, i32
  }
  func.func @transform_14(%arg0: i32) -> (i32, i32) {
    %c0_i32 = arith.constant 0 : i32
    %c0_i32_0 = arith.constant 0 : i32
    %c0_i32_1 = arith.constant 0 : i32
    return %c0_i32, %c0_i32_0 : i32, i32
  }
  func.func @transform_15(%arg0: i32) -> (i32, i32) {
    %c0_i32 = arith.constant 0 : i32
    %c0_i32_0 = arith.constant 0 : i32
    %c0_i32_1 = arith.constant 0 : i32
    return %c0_i32, %c0_i32_0 : i32, i32
  }
  func.func @transform_16(%arg0: i32) -> (i32, i32) {
    %c0_i32 = arith.constant 0 : i32
    %c0_i32_0 = arith.constant 0 : i32
    %c0_i32_1 = arith.constant 0 : i32
    return %c0_i32, %c0_i32_0 : i32, i32
  }
  func.func @transform_17(%arg0: i32) -> (i32, i32, i32) {
    %c0_i32 = arith.constant 0 : i32
    %c0_i32_0 = arith.constant 0 : i32
    %c0_i32_1 = arith.constant 0 : i32
    %c0_i32_2 = arith.constant 0 : i32
    return %c0_i32, %c0_i32_0, %c0_i32_1 : i32, i32, i32
  }
}

</mosaic_0001>

<llo_original>
// kernel: tpu_custom_call.1
$region0: #{tpu_custom_call.1}
  #allocation0 [shape = 'u32[]', space=smem, size = 0x4, offset = 0x4, fixed_abs, tag = 'smem constant byte address 0x4 - core index']
  #allocation1 [shape = 'u32[144,128]{1,0:T(1,128)}', space=vmem, size = 0x12000, scoped, tag = 'internal scratch']
  #allocation2 [shape = 'f32[2,24,128]{2,1,0:T(8,128)}', space=vmem, size = 0x6000, scoped, tag = 'scratch operand']
  %s0 = inlined_call_operand.hbm [shape: f32[2,16,128], index: 0, kind: input, shape index: {}]
  %s1 = inlined_call_operand.hbm [shape: f32[3,128,128], index: 1, kind: input, shape index: {}]
  %s2 = inlined_call_operand.vmem [shape: f32[1,128], index: 2, kind: input, shape index: {}]
  %s3 = inlined_call_operand.hbm [shape: f32[3,128,128], index: 3, kind: input, shape index: {}]
  %s4 = inlined_call_operand.vmem [shape: f32[1,128], index: 4, kind: input, shape index: {}]
  %s5 = inlined_call_operand.hbm [shape: f32[128,128], index: 5, kind: input, shape index: {}]
  %s6 = inlined_call_operand.vmem [shape: f32[1,128], index: 6, kind: input, shape index: {}]
  %s7 = inlined_call_operand.hbm [shape: f32[3,128,128], index: 7, kind: input, shape index: {}]
  %s8 = inlined_call_operand.vmem [shape: f32[1,128], index: 8, kind: input, shape index: {}]
  %s9 = inlined_call_operand.hbm [shape: f32[3,128,128], index: 9, kind: input, shape index: {}]
  %s10 = inlined_call_operand.vmem [shape: f32[1,128], index: 10, kind: input, shape index: {}]
  %s11 = inlined_call_operand.hbm [shape: f32[3,128,128], index: 11, kind: input, shape index: {}]
  %s12 = inlined_call_operand.vmem [shape: f32[1,128], index: 12, kind: input, shape index: {}]
  %s13 = inlined_call_operand.hbm [shape: f32[3,128,128], index: 13, kind: input, shape index: {}]
  %s14 = inlined_call_operand.vmem [shape: f32[1,128], index: 14, kind: input, shape index: {}]
  %s15 = inlined_call_operand.hbm [shape: f32[128,128], index: 15, kind: input, shape index: {}]
  %s16 = inlined_call_operand.vmem [shape: f32[1,128], index: 16, kind: input, shape index: {}]
  %s17 = inlined_call_operand.hbm [shape: f32[2,16,128], index: 17, kind: output, shape index: {}]
  %s18 = sld [smem:[#allocation0]]
  $region114: #{tpu_custom_call.1} parent=0
    _
  %s20 = ssub.s32 1, %s18
  %s21 = scalar_select 0, %s20, %s18
  $region1: #{tpu_custom_call.1} parent=0
    #allocation3 [shape = 'u8[16384]{0}', space=vmem, size = 0x4000, scoped, tag = 'input window, operand 0, single buffered']
    #allocation4 [shape = 's32[1]{0}', space=sflag, size = 0x4, scoped, tag = 'scoped memory for tpu_custom_call.1']
    #allocation5 [shape = 's32[1]{0}', space=sflag, size = 0x4, scoped, tag = 'scoped memory for tpu_custom_call.1']
    #allocation6 [shape = 'u8[196608]{0}', space=vmem, size = 0x30000, scoped, tag = 'input window, operand 1, single buffered']
    #allocation7 [shape = 's32[1]{0}', space=sflag, size = 0x4, scoped, tag = 'scoped memory for tpu_custom_call.1']
    #allocation8 [shape = 'u8[196608]{0}', space=vmem, size = 0x30000, scoped, tag = 'input window, operand 3, single buffered']
    #allocation9 [shape = 'u8[65536]{0}', space=vmem, size = 0x10000, scoped, tag = 'input window, operand 5, single buffered']
    #allocation10 [shape = 's32[1]{0}', space=sflag, size = 0x4, scoped, tag = 'scoped memory for tpu_custom_call.1']
    #allocation11 [shape = 'u8[196608]{0}', space=vmem, size = 0x30000, scoped, tag = 'input window, operand 7, single buffered']
    #allocation12 [shape = 'u8[196608]{0}', space=vmem, size = 0x30000, scoped, tag = 'input window, operand 9, single buffered']
    #allocation13 [shape = 's32[1]{0}', space=sflag, size = 0x4, scoped, tag = 'scoped memory for tpu_custom_call.1']
    #allocation14 [shape = 'u8[196608]{0}', space=vmem, size = 0x30000, scoped, tag = 'input window, operand 11, single buffered']
    #allocation15 [shape = 'u8[196608]{0}', space=vmem, size = 0x30000, scoped, tag = 'input window, operand 13, single buffered']
    #allocation16 [shape = 's32[1]{0}', space=sflag, size = 0x4, scoped, tag = 'scoped memory for tpu_custom_call.1']
    #allocation17 [shape = 'u8[65536]{0}', space=vmem, size = 0x10000, scoped, tag = 'input window, operand 15, single buffered']
    #allocation18 [shape = 'u8[16384]{0}', space=vmem, size = 0x4000, scoped, tag = 'output window, operand 0, single buffered']
    %22 = vsyncpa [#allocation4], 0
    %23 = vsyncpa [#allocation7], 0
    %24 = vsyncpa [#allocation10], 0
    %25 = vsyncpa [#allocation13], 0
    %26 = vsyncpa [#allocation16], 0
    %27 = vsyncpa [#allocation5], 0
    // Predicated region
    $region2: #{tpu_custom_call.1} parent=1 // pred_check
      _
    $region3: #{tpu_custom_call.1} parent=1 // pred_check_branch
      %29 = sbr.rel (0) target = $region5
    $region4: #{tpu_custom_call.1} parent=1 // pred_region
      %s31 = ssub.s32 512, 512
      %32 = vsyncadd [#allocation4], %s31
      %s33 = sshll.u32 [#allocation3], 4
      %s34 = int_to_ptr.vmem [resolvable:$true] %s33
      %39 = dma.hbm_to_vmem [thread:$0]  %s0, 512, %s34, [#allocation4], 128, 128, 8
    $region5: #{tpu_custom_call.1} parent=1 // pred_fallthru
      _
    // Predicated region
    $region6: #{tpu_custom_call.1} parent=1 // pred_check
      _
    $region7: #{tpu_custom_call.1} parent=1 // pred_check_branch
      %41 = sbr.rel (0) target = $region9
    $region8: #{tpu_custom_call.1} parent=1 // pred_region
      %s43 = ssub.s32 6144, 6144
      %44 = vsyncadd [#allocation7], %s43
      %s45 = sshll.u32 [#allocation6], 4
      %s46 = int_to_ptr.vmem [resolvable:$true] %s45
      %51 = dma.hbm_to_vmem [thread:$0]  %s1, 6144, %s46, [#allocation7], 128, 128, 8
    $region9: #{tpu_custom_call.1} parent=1 // pred_fallthru
      _
    // Predicated region
    $region10: #{tpu_custom_call.1} parent=1 // pred_check
      _
    $region11: #{tpu_custom_call.1} parent=1 // pred_check_branch
      %53 = sbr.rel (0) target = $region13
    $region12: #{tpu_custom_call.1} parent=1 // pred_region
      _
    $region13: #{tpu_custom_call.1} parent=1 // pred_fallthru
      _
    // Predicated region
    $region14: #{tpu_custom_call.1} parent=1 // pred_check
      _
    $region15: #{tpu_custom_call.1} parent=1 // pred_check_branch
      %55 = sbr.rel (0) target = $region17
    $region16: #{tpu_custom_call.1} parent=1 // pred_region
      %s57 = ssub.s32 6144, 6144
      %58 = vsyncadd [#allocation7], %s57
      %s59 = sshll.u32 [#allocation8], 4
      %s60 = int_to_ptr.vmem [resolvable:$true] %s59
      %65 = dma.hbm_to_vmem [thread:$0]  %s3, 6144, %s60, [#allocation7], 128, 128, 8
    $region17: #{tpu_custom_call.1} parent=1 // pred_fallthru
      _
    // Predicated region
    $region18: #{tpu_custom_call.1} parent=1 // pred_check
      _
    $region19: #{tpu_custom_call.1} parent=1 // pred_check_branch
      %67 = sbr.rel (0) target = $region21
    $region20: #{tpu_custom_call.1} parent=1 // pred_region
      _
    $region21: #{tpu_custom_call.1} parent=1 // pred_fallthru
      _
    // Predicated region
    $region22: #{tpu_custom_call.1} parent=1 // pred_check
      _
    $region23: #{tpu_custom_call.1} parent=1 // pred_check_branch
      %69 = sbr.rel (0) target = $region25
    $region24: #{tpu_custom_call.1} parent=1 // pred_region
      %s71 = ssub.s32 2048, 2048
      %72 = vsyncadd [#allocation10], %s71
      %s73 = sshll.u32 [#allocation9], 4
      %s74 = int_to_ptr.vmem [resolvable:$true] %s73
      %79 = dma.hbm_to_vmem [thread:$0]  %s5, 2048, %s74, [#allocation10], 128, 128, 8
    $region25: #{tpu_custom_call.1} parent=1 // pred_fallthru
      _
    // Predicated region
    $region26: #{tpu_custom_call.1} parent=1 // pred_check
      _
    $region27: #{tpu_custom_call.1} parent=1 // pred_check_branch
      %81 = sbr.rel (0) target = $region29
    $region28: #{tpu_custom_call.1} parent=1 // pred_region
      _
    $region29: #{tpu_custom_call.1} parent=1 // pred_fallthru
      _
    // Predicated region
    $region30: #{tpu_custom_call.1} parent=1 // pred_check
      _
    $region31: #{tpu_custom_call.1} parent=1 // pred_check_branch
      %83 = sbr.rel (0) target = $region33
    $region32: #{tpu_custom_call.1} parent=1 // pred_region
      %s85 = ssub.s32 6144, 6144
      %86 = vsyncadd [#allocation10], %s85
      %s87 = sshll.u32 [#allocation11], 4
      %s88 = int_to_ptr.vmem [resolvable:$true] %s87
      %93 = dma.hbm_to_vmem [thread:$0]  %s7, 6144, %s88, [#allocation10], 128, 128, 8
    $region33: #{tpu_custom_call.1} parent=1 // pred_fallthru
      _
    // Predicated region
    $region34: #{tpu_custom_call.1} parent=1 // pred_check
      _
    $region35: #{tpu_custom_call.1} parent=1 // pred_check_branch
      %95 = sbr.rel (0) target = $region37
    $region36: #{tpu_custom_call.1} parent=1 // pred_region
      _
    $region37: #{tpu_custom_call.1} parent=1 // pred_fallthru
      _
    // Predicated region
    $region38: #{tpu_custom_call.1} parent=1 // pred_check
      _
    $region39: #{tpu_custom_call.1} parent=1 // pred_check_branch
      %97 = sbr.rel (0) target = $region41
    $region40: #{tpu_custom_call.1} parent=1 // pred_region
      %s99 = ssub.s32 6144, 6144
      %100 = vsyncadd [#allocation13], %s99
      %s101 = sshll.u32 [#allocation12], 4
      %s102 = int_to_ptr.vmem [resolvable:$true] %s101
      %107 = dma.hbm_to_vmem [thread:$0]  %s9, 6144, %s102, [#allocation13], 128, 128, 8
    $region41: #{tpu_custom_call.1} parent=1 // pred_fallthru
      _
    // Predicated region
    $region42: #{tpu_custom_call.1} parent=1 // pred_check
      _
    $region43: #{tpu_custom_call.1} parent=1 // pred_check_branch
      %109 = sbr.rel (0) target = $region45
    $region44: #{tpu_custom_call.1} parent=1 // pred_region
      _
    $region45: #{tpu_custom_call.1} parent=1 // pred_fallthru
      _
    // Predicated region
    $region46: #{tpu_custom_call.1} parent=1 // pred_check
      _
    $region47: #{tpu_custom_call.1} parent=1 // pred_check_branch
      %111 = sbr.rel (0) target = $region49
    $region48: #{tpu_custom_call.1} parent=1 // pred_region
      %s113 = ssub.s32 6144, 6144
      %114 = vsyncadd [#allocation13], %s113
      %s115 = sshll.u32 [#allocation14], 4
      %s116 = int_to_ptr.vmem [resolvable:$true] %s115
      %121 = dma.hbm_to_vmem [thread:$0]  %s11, 6144, %s116, [#allocation13], 128, 128, 8
    $region49: #{tpu_custom_call.1} parent=1 // pred_fallthru
      _
    // Predicated region
    $region50: #{tpu_custom_call.1} parent=1 // pred_check
      _
    $region51: #{tpu_custom_call.1} parent=1 // pred_check_branch
      %123 = sbr.rel (0) target = $region53
    $region52: #{tpu_custom_call.1} parent=1 // pred_region
      _
    $region53: #{tpu_custom_call.1} parent=1 // pred_fallthru
      _
    // Predicated region
    $region54: #{tpu_custom_call.1} parent=1 // pred_check
      _
    $region55: #{tpu_custom_call.1} parent=1 // pred_check_branch
      %125 = sbr.rel (0) target = $region57
    $region56: #{tpu_custom_call.1} parent=1 // pred_region
      %s127 = ssub.s32 6144, 6144
      %128 = vsyncadd [#allocation16], %s127
      %s129 = sshll.u32 [#allocation15], 4
      %s130 = int_to_ptr.vmem [resolvable:$true] %s129
      %135 = dma.hbm_to_vmem [thread:$0]  %s13, 6144, %s130, [#allocation16], 128, 128, 8
    $region57: #{tpu_custom_call.1} parent=1 // pred_fallthru
      _
    // Predicated region
    $region58: #{tpu_custom_call.1} parent=1 // pred_check
      _
    $region59: #{tpu_custom_call.1} parent=1 // pred_check_branch
      %137 = sbr.rel (0) target = $region61
    $region60: #{tpu_custom_call.1} parent=1 // pred_region
      _
    $region61: #{tpu_custom_call.1} parent=1 // pred_fallthru
      _
    // Predicated region
    $region62: #{tpu_custom_call.1} parent=1 // pred_check
      _
    $region63: #{tpu_custom_call.1} parent=1 // pred_check_branch
      %139 = sbr.rel (0) target = $region65
    $region64: #{tpu_custom_call.1} parent=1 // pred_region
      %s141 = ssub.s32 2048, 2048
      %142 = vsyncadd [#allocation16], %s141
      %s143 = sshll.u32 [#allocation17], 4
      %s144 = int_to_ptr.vmem [resolvable:$true] %s143
      %149 = dma.hbm_to_vmem [thread:$0]  %s15, 2048, %s144, [#allocation16], 128, 128, 8
    $region65: #{tpu_custom_call.1} parent=1 // pred_fallthru
      _
    // Predicated region
    $region66: #{tpu_custom_call.1} parent=1 // pred_check
      _
    $region67: #{tpu_custom_call.1} parent=1 // pred_check_branch
      %151 = sbr.rel (0) target = $region69
    $region68: #{tpu_custom_call.1} parent=1 // pred_region
      _
    $region69: #{tpu_custom_call.1} parent=1 // pred_fallthru
      _
    // Predicated region
    $region70: #{tpu_custom_call.1} parent=1 // pred_check
      _
    $region71: #{tpu_custom_call.1} parent=1 // pred_check_branch
      %153 = sbr.rel (0) target = $region73
    $region72: #{tpu_custom_call.1} parent=1 // pred_region
      %154 = dma.done [#allocation4], 512
    $region73: #{tpu_custom_call.1} parent=1 // pred_fallthru
      _
    // Predicated region
    $region74: #{tpu_custom_call.1} parent=1 // pred_check
      _
    $region75: #{tpu_custom_call.1} parent=1 // pred_check_branch
      %156 = sbr.rel (0) target = $region77
    $region76: #{tpu_custom_call.1} parent=1 // pred_region
      %157 = dma.done [#allocation7], 6144
    $region77: #{tpu_custom_call.1} parent=1 // pred_fallthru
      _
    // Predicated region
    $region78: #{tpu_custom_call.1} parent=1 // pred_check
      _
    $region79: #{tpu_custom_call.1} parent=1 // pred_check_branch
      %159 = sbr.rel (0) target = $region81
    $region80: #{tpu_custom_call.1} parent=1 // pred_region
      %160 = dma.done [#allocation7], 6144
    $region81: #{tpu_custom_call.1} parent=1 // pred_fallthru
      _
    // Predicated region
    $region82: #{tpu_custom_call.1} parent=1 // pred_check
      _
    $region83: #{tpu_custom_call.1} parent=1 // pred_check_branch
      %162 = sbr.rel (0) target = $region85
    $region84: #{tpu_custom_call.1} parent=1 // pred_region
      %163 = dma.done [#allocation10], 2048
    $region85: #{tpu_custom_call.1} parent=1 // pred_fallthru
      _
    // Predicated region
    $region86: #{tpu_custom_call.1} parent=1 // pred_check
      _
    $region87: #{tpu_custom_call.1} parent=1 // pred_check_branch
      %165 = sbr.rel (0) target = $region89
    $region88: #{tpu_custom_call.1} parent=1 // pred_region
      %166 = dma.done [#allocation10], 6144
    $region89: #{tpu_custom_call.1} parent=1 // pred_fallthru
      _
    // Predicated region
    $region90: #{tpu_custom_call.1} parent=1 // pred_check
      _
    $region91: #{tpu_custom_call.1} parent=1 // pred_check_branch
      %168 = sbr.rel (0) target = $region93
    $region92: #{tpu_custom_call.1} parent=1 // pred_region
      %169 = dma.done [#allocation13], 6144
    $region93: #{tpu_custom_call.1} parent=1 // pred_fallthru
      _
    // Predicated region
    $region94: #{tpu_custom_call.1} parent=1 // pred_check
      _
    $region95: #{tpu_custom_call.1} parent=1 // pred_check_branch
      %171 = sbr.rel (0) target = $region97
    $region96: #{tpu_custom_call.1} parent=1 // pred_region
      %172 = dma.done [#allocation13], 6144
    $region97: #{tpu_custom_call.1} parent=1 // pred_fallthru
      _
    // Predicated region
    $region98: #{tpu_custom_call.1} parent=1 // pred_check
      _
    $region99: #{tpu_custom_call.1} parent=1 // pred_check_branch
      %174 = sbr.rel (0) target = $region101
    $region100: #{tpu_custom_call.1} parent=1 // pred_region
      %175 = dma.done [#allocation16], 6144
    $region101: #{tpu_custom_call.1} parent=1 // pred_fallthru
      _
    // Predicated region
    $region102: #{tpu_custom_call.1} parent=1 // pred_check
      _
    $region103: #{tpu_custom_call.1} parent=1 // pred_check_branch
      %177 = sbr.rel (0) target = $region105
    $region104: #{tpu_custom_call.1} parent=1 // pred_region
      %178 = dma.done [#allocation16], 2048
    $region105: #{tpu_custom_call.1} parent=1 // pred_fallthru
      _
    %179 = vst [vmem:[#allocation2] sm:$0xff] 0.0
    %180 = vst [vmem:[#allocation2 + $0x18] sm:$0xff] 0.0
    %v181 = vld [vmem:[#allocation3] sm:$0xff]
    %v182 = vld [vmem:[#allocation3 + $0x8] sm:$0xff]
    %v183 = vld [vmem:[#allocation3 + $0x10] sm:$0xff]
    %v184 = vld [vmem:[#allocation3 + $0x18] sm:$0xff]
    %185 = vst [vmem:[#allocation2 + $0x8] sm:$0xff] %v181
    %186 = vst [vmem:[#allocation2 + $0x10] sm:$0xff] %v182
    %187 = vst [vmem:[#allocation2 + $0x20] sm:$0xff] %v183
    %188 = vst [vmem:[#allocation2 + $0x28] sm:$0xff] %v184
    %v189 = vld [vmem:[#allocation2] sm:$0xff]
    %v190 = vld [vmem:[#allocation2 + $0x8] sm:$0xff]
    %v191 = vld [vmem:[#allocation2 + $0x10] sm:$0xff]
    %v192 = vld [vmem:[#allocation2 + $0x18] sm:$0xff]
    %v193 = vld [vmem:[#allocation2 + $0x20] sm:$0xff]
    %v194 = vld [vmem:[#allocation2 + $0x28] sm:$0xff]
    %vm201 = vcmask 1041408
    %v202 = vrot.slane %v189, 6
    %v203 = vrot.slane %v190, 6
    %v204 = vsel %vm201, %v202, %v203
    %v205 = vrot.slane %v191, 6
    %v206 = vsel %vm201, %v203, %v205
    %v207 = vrot.slane %v192, 6
    %v208 = vrot.slane %v193, 6
    %v209 = vsel %vm201, %v207, %v208
    %v210 = vrot.slane %v194, 6
    %v211 = vsel %vm201, %v208, %v210
    %v216 = vld [vmem:[#allocation6] sm:$0xff]
    %v217 = vld [vmem:[#allocation6 + $0x8] sm:$0xff]
    %v218 = vld [vmem:[#allocation6 + $0x10] sm:$0xff]
    %v219 = vld [vmem:[#allocation6 + $0x18] sm:$0xff]
    %v220 = vld [vmem:[#allocation6 + $0x20] sm:$0xff]
    %v221 = vld [vmem:[#allocation6 + $0x28] sm:$0xff]
    %v222 = vld [vmem:[#allocation6 + $0x30] sm:$0xff]
    %v223 = vld [vmem:[#allocation6 + $0x38] sm:$0xff]
    %v224 = vld [vmem:[#allocation6 + $0x40] sm:$0xff]
    %v225 = vld [vmem:[#allocation6 + $0x48] sm:$0xff]
    %v226 = vld [vmem:[#allocation6 + $0x50] sm:$0xff]
    %v227 = vld [vmem:[#allocation6 + $0x58] sm:$0xff]
    %v228 = vld [vmem:[#allocation6 + $0x60] sm:$0xff]
    %v229 = vld [vmem:[#allocation6 + $0x68] sm:$0xff]
    %v230 = vld [vmem:[#allocation6 + $0x70] sm:$0xff]
    %v231 = vld [vmem:[#allocation6 + $0x78] sm:$0xff]
    %vm232 = vcmask 1040384
    %v233 = vrot.slane %v189, 7
    %v234 = vrot.slane %v190, 7
    %v235 = vsel %vm232, %v233, %v234
    %v236 = vrot.slane %v191, 7
    %v237 = vsel %vm232, %v234, %v236
    %v238 = vrot.slane %v192, 7
    %v239 = vrot.slane %v193, 7
    %v240 = vsel %vm232, %v238, %v239
    %v241 = vrot.slane %v194, 7
    %v242 = vsel %vm232, %v239, %v241
    %s247 = scalar_lea.vmem [#allocation6], 128
    %v248 = vld [vmem:[%s247] sm:$0xff]
    %v249 = vld [vmem:[%s247 + $0x8] sm:$0xff]
    %v250 = vld [vmem:[%s247 + $0x10] sm:$0xff]
    %v251 = vld [vmem:[%s247 + $0x18] sm:$0xff]
    %v252 = vld [vmem:[%s247 + $0x20] sm:$0xff]
    %v253 = vld [vmem:[%s247 + $0x28] sm:$0xff]
    %v254 = vld [vmem:[%s247 + $0x30] sm:$0xff]
    %v255 = vld [vmem:[%s247 + $0x38] sm:$0xff]
    %v256 = vld [vmem:[%s247 + $0x40] sm:$0xff]
    %v257 = vld [vmem:[%s247 + $0x48] sm:$0xff]
    %v258 = vld [vmem:[%s247 + $0x50] sm:$0xff]
    %v259 = vld [vmem:[%s247 + $0x58] sm:$0xff]
    %v260 = vld [vmem:[%s247 + $0x60] sm:$0xff]
    %v261 = vld [vmem:[%s247 + $0x68] sm:$0xff]
    %v262 = vld [vmem:[%s247 + $0x70] sm:$0xff]
    %v263 = vld [vmem:[%s247 + $0x78] sm:$0xff]
    %264 = vmatprep.subr.mxu0 0.0
    %265 = vmatpush1.msra.mxu0 %v248
    %266 = vmatprep.subr.mxu0 0.0
    %267 = vmatpush1.msra.mxu0 %v249
    %268 = vmatprep.subr.mxu0 0.0
    %269 = vmatpush1.msra.mxu0 %v250
    %270 = vmatprep.subr.mxu0 0.0
    %271 = vmatpush1.msra.mxu0 %v251
    %272 = vmatprep.subr.mxu0 0.0
    %273 = vmatpush1.msra.mxu0 %v252
    %274 = vmatprep.subr.mxu0 0.0
    %275 = vmatpush1.msra.mxu0 %v253
    %276 = vmatprep.subr.mxu0 0.0
    %277 = vmatpush1.msra.mxu0 %v254
    %278 = vmatprep.subr.mxu0 0.0
    %279 = vmatpush1.msra.mxu0 %v255
    %280 = vmatprep.subr.mxu0 0.0
    %281 = vmatpush1.msra.mxu0 %v256
    %282 = vmatprep.subr.mxu0 0.0
    %283 = vmatpush1.msra.mxu0 %v257
    %284 = vmatprep.subr.mxu0 0.0
    %285 = vmatpush1.msra.mxu0 %v258
    %286 = vmatprep.subr.mxu0 0.0
    %287 = vmatpush1.msra.mxu0 %v259
    %288 = vmatprep.subr.mxu0 0.0
    %289 = vmatpush1.msra.mxu0 %v260
    %290 = vmatprep.subr.mxu0 0.0
    %291 = vmatpush1.msra.mxu0 %v261
    %292 = vmatprep.subr.mxu0 0.0
    %293 = vmatpush1.msra.mxu0 %v262
    %294 = vmatprep.subr.mxu0 0.0
    %295 = vmatpush1.msra.mxu0 %v263
    %296 = vmatprep.subr.mxu0 0.0
    %297 = vmatpush1.msra.mxu0 0.0
    %298 = vmatprep.subr.mxu0 0.0
    %299 = vmatpush1.msra.mxu0 0.0
    %300 = vmatprep.subr.mxu0 0.0
    %301 = vmatpush1.msra.mxu0 0.0
    %302 = vmatprep.subr.mxu0 0.0
    %303 = vmatpush1.msra.mxu0 0.0
    %304 = vmatprep.subr.mxu0 0.0
    %305 = vmatpush1.msra.mxu0 0.0
    %306 = vmatprep.subr.mxu0 0.0
    %307 = vmatpush1.msra.mxu0 0.0
    %308 = vmatprep.subr.mxu0 0.0
    %309 = vmatpush1.msra.mxu0 0.0
    %310 = vmatprep.subr.mxu0 0.0
    %311 = vmatpush1.msra.mxu0 0.0
    %312 = vmatprep.subr.mxu0 0.0
    %313 = vmatpush1.msra.mxu0 0.0
    %314 = vmatprep.subr.mxu0 0.0
    %315 = vmatpush1.msra.mxu0 0.0
    %316 = vmatprep.subr.mxu0 0.0
    %317 = vmatpush1.msra.mxu0 0.0
    %318 = vmatprep.subr.mxu0 0.0
    %319 = vmatpush1.msra.mxu0 0.0
    %320 = vmatprep.subr.mxu0 0.0
    %321 = vmatpush1.msra.mxu0 0.0
    %322 = vmatprep.subr.mxu0 0.0
    %323 = vmatpush1.msra.mxu0 0.0
    %324 = vmatprep.subr.mxu0 0.0
    %325 = vmatpush1.msra.mxu0 0.0
    %326 = vmatprep.subr.mxu0 0.0
    %327 = vmatpush1.msra.mxu0 0.0
    %328 = vmatprep.mubr.f32.mxu0 0.0
    %329 = vmatmul.mubr.f32.gmra.mrb[0].mxu0 %v235
    %v330 = vpop.f32.mrb[0].mxu0
    %v331 = vadd.f32 0.0, %v330
    %v332 = vpop.f32.mrb[0].mxu0
    %333 = vmatprep.mubr.f32.mxu0 0.0
    %334 = vmatmul.mubr.f32.gmra.mrb[0].mxu0 %v237
    %v335 = vpop.f32.mrb[0].mxu0
    %v336 = vadd.f32 0.0, %v335
    %v337 = vpop.f32.mrb[0].mxu0
    %338 = vmatprep.mubr.f32.mxu0 0.0
    %339 = vmatmul.mubr.f32.gmra.mrb[0].mxu0 %v240
    %v340 = vpop.f32.mrb[0].mxu0
    %v341 = vadd.f32 0.0, %v340
    %v342 = vpop.f32.mrb[0].mxu0
    %343 = vmatprep.mubr.f32.mxu0 0.0
    %344 = vmatmul.mubr.f32.gmra.mrb[0].mxu0 %v242
    %v345 = vpop.f32.mrb[0].mxu0
    %v346 = vadd.f32 0.0, %v345
    %v347 = vpop.f32.mrb[0].mxu0
    %348 = vdwg.mxu0
    %349 = vmatprep.subr.mxu0 0.0
    %350 = vmatpush1.msra.mxu0 %v216
    %351 = vmatprep.subr.mxu0 0.0
    %352 = vmatpush1.msra.mxu0 %v217
    %353 = vmatprep.subr.mxu0 0.0
    %354 = vmatpush1.msra.mxu0 %v218
    %355 = vmatprep.subr.mxu0 0.0
    %356 = vmatpush1.msra.mxu0 %v219
    %357 = vmatprep.subr.mxu0 0.0
    %358 = vmatpush1.msra.mxu0 %v220
    %359 = vmatprep.subr.mxu0 0.0
    %360 = vmatpush1.msra.mxu0 %v221
    %361 = vmatprep.subr.mxu0 0.0
    %362 = vmatpush1.msra.mxu0 %v222
    %363 = vmatprep.subr.mxu0 0.0
    %364 = vmatpush1.msra.mxu0 %v223
    %365 = vmatprep.subr.mxu0 0.0
    %366 = vmatpush1.msra.mxu0 %v224
    %367 = vmatprep.subr.mxu0 0.0
    %368 = vmatpush1.msra.mxu0 %v225
    %369 = vmatprep.subr.mxu0 0.0
    %370 = vmatpush1.msra.mxu0 %v226
    %371 = vmatprep.subr.mxu0 0.0
    %372 = vmatpush1.msra.mxu0 %v227
    %373 = vmatprep.subr.mxu0 0.0
    %374 = vmatpush1.msra.mxu0 %v228
    %375 = vmatprep.subr.mxu0 0.0
    %376 = vmatpush1.msra.mxu0 %v229
    %377 = vmatprep.subr.mxu0 0.0
    %378 = vmatpush1.msra.mxu0 %v230
    %379 = vmatprep.subr.mxu0 0.0
    %380 = vmatpush1.msra.mxu0 %v231
    %381 = vmatprep.subr.mxu0 0.0
    %382 = vmatpush1.msra.mxu0 0.0
    %383 = vmatprep.subr.mxu0 0.0
    %384 = vmatpush1.msra.mxu0 0.0
    %385 = vmatprep.subr.mxu0 0.0
    %386 = vmatpush1.msra.mxu0 0.0
    %387 = vmatprep.subr.mxu0 0.0
    %388 = vmatpush1.msra.mxu0 0.0
    %389 = vmatprep.subr.mxu0 0.0
    %390 = vmatpush1.msra.mxu0 0.0
    %391 = vmatprep.subr.mxu0 0.0
    %392 = vmatpush1.msra.mxu0 0.0
    %393 = vmatprep.subr.mxu0 0.0
    %394 = vmatpush1.msra.mxu0 0.0
    %395 = vmatprep.subr.mxu0 0.0
    %396 = vmatpush1.msra.mxu0 0.0
    %397 = vmatprep.subr.mxu0 0.0
    %398 = vmatpush1.msra.mxu0 0.0
    %399 = vmatprep.subr.mxu0 0.0
    %400 = vmatpush1.msra.mxu0 0.0
    %401 = vmatprep.subr.mxu0 0.0
    %402 = vmatpush1.msra.mxu0 0.0
    %403 = vmatprep.subr.mxu0 0.0
    %404 = vmatpush1.msra.mxu0 0.0
    %405 = vmatprep.subr.mxu0 0.0
    %406 = vmatpush1.msra.mxu0 0.0
    %407 = vmatprep.subr.mxu0 0.0
    %408 = vmatpush1.msra.mxu0 0.0
    %409 = vmatprep.subr.mxu0 0.0
    %410 = vmatpush1.msra.mxu0 0.0
    %411 = vmatprep.subr.mxu0 0.0
    %412 = vmatpush1.msra.mxu0 0.0
    %413 = vmatprep.mubr.f32.mxu0 0.0
    %414 = vmatmul.mubr.f32.gmra.mrb[0].mxu0 %v204
    %v415 = vpop.f32.mrb[0].mxu0
    %v416 = vadd.f32 %v331, %v415
    %v417 = vpop.f32.mrb[0].mxu0
    %418 = vmatprep.mubr.f32.mxu0 0.0
    %419 = vmatmul.mubr.f32.gmra.mrb[0].mxu0 %v206
    %v420 = vpop.f32.mrb[0].mxu0
    %v421 = vadd.f32 %v336, %v420
    %v422 = vpop.f32.mrb[0].mxu0
    %423 = vmatprep.mubr.f32.mxu0 0.0
    %424 = vmatmul.mubr.f32.gmra.mrb[0].mxu0 %v209
    %v425 = vpop.f32.mrb[0].mxu0
    %v426 = vadd.f32 %v341, %v425
    %v427 = vpop.f32.mrb[0].mxu0
    %428 = vmatprep.mubr.f32.mxu0 0.0
    %429 = vmatmul.mubr.f32.gmra.mrb[0].mxu0 %v211
    %v430 = vpop.f32.mrb[0].mxu0
    %v431 = vadd.f32 %v346, %v430
    %v432 = vpop.f32.mrb[0].mxu0
    %433 = vdwg.mxu0
    %s434 = scalar_lea.vmem [#allocation6], 256
    %v435 = vld [vmem:[%s434] sm:$0xff]
    %v436 = vld [vmem:[%s434 + $0x8] sm:$0xff]
    %v437 = vld [vmem:[%s434 + $0x10] sm:$0xff]
    %v438 = vld [vmem:[%s434 + $0x18] sm:$0xff]
    %v439 = vld [vmem:[%s434 + $0x20] sm:$0xff]
    %v440 = vld [vmem:[%s434 + $0x28] sm:$0xff]
    %v441 = vld [vmem:[%s434 + $0x30] sm:$0xff]
    %v442 = vld [vmem:[%s434 + $0x38] sm:$0xff]
    %v443 = vld [vmem:[%s434 + $0x40] sm:$0xff]
    %v444 = vld [vmem:[%s434 + $0x48] sm:$0xff]
    %v445 = vld [vmem:[%s434 + $0x50] sm:$0xff]
    %v446 = vld [vmem:[%s434 + $0x58] sm:$0xff]
    %v447 = vld [vmem:[%s434 + $0x60] sm:$0xff]
    %v448 = vld [vmem:[%s434 + $0x68] sm:$0xff]
    %v449 = vld [vmem:[%s434 + $0x70] sm:$0xff]
    %v450 = vld [vmem:[%s434 + $0x78] sm:$0xff]
    %451 = vmatprep.subr.mxu0 0.0
    %452 = vmatpush1.msra.mxu0 %v435
    %453 = vmatprep.subr.mxu0 0.0
    %454 = vmatpush1.msra.mxu0 %v436
    %455 = vmatprep.subr.mxu0 0.0
    %456 = vmatpush1.msra.mxu0 %v437
    %457 = vmatprep.subr.mxu0 0.0
    %458 = vmatpush1.msra.mxu0 %v438
    %459 = vmatprep.subr.mxu0 0.0
    %460 = vmatpush1.msra.mxu0 %v439
    %461 = vmatprep.subr.mxu0 0.0
    %462 = vmatpush1.msra.mxu0 %v440
    %463 = vmatprep.subr.mxu0 0.0
    %464 = vmatpush1.msra.mxu0 %v441
    %465 = vmatprep.subr.mxu0 0.0
    %466 = vmatpush1.msra.mxu0 %v442
    %467 = vmatprep.subr.mxu0 0.0
    %468 = vmatpush1.msra.mxu0 %v443
    %469 = vmatprep.subr.mxu0 0.0
    %470 = vmatpush1.msra.mxu0 %v444
    %471 = vmatprep.subr.mxu0 0.0
    %472 = vmatpush1.msra.mxu0 %v445
    %473 = vmatprep.subr.mxu0 0.0
    %474 = vmatpush1.msra.mxu0 %v446
    %475 = vmatprep.subr.mxu0 0.0
    %476 = vmatpush1.msra.mxu0 %v447
    %477 = vmatprep.subr.mxu0 0.0
    %478 = vmatpush1.msra.mxu0 %v448
    %479 = vmatprep.subr.mxu0 0.0
    %480 = vmatpush1.msra.mxu0 %v449
    %481 = vmatprep.subr.mxu0 0.0
    %482 = vmatpush1.msra.mxu0 %v450
    %483 = vmatprep.subr.mxu0 0.0
    %484 = vmatpush1.msra.mxu0 0.0
    %485 = vmatprep.subr.mxu0 0.0
    %486 = vmatpush1.msra.mxu0 0.0
    %487 = vmatprep.subr.mxu0 0.0
    %488 = vmatpush1.msra.mxu0 0.0
    %489 = vmatprep.subr.mxu0 0.0
    %490 = vmatpush1.msra.mxu0 0.0
    %491 = vmatprep.subr.mxu0 0.0
    %492 = vmatpush1.msra.mxu0 0.0
    %493 = vmatprep.subr.mxu0 0.0
    %494 = vmatpush1.msra.mxu0 0.0
    %495 = vmatprep.subr.mxu0 0.0
    %496 = vmatpush1.msra.mxu0 0.0
    %497 = vmatprep.subr.mxu0 0.0
    %498 = vmatpush1.msra.mxu0 0.0
    %499 = vmatprep.subr.mxu0 0.0
    %500 = vmatpush1.msra.mxu0 0.0
    %501 = vmatprep.subr.mxu0 0.0
    %502 = vmatpush1.msra.mxu0 0.0
    %503 = vmatprep.subr.mxu0 0.0
    %504 = vmatpush1.msra.mxu0 0.0
    %505 = vmatprep.subr.mxu0 0.0
    %506 = vmatpush1.msra.mxu0 0.0
    %507 = vmatprep.subr.mxu0 0.0
    %508 = vmatpush1.msra.mxu0 0.0
    %509 = vmatprep.subr.mxu0 0.0
    %510 = vmatpush1.msra.mxu0 0.0
    %511 = vmatprep.subr.mxu0 0.0
    %512 = vmatpush1.msra.mxu0 0.0
    %513 = vmatprep.subr.mxu0 0.0
    %514 = vmatpush1.msra.mxu0 0.0
    %515 = vmatprep.mubr.f32.mxu0 0.0
    %516 = vmatmul.mubr.f32.gmra.mrb[0].mxu0 %v190
    %v517 = vpop.f32.mrb[0].mxu0
    %v518 = vadd.f32 0.0, %v517
    %v519 = vpop.f32.mrb[0].mxu0
    %520 = vmatprep.mubr.f32.mxu0 0.0
    %521 = vmatmul.mubr.f32.gmra.mrb[0].mxu0 %v191
    %v522 = vpop.f32.mrb[0].mxu0
    %v523 = vadd.f32 0.0, %v522
    %v524 = vpop.f32.mrb[0].mxu0
    %525 = vmatprep.mubr.f32.mxu0 0.0
    %526 = vmatmul.mubr.f32.gmra.mrb[0].mxu0 %v193
    %v527 = vpop.f32.mrb[0].mxu0
    %v528 = vadd.f32 0.0, %v527
    %v529 = vpop.f32.mrb[0].mxu0
    %530 = vmatprep.mubr.f32.mxu0 0.0
    %531 = vmatmul.mubr.f32.gmra.mrb[0].mxu0 %v194
    %v532 = vpop.f32.mrb[0].mxu0
    %v533 = vadd.f32 0.0, %v532
    %v534 = vpop.f32.mrb[0].mxu0
    %535 = vdwg.mxu0
    %v536 = vadd.f32 %v416, %v518
    %v537 = vadd.f32 %v421, %v523
    %v538 = vadd.f32 %v426, %v528
    %v539 = vadd.f32 %v431, %v533
    %v540 = vld [vmem:[%s2] sm:$0x1]
    %v542 = vlaneseq
    %v543 = vshrl.u32 %v542, 7
    %v544 = vsub.s32 0, %v543
    %v545 = vrot.slane %v540, %v544
    %v547 = vadd.f32 %v536, %v545
    %v548 = vadd.f32 %v537, %v545
    %v549 = vadd.f32 %v538, %v545
    %v550 = vadd.f32 %v539, %v545
    %v551 = vmax.f32 %v547, 0.0
    %v552 = vmax.f32 %v548, 0.0
    %v553 = vmax.f32 %v549, 0.0
    %v554 = vmax.f32 %v550, 0.0
    %v560 = vrot.slane 0.0, 6
    %v561 = vrot.slane %v551, 6
    %v562 = vsel %vm201, %v560, %v561
    %v563 = vrot.slane %v552, 6
    %v564 = vsel %vm201, %v561, %v563
    %v565 = vrot.slane %v553, 6
    %v566 = vsel %vm201, %v560, %v565
    %v567 = vrot.slane %v554, 6
    %v568 = vsel %vm201, %v565, %v567
    %v573 = vld [vmem:[#allocation8] sm:$0xff]
    %v574 = vld [vmem:[#allocation8 + $0x8] sm:$0xff]
    %v575 = vld [vmem:[#allocation8 + $0x10] sm:$0xff]
    %v576 = vld [vmem:[#allocation8 + $0x18] sm:$0xff]
    %v577 = vld [vmem:[#allocation8 + $0x20] sm:$0xff]
    %v578 = vld [vmem:[#allocation8 + $0x28] sm:$0xff]
    %v579 = vld [vmem:[#allocation8 + $0x30] sm:$0xff]
    %v580 = vld [vmem:[#allocation8 + $0x38] sm:$0xff]
    %v581 = vld [vmem:[#allocation8 + $0x40] sm:$0xff]
    %v582 = vld [vmem:[#allocation8 + $0x48] sm:$0xff]
    %v583 = vld [vmem:[#allocation8 + $0x50] sm:$0xff]
    %v584 = vld [vmem:[#allocation8 + $0x58] sm:$0xff]
    %v585 = vld [vmem:[#allocation8 + $0x60] sm:$0xff]
    %v586 = vld [vmem:[#allocation8 + $0x68] sm:$0xff]
    %v587 = vld [vmem:[#allocation8 + $0x70] sm:$0xff]
    %v588 = vld [vmem:[#allocation8 + $0x78] sm:$0xff]
    %v589 = vrot.slane 0.0, 7
    %v590 = vrot.slane %v551, 7
    %v591 = vsel %vm232, %v589, %v590
    %v592 = vrot.slane %v552, 7
    %v593 = vsel %vm232, %v590, %v592
    %v594 = vrot.slane %v553, 7
    %v595 = vsel %vm232, %v589, %v594
    %v596 = vrot.slane %v554, 7
    %v597 = vsel %vm232, %v594, %v596
    %s602 = scalar_lea.vmem [#allocation8], 128
    %v603 = vld [vmem:[%s602] sm:$0xff]
    %v604 = vld [vmem:[%s602 + $0x8] sm:$0xff]
    %v605 = vld [vmem:[%s602 + $0x10] sm:$0xff]
    %v606 = vld [vmem:[%s602 + $0x18] sm:$0xff]
    %v607 = vld [vmem:[%s602 + $0x20] sm:$0xff]
    %v608 = vld [vmem:[%s602 + $0x28] sm:$0xff]
    %v609 = vld [vmem:[%s602 + $0x30] sm:$0xff]
    %v610 = vld [vmem:[%s602 + $0x38] sm:$0xff]
    %v611 = vld [vmem:[%s602 + $0x40] sm:$0xff]
    %v612 = vld [vmem:[%s602 + $0x48] sm:$0xff]
    %v613 = vld [vmem:[%s602 + $0x50] sm:$0xff]
    %v614 = vld [vmem:[%s602 + $0x58] sm:$0xff]
    %v615 = vld [vmem:[%s602 + $0x60] sm:$0xff]
    %v616 = vld [vmem:[%s602 + $0x68] sm:$0xff]
    %v617 = vld [vmem:[%s602 + $0x70] sm:$0xff]
    %v618 = vld [vmem:[%s602 + $0x78] sm:$0xff]
    %619 = vmatprep.subr.mxu0 0.0
    %620 = vmatpush1.msra.mxu0 %v603
    %621 = vmatprep.subr.mxu0 0.0
    %622 = vmatpush1.msra.mxu0 %v604
    %623 = vmatprep.subr.mxu0 0.0
    %624 = vmatpush1.msra.mxu0 %v605
    %625 = vmatprep.subr.mxu0 0.0
    %626 = vmatpush1.msra.mxu0 %v606
    %627 = vmatprep.subr.mxu0 0.0
    %628 = vmatpush1.msra.mxu0 %v607
    %629 = vmatprep.subr.mxu0 0.0
    %630 = vmatpush1.msra.mxu0 %v608
    %631 = vmatprep.subr.mxu0 0.0
    %632 = vmatpush1.msra.mxu0 %v609
    %633 = vmatprep.subr.mxu0 0.0
    %634 = vmatpush1.msra.mxu0 %v610
    %635 = vmatprep.subr.mxu0 0.0
    %636 = vmatpush1.msra.mxu0 %v611
    %637 = vmatprep.subr.mxu0 0.0
    %638 = vmatpush1.msra.mxu0 %v612
    %639 = vmatprep.subr.mxu0 0.0
    %640 = vmatpush1.msra.mxu0 %v613
    %641 = vmatprep.subr.mxu0 0.0
    %642 = vmatpush1.msra.mxu0 %v614
    %643 = vmatprep.subr.mxu0 0.0
    %644 = vmatpush1.msra.mxu0 %v615
    %645 = vmatprep.subr.mxu0 0.0
    %646 = vmatpush1.msra.mxu0 %v616
    %647 = vmatprep.subr.mxu0 0.0
    %648 = vmatpush1.msra.mxu0 %v617
    %649 = vmatprep.subr.mxu0 0.0
    %650 = vmatpush1.msra.mxu0 %v618
    %651 = vmatprep.subr.mxu0 0.0
    %652 = vmatpush1.msra.mxu0 0.0
    %653 = vmatprep.subr.mxu0 0.0
    %654 = vmatpush1.msra.mxu0 0.0
    %655 = vmatprep.subr.mxu0 0.0
    %656 = vmatpush1.msra.mxu0 0.0
    %657 = vmatprep.subr.mxu0 0.0
    %658 = vmatpush1.msra.mxu0 0.0
    %659 = vmatprep.subr.mxu0 0.0
    %660 = vmatpush1.msra.mxu0 0.0
    %661 = vmatprep.subr.mxu0 0.0
    %662 = vmatpush1.msra.mxu0 0.0
    %663 = vmatprep.subr.mxu0 0.0
    %664 = vmatpush1.msra.mxu0 0.0
    %665 = vmatprep.subr.mxu0 0.0
    %666 = vmatpush1.msra.mxu0 0.0
    %667 = vmatprep.subr.mxu0 0.0
    %668 = vmatpush1.msra.mxu0 0.0
    %669 = vmatprep.subr.mxu0 0.0
    %670 = vmatpush1.msra.mxu0 0.0
    %671 = vmatprep.subr.mxu0 0.0
    %672 = vmatpush1.msra.mxu0 0.0
    %673 = vmatprep.subr.mxu0 0.0
    %674 = vmatpush1.msra.mxu0 0.0
    %675 = vmatprep.subr.mxu0 0.0
    %676 = vmatpush1.msra.mxu0 0.0
    %677 = vmatprep.subr.mxu0 0.0
    %678 = vmatpush1.msra.mxu0 0.0
    %679 = vmatprep.subr.mxu0 0.0
    %680 = vmatpush1.msra.mxu0 0.0
    %681 = vmatprep.subr.mxu0 0.0
    %682 = vmatpush1.msra.mxu0 0.0
    %683 = vmatprep.mubr.f32.mxu0 0.0
    %684 = vmatmul.mubr.f32.gmra.mrb[0].mxu0 %v591
    %v685 = vpop.f32.mrb[0].mxu0
    %v686 = vadd.f32 0.0, %v685
    %v687 = vpop.f32.mrb[0].mxu0
    %688 = vmatprep.mubr.f32.mxu0 0.0
    %689 = vmatmul.mubr.f32.gmra.mrb[0].mxu0 %v593
    %v690 = vpop.f32.mrb[0].mxu0
    %v691 = vadd.f32 0.0, %v690
    %v692 = vpop.f32.mrb[0].mxu0
    %693 = vmatprep.mubr.f32.mxu0 0.0
    %694 = vmatmul.mubr.f32.gmra.mrb[0].mxu0 %v595
    %v695 = vpop.f32.mrb[0].mxu0
    %v696 = vadd.f32 0.0, %v695
    %v697 = vpop.f32.mrb[0].mxu0
    %698 = vmatprep.mubr.f32.mxu0 0.0
    %699 = vmatmul.mubr.f32.gmra.mrb[0].mxu0 %v597
    %v700 = vpop.f32.mrb[0].mxu0
    %v701 = vadd.f32 0.0, %v700
    %v702 = vpop.f32.mrb[0].mxu0
    %703 = vdwg.mxu0
    %704 = vmatprep.subr.mxu0 0.0
    %705 = vmatpush1.msra.mxu0 %v573
    %706 = vmatprep.subr.mxu0 0.0
    %707 = vmatpush1.msra.mxu0 %v574
    %708 = vmatprep.subr.mxu0 0.0
    %709 = vmatpush1.msra.mxu0 %v575
    %710 = vmatprep.subr.mxu0 0.0
    %711 = vmatpush1.msra.mxu0 %v576
    %712 = vmatprep.subr.mxu0 0.0
    %713 = vmatpush1.msra.mxu0 %v577
    %714 = vmatprep.subr.mxu0 0.0
    %715 = vmatpush1.msra.mxu0 %v578
    %716 = vmatprep.subr.mxu0 0.0
    %717 = vmatpush1.msra.mxu0 %v579
    %718 = vmatprep.subr.mxu0 0.0
    %719 = vmatpush1.msra.mxu0 %v580
    %720 = vmatprep.subr.mxu0 0.0
    %721 = vmatpush1.msra.mxu0 %v581
    %722 = vmatprep.subr.mxu0 0.0
    %723 = vmatpush1.msra.mxu0 %v582
    %724 = vmatprep.subr.mxu0 0.0
    %725 = vmatpush1.msra.mxu0 %v583
    %726 = vmatprep.subr.mxu0 0.0
    %727 = vmatpush1.msra.mxu0 %v584
    %728 = vmatprep.subr.mxu0 0.0
    %729 = vmatpush1.msra.mxu0 %v585
    %730 = vmatprep.subr.mxu0 0.0
    %731 = vmatpush1.msra.mxu0 %v586
    %732 = vmatprep.subr.mxu0 0.0
    %733 = vmatpush1.msra.mxu0 %v587
    %734 = vmatprep.subr.mxu0 0.0
    %735 = vmatpush1.msra.mxu0 %v588
    %736 = vmatprep.subr.mxu0 0.0
    %737 = vmatpush1.msra.mxu0 0.0
    %738 = vmatprep.subr.mxu0 0.0
    %739 = vmatpush1.msra.mxu0 0.0
    %740 = vmatprep.subr.mxu0 0.0
    %741 = vmatpush1.msra.mxu0 0.0
    %742 = vmatprep.subr.mxu0 0.0
    %743 = vmatpush1.msra.mxu0 0.0
    %744 = vmatprep.subr.mxu0 0.0
    %745 = vmatpush1.msra.mxu0 0.0
    %746 = vmatprep.subr.mxu0 0.0
    %747 = vmatpush1.msra.mxu0 0.0
    %748 = vmatprep.subr.mxu0 0.0
    %749 = vmatpush1.msra.mxu0 0.0
    %750 = vmatprep.subr.mxu0 0.0
    %751 = vmatpush1.msra.mxu0 0.0
    %752 = vmatprep.subr.mxu0 0.0
    %753 = vmatpush1.msra.mxu0 0.0
    %754 = vmatprep.subr.mxu0 0.0
    %755 = vmatpush1.msra.mxu0 0.0
    %756 = vmatprep.subr.mxu0 0.0
    %757 = vmatpush1.msra.mxu0 0.0
    %758 = vmatprep.subr.mxu0 0.0
    %759 = vmatpush1.msra.mxu0 0.0
    %760 = vmatprep.subr.mxu0 0.0
    %761 = vmatpush1.msra.mxu0 0.0
    %762 = vmatprep.subr.mxu0 0.0
    %763 = vmatpush1.msra.mxu0 0.0
    %764 = vmatprep.subr.mxu0 0.0
    %765 = vmatpush1.msra.mxu0 0.0
    %766 = vmatprep.subr.mxu0 0.0
    %767 = vmatpush1.msra.mxu0 0.0
    %768 = vmatprep.mubr.f32.mxu0 0.0
    %769 = vmatmul.mubr.f32.gmra.mrb[0].mxu0 %v562
    %v770 = vpop.f32.mrb[0].mxu0
    %v771 = vadd.f32 %v686, %v770
    %v772 = vpop.f32.mrb[0].mxu0
    %773 = vmatprep.mubr.f32.mxu0 0.0
    %774 = vmatmul.mubr.f32.gmra.mrb[0].mxu0 %v564
    %v775 = vpop.f32.mrb[0].mxu0
    %v776 = vadd.f32 %v691, %v775
    %v777 = vpop.f32.mrb[0].mxu0
    %778 = vmatprep.mubr.f32.mxu0 0.0
    %779 = vmatmul.mubr.f32.gmra.mrb[0].mxu0 %v566
    %v780 = vpop.f32.mrb[0].mxu0
    %v781 = vadd.f32 %v696, %v780
    %v782 = vpop.f32.mrb[0].mxu0
    %783 = vmatprep.mubr.f32.mxu0 0.0
    %784 = vmatmul.mubr.f32.gmra.mrb[0].mxu0 %v568
    %v785 = vpop.f32.mrb[0].mxu0
    %v786 = vadd.f32 %v701, %v785
    %v787 = vpop.f32.mrb[0].mxu0
    %788 = vdwg.mxu0
    %s789 = scalar_lea.vmem [#allocation8], 256
    %v790 = vld [vmem:[%s789] sm:$0xff]
    %v791 = vld [vmem:[%s789 + $0x8] sm:$0xff]
    %v792 = vld [vmem:[%s789 + $0x10] sm:$0xff]
    %v793 = vld [vmem:[%s789 + $0x18] sm:$0xff]
    %v794 = vld [vmem:[%s789 + $0x20] sm:$0xff]
    %v795 = vld [vmem:[%s789 + $0x28] sm:$0xff]
    %v796 = vld [vmem:[%s789 + $0x30] sm:$0xff]
    %v797 = vld [vmem:[%s789 + $0x38] sm:$0xff]
    %v798 = vld [vmem:[%s789 + $0x40] sm:$0xff]
    %v799 = vld [vmem:[%s789 + $0x48] sm:$0xff]
    %v800 = vld [vmem:[%s789 + $0x50] sm:$0xff]
    %v801 = vld [vmem:[%s789 + $0x58] sm:$0xff]
    %v802 = vld [vmem:[%s789 + $0x60] sm:$0xff]
    %v803 = vld [vmem:[%s789 + $0x68] sm:$0xff]
    %v804 = vld [vmem:[%s789 + $0x70] sm:$0xff]
    %v805 = vld [vmem:[%s789 + $0x78] sm:$0xff]
    %806 = vmatprep.subr.mxu0 0.0
    %807 = vmatpush1.msra.mxu0 %v790
    %808 = vmatprep.subr.mxu0 0.0
    %809 = vmatpush1.msra.mxu0 %v791
    %810 = vmatprep.subr.mxu0 0.0
    %811 = vmatpush1.msra.mxu0 %v792
    %812 = vmatprep.subr.mxu0 0.0
    %813 = vmatpush1.msra.mxu0 %v793
    %814 = vmatprep.subr.mxu0 0.0
    %815 = vmatpush1.msra.mxu0 %v794
    %816 = vmatprep.subr.mxu0 0.0
    %817 = vmatpush1.msra.mxu0 %v795
    %818 = vmatprep.subr.mxu0 0.0
    %819 = vmatpush1.msra.mxu0 %v796
    %820 = vmatprep.subr.mxu0 0.0
    %821 = vmatpush1.msra.mxu0 %v797
    %822 = vmatprep.subr.mxu0 0.0
    %823 = vmatpush1.msra.mxu0 %v798
    %824 = vmatprep.subr.mxu0 0.0
    %825 = vmatpush1.msra.mxu0 %v799
    %826 = vmatprep.subr.mxu0 0.0
    %827 = vmatpush1.msra.mxu0 %v800
    %828 = vmatprep.subr.mxu0 0.0
    %829 = vmatpush1.msra.mxu0 %v801
    %830 = vmatprep.subr.mxu0 0.0
    %831 = vmatpush1.msra.mxu0 %v802
    %832 = vmatprep.subr.mxu0 0.0
    %833 = vmatpush1.msra.mxu0 %v803
    %834 = vmatprep.subr.mxu0 0.0
    %835 = vmatpush1.msra.mxu0 %v804
    %836 = vmatprep.subr.mxu0 0.0
    %837 = vmatpush1.msra.mxu0 %v805
    %838 = vmatprep.subr.mxu0 0.0
    %839 = vmatpush1.msra.mxu0 0.0
    %840 = vmatprep.subr.mxu0 0.0
    %841 = vmatpush1.msra.mxu0 0.0
    %842 = vmatprep.subr.mxu0 0.0
    %843 = vmatpush1.msra.mxu0 0.0
    %844 = vmatprep.subr.mxu0 0.0
    %845 = vmatpush1.msra.mxu0 0.0
    %846 = vmatprep.subr.mxu0 0.0
    %847 = vmatpush1.msra.mxu0 0.0
    %848 = vmatprep.subr.mxu0 0.0
    %849 = vmatpush1.msra.mxu0 0.0
    %850 = vmatprep.subr.mxu0 0.0
    %851 = vmatpush1.msra.mxu0 0.0
    %852 = vmatprep.subr.mxu0 0.0
    %853 = vmatpush1.msra.mxu0 0.0
    %854 = vmatprep.subr.mxu0 0.0
    %855 = vmatpush1.msra.mxu0 0.0
    %856 = vmatprep.subr.mxu0 0.0
    %857 = vmatpush1.msra.mxu0 0.0
    %858 = vmatprep.subr.mxu0 0.0
    %859 = vmatpush1.msra.mxu0 0.0
    %860 = vmatprep.subr.mxu0 0.0
    %861 = vmatpush1.msra.mxu0 0.0
    %862 = vmatprep.subr.mxu0 0.0
    %863 = vmatpush1.msra.mxu0 0.0
    %864 = vmatprep.subr.mxu0 0.0
    %865 = vmatpush1.msra.mxu0 0.0
    %866 = vmatprep.subr.mxu0 0.0
    %867 = vmatpush1.msra.mxu0 0.0
    %868 = vmatprep.subr.mxu0 0.0
    %869 = vmatpush1.msra.mxu0 0.0
    %870 = vmatprep.mubr.f32.mxu0 0.0
    %871 = vmatmul.mubr.f32.gmra.mrb[0].mxu0 %v551
    %v872 = vpop.f32.mrb[0].mxu0
    %v873 = vadd.f32 0.0, %v872
    %v874 = vpop.f32.mrb[0].mxu0
    %875 = vmatprep.mubr.f32.mxu0 0.0
    %876 = vmatmul.mubr.f32.gmra.mrb[0].mxu0 %v552
    %v877 = vpop.f32.mrb[0].mxu0
    %v878 = vadd.f32 0.0, %v877
    %v879 = vpop.f32.mrb[0].mxu0
    %880 = vmatprep.mubr.f32.mxu0 0.0
    %881 = vmatmul.mubr.f32.gmra.mrb[0].mxu0 %v553
    %v882 = vpop.f32.mrb[0].mxu0
    %v883 = vadd.f32 0.0, %v882
    %v884 = vpop.f32.mrb[0].mxu0
    %885 = vmatprep.mubr.f32.mxu0 0.0
    %886 = vmatmul.mubr.f32.gmra.mrb[0].mxu0 %v554
    %v887 = vpop.f32.mrb[0].mxu0
    %v888 = vadd.f32 0.0, %v887
    %v889 = vpop.f32.mrb[0].mxu0
    %890 = vdwg.mxu0
    %v891 = vadd.f32 %v771, %v873
    %v892 = vadd.f32 %v776, %v878
    %v893 = vadd.f32 %v781, %v883
    %v894 = vadd.f32 %v786, %v888
    %v895 = vld [vmem:[%s4] sm:$0x1]
    %v897 = vlaneseq
    %v898 = vshrl.u32 %v897, 7
    %v899 = vsub.s32 0, %v898
    %v900 = vrot.slane %v895, %v899
    %v902 = vadd.f32 %v891, %v900
    %v903 = vadd.f32 %v892, %v900
    %v904 = vadd.f32 %v893, %v900
    %v905 = vadd.f32 %v894, %v900
    %v906 = vmax.f32 %v902, 0.0
    %v907 = vmax.f32 %v903, 0.0
    %v908 = vmax.f32 %v904, 0.0
    %v909 = vmax.f32 %v905, 0.0
    %v910 = vld [vmem:[#allocation9] sm:$0xff]
    %v911 = vld [vmem:[#allocation9 + $0x8] sm:$0xff]
    %v912 = vld [vmem:[#allocation9 + $0x10] sm:$0xff]
    %v913 = vld [vmem:[#allocation9 + $0x18] sm:$0xff]
    %v914 = vld [vmem:[#allocation9 + $0x20] sm:$0xff]
    %v915 = vld [vmem:[#allocation9 + $0x28] sm:$0xff]
    %v916 = vld [vmem:[#allocation9 + $0x30] sm:$0xff]
    %v917 = vld [vmem:[#allocation9 + $0x38] sm:$0xff]
    %v918 = vld [vmem:[#allocation9 + $0x40] sm:$0xff]
    %v919 = vld [vmem:[#allocation9 + $0x48] sm:$0xff]
    %v920 = vld [vmem:[#allocation9 + $0x50] sm:$0xff]
    %v921 = vld [vmem:[#allocation9 + $0x58] sm:$0xff]
    %v922 = vld [vmem:[#allocation9 + $0x60] sm:$0xff]
    %v923 = vld [vmem:[#allocation9 + $0x68] sm:$0xff]
    %v924 = vld [vmem:[#allocation9 + $0x70] sm:$0xff]
    %v925 = vld [vmem:[#allocation9 + $0x78] sm:$0xff]
    %v926 = vld [vmem:[%s6] sm:$0x1]
    %v928 = vlaneseq
    %v929 = vshrl.u32 %v928, 7
    %v930 = vsub.s32 0, %v929
    %v931 = vrot.slane %v926, %v930
    %933 = vmatprep.subr.mxu0 0.0
    %934 = vmatpush1.msra.mxu0 %v910
    %935 = vmatprep.subr.mxu0 0.0
    %936 = vmatpush1.msra.mxu0 %v911
    %937 = vmatprep.subr.mxu0 0.0
    %938 = vmatpush1.msra.mxu0 %v912
    %939 = vmatprep.subr.mxu0 0.0
    %940 = vmatpush1.msra.mxu0 %v913
    %941 = vmatprep.subr.mxu0 0.0
    %942 = vmatpush1.msra.mxu0 %v914
    %943 = vmatprep.subr.mxu0 0.0
    %944 = vmatpush1.msra.mxu0 %v915
    %945 = vmatprep.subr.mxu0 0.0
    %946 = vmatpush1.msra.mxu0 %v916
    %947 = vmatprep.subr.mxu0 0.0
    %948 = vmatpush1.msra.mxu0 %v917
    %949 = vmatprep.subr.mxu0 0.0
    %950 = vmatpush1.msra.mxu0 %v918
    %951 = vmatprep.subr.mxu0 0.0
    %952 = vmatpush1.msra.mxu0 %v919
    %953 = vmatprep.subr.mxu0 0.0
    %954 = vmatpush1.msra.mxu0 %v920
    %955 = vmatprep.subr.mxu0 0.0
    %956 = vmatpush1.msra.mxu0 %v921
    %957 = vmatprep.subr.mxu0 0.0
    %958 = vmatpush1.msra.mxu0 %v922
    %959 = vmatprep.subr.mxu0 0.0
    %960 = vmatpush1.msra.mxu0 %v923
    %961 = vmatprep.subr.mxu0 0.0
    %962 = vmatpush1.msra.mxu0 %v924
    %963 = vmatprep.subr.mxu0 0.0
    %964 = vmatpush1.msra.mxu0 %v925
    %965 = vmatprep.subr.mxu0 0.0
    %966 = vmatpush1.msra.mxu0 0.0
    %967 = vmatprep.subr.mxu0 0.0
    %968 = vmatpush1.msra.mxu0 0.0
    %969 = vmatprep.subr.mxu0 0.0
    %970 = vmatpush1.msra.mxu0 0.0
    %971 = vmatprep.subr.mxu0 0.0
    %972 = vmatpush1.msra.mxu0 0.0
    %973 = vmatprep.subr.mxu0 0.0
    %974 = vmatpush1.msra.mxu0 0.0
    %975 = vmatprep.subr.mxu0 0.0
    %976 = vmatpush1.msra.mxu0 0.0
    %977 = vmatprep.subr.mxu0 0.0
    %978 = vmatpush1.msra.mxu0 0.0
    %979 = vmatprep.subr.mxu0 0.0
    %980 = vmatpush1.msra.mxu0 0.0
    %981 = vmatprep.subr.mxu0 0.0
    %982 = vmatpush1.msra.mxu0 0.0
    %983 = vmatprep.subr.mxu0 0.0
    %984 = vmatpush1.msra.mxu0 0.0
    %985 = vmatprep.subr.mxu0 0.0
    %986 = vmatpush1.msra.mxu0 0.0
    %987 = vmatprep.subr.mxu0 0.0
    %988 = vmatpush1.msra.mxu0 0.0
    %989 = vmatprep.subr.mxu0 0.0
    %990 = vmatpush1.msra.mxu0 0.0
    %991 = vmatprep.subr.mxu0 0.0
    %992 = vmatpush1.msra.mxu0 0.0
    %993 = vmatprep.subr.mxu0 0.0
    %994 = vmatpush1.msra.mxu0 0.0
    %995 = vmatprep.subr.mxu0 0.0
    %996 = vmatpush1.msra.mxu0 0.0
    %997 = vmatprep.mubr.f32.mxu0 0.0
    %998 = vmatmul.mubr.f32.gmra.mrb[0].mxu0 %v190
    %v999 = vpop.f32.mrb[0].mxu0
    %v1000 = vadd.f32 %v931, %v999
    %v1001 = vpop.f32.mrb[0].mxu0
    %1002 = vmatprep.mubr.f32.mxu0 0.0
    %1003 = vmatmul.mubr.f32.gmra.mrb[0].mxu0 %v191
    %v1004 = vpop.f32.mrb[0].mxu0
    %v1005 = vadd.f32 %v931, %v1004
    %v1006 = vpop.f32.mrb[0].mxu0
    %1007 = vmatprep.mubr.f32.mxu0 0.0
    %1008 = vmatmul.mubr.f32.gmra.mrb[0].mxu0 %v193
    %v1009 = vpop.f32.mrb[0].mxu0
    %v1010 = vadd.f32 %v931, %v1009
    %v1011 = vpop.f32.mrb[0].mxu0
    %1012 = vmatprep.mubr.f32.mxu0 0.0
    %1013 = vmatmul.mubr.f32.gmra.mrb[0].mxu0 %v194
    %v1014 = vpop.f32.mrb[0].mxu0
    %v1015 = vadd.f32 %v931, %v1014
    %v1016 = vpop.f32.mrb[0].mxu0
    %1017 = vdwg.mxu0
    %v1018 = vadd.f32 %v906, %v1000
    %v1019 = vadd.f32 %v907, %v1005
    %v1020 = vadd.f32 %v908, %v1010
    %v1021 = vadd.f32 %v909, %v1015
    %1022 = vst [vmem:[#allocation2 + $0x8] sm:$0xff] %v1018
    %1023 = vst [vmem:[#allocation2 + $0x10] sm:$0xff] %v1019
    %1024 = vst [vmem:[#allocation2 + $0x20] sm:$0xff] %v1020
    %1025 = vst [vmem:[#allocation2 + $0x28] sm:$0xff] %v1021
    %v1026 = vld [vmem:[#allocation2] sm:$0xff]
    %v1027 = vld [vmem:[#allocation2 + $0x8] sm:$0xff]
    %v1028 = vld [vmem:[#allocation2 + $0x10] sm:$0xff]
    %v1029 = vld [vmem:[#allocation2 + $0x18] sm:$0xff]
    %v1030 = vld [vmem:[#allocation2 + $0x20] sm:$0xff]
    %v1031 = vld [vmem:[#allocation2 + $0x28] sm:$0xff]
    %vm1038 = vcmask 1043456
    %v1039 = vrot.slane %v1026, 4
    %v1040 = vrot.slane %v1027, 4
    %v1041 = vsel %vm1038, %v1039, %v1040
    %v1042 = vrot.slane %v1028, 4
    %v1043 = vsel %vm1038, %v1040, %v1042
    %v1044 = vrot.slane %v1029, 4
    %v1045 = vrot.slane %v1030, 4
    %v1046 = vsel %vm1038, %v1044, %v1045
    %v1047 = vrot.slane %v1031, 4
    %v1048 = vsel %vm1038, %v1045, %v1047
    %v1053 = vld [vmem:[#allocation11] sm:$0xff]
    %v1054 = vld [vmem:[#allocation11 + $0x8] sm:$0xff]
    %v1055 = vld [vmem:[#allocation11 + $0x10] sm:$0xff]
    %v1056 = vld [vmem:[#allocation11 + $0x18] sm:$0xff]
    %v1057 = vld [vmem:[#allocation11 + $0x20] sm:$0xff]
    %v1058 = vld [vmem:[#allocation11 + $0x28] sm:$0xff]
    %v1059 = vld [vmem:[#allocation11 + $0x30] sm:$0xff]
    %v1060 = vld [vmem:[#allocation11 + $0x38] sm:$0xff]
    %v1061 = vld [vmem:[#allocation11 + $0x40] sm:$0xff]
    %v1062 = vld [vmem:[#allocation11 + $0x48] sm:$0xff]
    %v1063 = vld [vmem:[#allocation11 + $0x50] sm:$0xff]
    %v1064 = vld [vmem:[#allocation11 + $0x58] sm:$0xff]
    %v1065 = vld [vmem:[#allocation11 + $0x60] sm:$0xff]
    %v1066 = vld [vmem:[#allocation11 + $0x68] sm:$0xff]
    %v1067 = vld [vmem:[#allocation11 + $0x70] sm:$0xff]
    %v1068 = vld [vmem:[#allocation11 + $0x78] sm:$0xff]
    %v1069 = vrot.slane %v1026, 6
    %v1070 = vrot.slane %v1027, 6
    %v1071 = vsel %vm201, %v1069, %v1070
    %v1072 = vrot.slane %v1028, 6
    %v1073 = vsel %vm201, %v1070, %v1072
    %v1074 = vrot.slane %v1029, 6
    %v1075 = vrot.slane %v1030, 6
    %v1076 = vsel %vm201, %v1074, %v1075
    %v1077 = vrot.slane %v1031, 6
    %v1078 = vsel %vm201, %v1075, %v1077
    %s1083 = scalar_lea.vmem [#allocation11], 128
    %v1084 = vld [vmem:[%s1083] sm:$0xff]
    %v1085 = vld [vmem:[%s1083 + $0x8] sm:$0xff]
    %v1086 = vld [vmem:[%s1083 + $0x10] sm:$0xff]
    %v1087 = vld [vmem:[%s1083 + $0x18] sm:$0xff]
    %v1088 = vld [vmem:[%s1083 + $0x20] sm:$0xff]
    %v1089 = vld [vmem:[%s1083 + $0x28] sm:$0xff]
    %v1090 = vld [vmem:[%s1083 + $0x30] sm:$0xff]
    %v1091 = vld [vmem:[%s1083 + $0x38] sm:$0xff]
    %v1092 = vld [vmem:[%s1083 + $0x40] sm:$0xff]
    %v1093 = vld [vmem:[%s1083 + $0x48] sm:$0xff]
    %v1094 = vld [vmem:[%s1083 + $0x50] sm:$0xff]
    %v1095 = vld [vmem:[%s1083 + $0x58] sm:$0xff]
    %v1096 = vld [vmem:[%s1083 + $0x60] sm:$0xff]
    %v1097 = vld [vmem:[%s1083 + $0x68] sm:$0xff]
    %v1098 = vld [vmem:[%s1083 + $0x70] sm:$0xff]
    %v1099 = vld [vmem:[%s1083 + $0x78] sm:$0xff]
    %1100 = vmatprep.subr.mxu0 0.0
    %1101 = vmatpush1.msra.mxu0 %v1084
    %1102 = vmatprep.subr.mxu0 0.0
    %1103 = vmatpush1.msra.mxu0 %v1085
    %1104 = vmatprep.subr.mxu0 0.0
    %1105 = vmatpush1.msra.mxu0 %v1086
    %1106 = vmatprep.subr.mxu0 0.0
    %1107 = vmatpush1.msra.mxu0 %v1087
    %1108 = vmatprep.subr.mxu0 0.0
    %1109 = vmatpush1.msra.mxu0 %v1088
    %1110 = vmatprep.subr.mxu0 0.0
    %1111 = vmatpush1.msra.mxu0 %v1089
    %1112 = vmatprep.subr.mxu0 0.0
    %1113 = vmatpush1.msra.mxu0 %v1090
    %1114 = vmatprep.subr.mxu0 0.0
    %1115 = vmatpush1.msra.mxu0 %v1091
    %1116 = vmatprep.subr.mxu0 0.0
    %1117 = vmatpush1.msra.mxu0 %v1092
    %1118 = vmatprep.subr.mxu0 0.0
    %1119 = vmatpush1.msra.mxu0 %v1093
    %1120 = vmatprep.subr.mxu0 0.0
    %1121 = vmatpush1.msra.mxu0 %v1094
    %1122 = vmatprep.subr.mxu0 0.0
    %1123 = vmatpush1.msra.mxu0 %v1095
    %1124 = vmatprep.subr.mxu0 0.0
    %1125 = vmatpush1.msra.mxu0 %v1096
    %1126 = vmatprep.subr.mxu0 0.0
    %1127 = vmatpush1.msra.mxu0 %v1097
    %1128 = vmatprep.subr.mxu0 0.0
    %1129 = vmatpush1.msra.mxu0 %v1098
    %1130 = vmatprep.subr.mxu0 0.0
    %1131 = vmatpush1.msra.mxu0 %v1099
    %1132 = vmatprep.subr.mxu0 0.0
    %1133 = vmatpush1.msra.mxu0 0.0
    %1134 = vmatprep.subr.mxu0 0.0
    %1135 = vmatpush1.msra.mxu0 0.0
    %1136 = vmatprep.subr.mxu0 0.0
    %1137 = vmatpush1.msra.mxu0 0.0
    %1138 = vmatprep.subr.mxu0 0.0
    %1139 = vmatpush1.msra.mxu0 0.0
    %1140 = vmatprep.subr.mxu0 0.0
    %1141 = vmatpush1.msra.mxu0 0.0
    %1142 = vmatprep.subr.mxu0 0.0
    %1143 = vmatpush1.msra.mxu0 0.0
    %1144 = vmatprep.subr.mxu0 0.0
    %1145 = vmatpush1.msra.mxu0 0.0
    %1146 = vmatprep.subr.mxu0 0.0
    %1147 = vmatpush1.msra.mxu0 0.0
    %1148 = vmatprep.subr.mxu0 0.0
    %1149 = vmatpush1.msra.mxu0 0.0
    %1150 = vmatprep.subr.mxu0 0.0
    %1151 = vmatpush1.msra.mxu0 0.0
    %1152 = vmatprep.subr.mxu0 0.0
    %1153 = vmatpush1.msra.mxu0 0.0
    %1154 = vmatprep.subr.mxu0 0.0
    %1155 = vmatpush1.msra.mxu0 0.0
    %1156 = vmatprep.subr.mxu0 0.0
    %1157 = vmatpush1.msra.mxu0 0.0
    %1158 = vmatprep.subr.mxu0 0.0
    %1159 = vmatpush1.msra.mxu0 0.0
    %1160 = vmatprep.subr.mxu0 0.0
    %1161 = vmatpush1.msra.mxu0 0.0
    %1162 = vmatprep.subr.mxu0 0.0
    %1163 = vmatpush1.msra.mxu0 0.0
    %1164 = vmatprep.mubr.f32.mxu0 0.0
    %1165 = vmatmul.mubr.f32.gmra.mrb[0].mxu0 %v1071
    %v1166 = vpop.f32.mrb[0].mxu0
    %v1167 = vadd.f32 0.0, %v1166
    %v1168 = vpop.f32.mrb[0].mxu0
    %1169 = vmatprep.mubr.f32.mxu0 0.0
    %1170 = vmatmul.mubr.f32.gmra.mrb[0].mxu0 %v1073
    %v1171 = vpop.f32.mrb[0].mxu0
    %v1172 = vadd.f32 0.0, %v1171
    %v1173 = vpop.f32.mrb[0].mxu0
    %1174 = vmatprep.mubr.f32.mxu0 0.0
    %1175 = vmatmul.mubr.f32.gmra.mrb[0].mxu0 %v1076
    %v1176 = vpop.f32.mrb[0].mxu0
    %v1177 = vadd.f32 0.0, %v1176
    %v1178 = vpop.f32.mrb[0].mxu0
    %1179 = vmatprep.mubr.f32.mxu0 0.0
    %1180 = vmatmul.mubr.f32.gmra.mrb[0].mxu0 %v1078
    %v1181 = vpop.f32.mrb[0].mxu0
    %v1182 = vadd.f32 0.0, %v1181
    %v1183 = vpop.f32.mrb[0].mxu0
    %1184 = vdwg.mxu0
    %1185 = vmatprep.subr.mxu0 0.0
    %1186 = vmatpush1.msra.mxu0 %v1053
    %1187 = vmatprep.subr.mxu0 0.0
    %1188 = vmatpush1.msra.mxu0 %v1054
    %1189 = vmatprep.subr.mxu0 0.0
    %1190 = vmatpush1.msra.mxu0 %v1055
    %1191 = vmatprep.subr.mxu0 0.0
    %1192 = vmatpush1.msra.mxu0 %v1056
    %1193 = vmatprep.subr.mxu0 0.0
    %1194 = vmatpush1.msra.mxu0 %v1057
    %1195 = vmatprep.subr.mxu0 0.0
    %1196 = vmatpush1.msra.mxu0 %v1058
    %1197 = vmatprep.subr.mxu0 0.0
    %1198 = vmatpush1.msra.mxu0 %v1059
    %1199 = vmatprep.subr.mxu0 0.0
    %1200 = vmatpush1.msra.mxu0 %v1060
    %1201 = vmatprep.subr.mxu0 0.0
    %1202 = vmatpush1.msra.mxu0 %v1061
    %1203 = vmatprep.subr.mxu0 0.0
    %1204 = vmatpush1.msra.mxu0 %v1062
    %1205 = vmatprep.subr.mxu0 0.0
    %1206 = vmatpush1.msra.mxu0 %v1063
    %1207 = vmatprep.subr.mxu0 0.0
    %1208 = vmatpush1.msra.mxu0 %v1064
    %1209 = vmatprep.subr.mxu0 0.0
    %1210 = vmatpush1.msra.mxu0 %v1065
    %1211 = vmatprep.subr.mxu0 0.0
    %1212 = vmatpush1.msra.mxu0 %v1066
    %1213 = vmatprep.subr.mxu0 0.0
    %1214 = vmatpush1.msra.mxu0 %v1067
    %1215 = vmatprep.subr.mxu0 0.0
    %1216 = vmatpush1.msra.mxu0 %v1068
    %1217 = vmatprep.subr.mxu0 0.0
    %1218 = vmatpush1.msra.mxu0 0.0
    %1219 = vmatprep.subr.mxu0 0.0
    %1220 = vmatpush1.msra.mxu0 0.0
    %1221 = vmatprep.subr.mxu0 0.0
    %1222 = vmatpush1.msra.mxu0 0.0
    %1223 = vmatprep.subr.mxu0 0.0
    %1224 = vmatpush1.msra.mxu0 0.0
    %1225 = vmatprep.subr.mxu0 0.0
    %1226 = vmatpush1.msra.mxu0 0.0
    %1227 = vmatprep.subr.mxu0 0.0
    %1228 = vmatpush1.msra.mxu0 0.0
    %1229 = vmatprep.subr.mxu0 0.0
    %1230 = vmatpush1.msra.mxu0 0.0
    %1231 = vmatprep.subr.mxu0 0.0
    %1232 = vmatpush1.msra.mxu0 0.0
    %1233 = vmatprep.subr.mxu0 0.0
    %1234 = vmatpush1.msra.mxu0 0.0
    %1235 = vmatprep.subr.mxu0 0.0
    %1236 = vmatpush1.msra.mxu0 0.0
    %1237 = vmatprep.subr.mxu0 0.0
    %1238 = vmatpush1.msra.mxu0 0.0
    %1239 = vmatprep.subr.mxu0 0.0
    %1240 = vmatpush1.msra.mxu0 0.0
    %1241 = vmatprep.subr.mxu0 0.0
    %1242 = vmatpush1.msra.mxu0 0.0
    %1243 = vmatprep.subr.mxu0 0.0
    %1244 = vmatpush1.msra.mxu0 0.0
    %1245 = vmatprep.subr.mxu0 0.0
    %1246 = vmatpush1.msra.mxu0 0.0
    %1247 = vmatprep.subr.mxu0 0.0
    %1248 = vmatpush1.msra.mxu0 0.0
    %1249 = vmatprep.mubr.f32.mxu0 0.0
    %1250 = vmatmul.mubr.f32.gmra.mrb[0].mxu0 %v1041
    %v1251 = vpop.f32.mrb[0].mxu0
    %v1252 = vadd.f32 %v1167, %v1251
    %v1253 = vpop.f32.mrb[0].mxu0
    %1254 = vmatprep.mubr.f32.mxu0 0.0
    %1255 = vmatmul.mubr.f32.gmra.mrb[0].mxu0 %v1043
    %v1256 = vpop.f32.mrb[0].mxu0
    %v1257 = vadd.f32 %v1172, %v1256
    %v1258 = vpop.f32.mrb[0].mxu0
    %1259 = vmatprep.mubr.f32.mxu0 0.0
    %1260 = vmatmul.mubr.f32.gmra.mrb[0].mxu0 %v1046
    %v1261 = vpop.f32.mrb[0].mxu0
    %v1262 = vadd.f32 %v1177, %v1261
    %v1263 = vpop.f32.mrb[0].mxu0
    %1264 = vmatprep.mubr.f32.mxu0 0.0
    %1265 = vmatmul.mubr.f32.gmra.mrb[0].mxu0 %v1048
    %v1266 = vpop.f32.mrb[0].mxu0
    %v1267 = vadd.f32 %v1182, %v1266
    %v1268 = vpop.f32.mrb[0].mxu0
    %1269 = vdwg.mxu0
    %s1270 = scalar_lea.vmem [#allocation11], 256
    %v1271 = vld [vmem:[%s1270] sm:$0xff]
    %v1272 = vld [vmem:[%s1270 + $0x8] sm:$0xff]
    %v1273 = vld [vmem:[%s1270 + $0x10] sm:$0xff]
    %v1274 = vld [vmem:[%s1270 + $0x18] sm:$0xff]
    %v1275 = vld [vmem:[%s1270 + $0x20] sm:$0xff]
    %v1276 = vld [vmem:[%s1270 + $0x28] sm:$0xff]
    %v1277 = vld [vmem:[%s1270 + $0x30] sm:$0xff]
    %v1278 = vld [vmem:[%s1270 + $0x38] sm:$0xff]
    %v1279 = vld [vmem:[%s1270 + $0x40] sm:$0xff]
    %v1280 = vld [vmem:[%s1270 + $0x48] sm:$0xff]
    %v1281 = vld [vmem:[%s1270 + $0x50] sm:$0xff]
    %v1282 = vld [vmem:[%s1270 + $0x58] sm:$0xff]
    %v1283 = vld [vmem:[%s1270 + $0x60] sm:$0xff]
    %v1284 = vld [vmem:[%s1270 + $0x68] sm:$0xff]
    %v1285 = vld [vmem:[%s1270 + $0x70] sm:$0xff]
    %v1286 = vld [vmem:[%s1270 + $0x78] sm:$0xff]
    %1287 = vmatprep.subr.mxu0 0.0
    %1288 = vmatpush1.msra.mxu0 %v1271
    %1289 = vmatprep.subr.mxu0 0.0
    %1290 = vmatpush1.msra.mxu0 %v1272
    %1291 = vmatprep.subr.mxu0 0.0
    %1292 = vmatpush1.msra.mxu0 %v1273
    %1293 = vmatprep.subr.mxu0 0.0
    %1294 = vmatpush1.msra.mxu0 %v1274
    %1295 = vmatprep.subr.mxu0 0.0
    %1296 = vmatpush1.msra.mxu0 %v1275
    %1297 = vmatprep.subr.mxu0 0.0
    %1298 = vmatpush1.msra.mxu0 %v1276
    %1299 = vmatprep.subr.mxu0 0.0
    %1300 = vmatpush1.msra.mxu0 %v1277
    %1301 = vmatprep.subr.mxu0 0.0
    %1302 = vmatpush1.msra.mxu0 %v1278
    %1303 = vmatprep.subr.mxu0 0.0
    %1304 = vmatpush1.msra.mxu0 %v1279
    %1305 = vmatprep.subr.mxu0 0.0
    %1306 = vmatpush1.msra.mxu0 %v1280
    %1307 = vmatprep.subr.mxu0 0.0
    %1308 = vmatpush1.msra.mxu0 %v1281
    %1309 = vmatprep.subr.mxu0 0.0
    %1310 = vmatpush1.msra.mxu0 %v1282
    %1311 = vmatprep.subr.mxu0 0.0
    %1312 = vmatpush1.msra.mxu0 %v1283
    %1313 = vmatprep.subr.mxu0 0.0
    %1314 = vmatpush1.msra.mxu0 %v1284
    %1315 = vmatprep.subr.mxu0 0.0
    %1316 = vmatpush1.msra.mxu0 %v1285
    %1317 = vmatprep.subr.mxu0 0.0
    %1318 = vmatpush1.msra.mxu0 %v1286
    %1319 = vmatprep.subr.mxu0 0.0
    %1320 = vmatpush1.msra.mxu0 0.0
    %1321 = vmatprep.subr.mxu0 0.0
    %1322 = vmatpush1.msra.mxu0 0.0
    %1323 = vmatprep.subr.mxu0 0.0
    %1324 = vmatpush1.msra.mxu0 0.0
    %1325 = vmatprep.subr.mxu0 0.0
    %1326 = vmatpush1.msra.mxu0 0.0
    %1327 = vmatprep.subr.mxu0 0.0
    %1328 = vmatpush1.msra.mxu0 0.0
    %1329 = vmatprep.subr.mxu0 0.0
    %1330 = vmatpush1.msra.mxu0 0.0
    %1331 = vmatprep.subr.mxu0 0.0
    %1332 = vmatpush1.msra.mxu0 0.0
    %1333 = vmatprep.subr.mxu0 0.0
    %1334 = vmatpush1.msra.mxu0 0.0
    %1335 = vmatprep.subr.mxu0 0.0
    %1336 = vmatpush1.msra.mxu0 0.0
    %1337 = vmatprep.subr.mxu0 0.0
    %1338 = vmatpush1.msra.mxu0 0.0
    %1339 = vmatprep.subr.mxu0 0.0
    %1340 = vmatpush1.msra.mxu0 0.0
    %1341 = vmatprep.subr.mxu0 0.0
    %1342 = vmatpush1.msra.mxu0 0.0
    %1343 = vmatprep.subr.mxu0 0.0
    %1344 = vmatpush1.msra.mxu0 0.0
    %1345 = vmatprep.subr.mxu0 0.0
    %1346 = vmatpush1.msra.mxu0 0.0
    %1347 = vmatprep.subr.mxu0 0.0
    %1348 = vmatpush1.msra.mxu0 0.0
    %1349 = vmatprep.subr.mxu0 0.0
    %1350 = vmatpush1.msra.mxu0 0.0
    %1351 = vmatprep.mubr.f32.mxu0 0.0
    %1352 = vmatmul.mubr.f32.gmra.mrb[0].mxu0 %v1027
    %v1353 = vpop.f32.mrb[0].mxu0
    %v1354 = vadd.f32 0.0, %v1353
    %v1355 = vpop.f32.mrb[0].mxu0
    %1356 = vmatprep.mubr.f32.mxu0 0.0
    %1357 = vmatmul.mubr.f32.gmra.mrb[0].mxu0 %v1028
    %v1358 = vpop.f32.mrb[0].mxu0
    %v1359 = vadd.f32 0.0, %v1358
    %v1360 = vpop.f32.mrb[0].mxu0
    %1361 = vmatprep.mubr.f32.mxu0 0.0
    %1362 = vmatmul.mubr.f32.gmra.mrb[0].mxu0 %v1030
    %v1363 = vpop.f32.mrb[0].mxu0
    %v1364 = vadd.f32 0.0, %v1363
    %v1365 = vpop.f32.mrb[0].mxu0
    %1366 = vmatprep.mubr.f32.mxu0 0.0
    %1367 = vmatmul.mubr.f32.gmra.mrb[0].mxu0 %v1031
    %v1368 = vpop.f32.mrb[0].mxu0
    %v1369 = vadd.f32 0.0, %v1368
    %v1370 = vpop.f32.mrb[0].mxu0
    %1371 = vdwg.mxu0
    %v1372 = vadd.f32 %v1252, %v1354
    %v1373 = vadd.f32 %v1257, %v1359
    %v1374 = vadd.f32 %v1262, %v1364
    %v1375 = vadd.f32 %v1267, %v1369
    %v1376 = vld [vmem:[%s8] sm:$0x1]
    %v1378 = vlaneseq
    %v1379 = vshrl.u32 %v1378, 7
    %v1380 = vsub.s32 0, %v1379
    %v1381 = vrot.slane %v1376, %v1380
    %v1383 = vadd.f32 %v1372, %v1381
    %v1384 = vadd.f32 %v1373, %v1381
    %v1385 = vadd.f32 %v1374, %v1381
    %v1386 = vadd.f32 %v1375, %v1381
    %v1387 = vmax.f32 %v1383, 0.0
    %v1388 = vmax.f32 %v1384, 0.0
    %v1389 = vmax.f32 %v1385, 0.0
    %v1390 = vmax.f32 %v1386, 0.0
    %v1395 = vrot.slane 0.0, 4
    %v1396 = vrot.slane %v1387, 4
    %v1397 = vsel %vm1038, %v1395, %v1396
    %v1398 = vrot.slane %v1388, 4
    %v1399 = vsel %vm1038, %v1396, %v1398
    %v1400 = vrot.slane %v1389, 4
    %v1401 = vsel %vm1038, %v1395, %v1400
    %v1402 = vrot.slane %v1390, 4
    %v1403 = vsel %vm1038, %v1400, %v1402
    %v1408 = vld [vmem:[#allocation12] sm:$0xff]
    %v1409 = vld [vmem:[#allocation12 + $0x8] sm:$0xff]
    %v1410 = vld [vmem:[#allocation12 + $0x10] sm:$0xff]
    %v1411 = vld [vmem:[#allocation12 + $0x18] sm:$0xff]
    %v1412 = vld [vmem:[#allocation12 + $0x20] sm:$0xff]
    %v1413 = vld [vmem:[#allocation12 + $0x28] sm:$0xff]
    %v1414 = vld [vmem:[#allocation12 + $0x30] sm:$0xff]
    %v1415 = vld [vmem:[#allocation12 + $0x38] sm:$0xff]
    %v1416 = vld [vmem:[#allocation12 + $0x40] sm:$0xff]
    %v1417 = vld [vmem:[#allocation12 + $0x48] sm:$0xff]
    %v1418 = vld [vmem:[#allocation12 + $0x50] sm:$0xff]
    %v1419 = vld [vmem:[#allocation12 + $0x58] sm:$0xff]
    %v1420 = vld [vmem:[#allocation12 + $0x60] sm:$0xff]
    %v1421 = vld [vmem:[#allocation12 + $0x68] sm:$0xff]
    %v1422 = vld [vmem:[#allocation12 + $0x70] sm:$0xff]
    %v1423 = vld [vmem:[#allocation12 + $0x78] sm:$0xff]
    %v1424 = vrot.slane %v1387, 6
    %v1425 = vsel %vm201, %v560, %v1424
    %v1426 = vrot.slane %v1388, 6
    %v1427 = vsel %vm201, %v1424, %v1426
    %v1428 = vrot.slane %v1389, 6
    %v1429 = vsel %vm201, %v560, %v1428
    %v1430 = vrot.slane %v1390, 6
    %v1431 = vsel %vm201, %v1428, %v1430
    %s1436 = scalar_lea.vmem [#allocation12], 128
    %v1437 = vld [vmem:[%s1436] sm:$0xff]
    %v1438 = vld [vmem:[%s1436 + $0x8] sm:$0xff]
    %v1439 = vld [vmem:[%s1436 + $0x10] sm:$0xff]
    %v1440 = vld [vmem:[%s1436 + $0x18] sm:$0xff]
    %v1441 = vld [vmem:[%s1436 + $0x20] sm:$0xff]
    %v1442 = vld [vmem:[%s1436 + $0x28] sm:$0xff]
    %v1443 = vld [vmem:[%s1436 + $0x30] sm:$0xff]
    %v1444 = vld [vmem:[%s1436 + $0x38] sm:$0xff]
    %v1445 = vld [vmem:[%s1436 + $0x40] sm:$0xff]
    %v1446 = vld [vmem:[%s1436 + $0x48] sm:$0xff]
    %v1447 = vld [vmem:[%s1436 + $0x50] sm:$0xff]
    %v1448 = vld [vmem:[%s1436 + $0x58] sm:$0xff]
    %v1449 = vld [vmem:[%s1436 + $0x60] sm:$0xff]
    %v1450 = vld [vmem:[%s1436 + $0x68] sm:$0xff]
    %v1451 = vld [vmem:[%s1436 + $0x70] sm:$0xff]
    %v1452 = vld [vmem:[%s1436 + $0x78] sm:$0xff]
    %1453 = vmatprep.subr.mxu0 0.0
    %1454 = vmatpush1.msra.mxu0 %v1437
    %1455 = vmatprep.subr.mxu0 0.0
    %1456 = vmatpush1.msra.mxu0 %v1438
    %1457 = vmatprep.subr.mxu0 0.0
    %1458 = vmatpush1.msra.mxu0 %v1439
    %1459 = vmatprep.subr.mxu0 0.0
    %1460 = vmatpush1.msra.mxu0 %v1440
    %1461 = vmatprep.subr.mxu0 0.0
    %1462 = vmatpush1.msra.mxu0 %v1441
    %1463 = vmatprep.subr.mxu0 0.0
    %1464 = vmatpush1.msra.mxu0 %v1442
    %1465 = vmatprep.subr.mxu0 0.0
    %1466 = vmatpush1.msra.mxu0 %v1443
    %1467 = vmatprep.subr.mxu0 0.0
    %1468 = vmatpush1.msra.mxu0 %v1444
    %1469 = vmatprep.subr.mxu0 0.0
    %1470 = vmatpush1.msra.mxu0 %v1445
    %1471 = vmatprep.subr.mxu0 0.0
    %1472 = vmatpush1.msra.mxu0 %v1446
    %1473 = vmatprep.subr.mxu0 0.0
    %1474 = vmatpush1.msra.mxu0 %v1447
    %1475 = vmatprep.subr.mxu0 0.0
    %1476 = vmatpush1.msra.mxu0 %v1448
    %1477 = vmatprep.subr.mxu0 0.0
    %1478 = vmatpush1.msra.mxu0 %v1449
    %1479 = vmatprep.subr.mxu0 0.0
    %1480 = vmatpush1.msra.mxu0 %v1450
    %1481 = vmatprep.subr.mxu0 0.0
    %1482 = vmatpush1.msra.mxu0 %v1451
    %1483 = vmatprep.subr.mxu0 0.0
    %1484 = vmatpush1.msra.mxu0 %v1452
    %1485 = vmatprep.subr.mxu0 0.0
    %1486 = vmatpush1.msra.mxu0 0.0
    %1487 = vmatprep.subr.mxu0 0.0
    %1488 = vmatpush1.msra.mxu0 0.0
    %1489 = vmatprep.subr.mxu0 0.0
    %1490 = vmatpush1.msra.mxu0 0.0
    %1491 = vmatprep.subr.mxu0 0.0
    %1492 = vmatpush1.msra.mxu0 0.0
    %1493 = vmatprep.subr.mxu0 0.0
    %1494 = vmatpush1.msra.mxu0 0.0
    %1495 = vmatprep.subr.mxu0 0.0
    %1496 = vmatpush1.msra.mxu0 0.0
    %1497 = vmatprep.subr.mxu0 0.0
    %1498 = vmatpush1.msra.mxu0 0.0
    %1499 = vmatprep.subr.mxu0 0.0
    %1500 = vmatpush1.msra.mxu0 0.0
    %1501 = vmatprep.subr.mxu0 0.0
    %1502 = vmatpush1.msra.mxu0 0.0
    %1503 = vmatprep.subr.mxu0 0.0
    %1504 = vmatpush1.msra.mxu0 0.0
    %1505 = vmatprep.subr.mxu0 0.0
    %1506 = vmatpush1.msra.mxu0 0.0
    %1507 = vmatprep.subr.mxu0 0.0
    %1508 = vmatpush1.msra.mxu0 0.0
    %1509 = vmatprep.subr.mxu0 0.0
    %1510 = vmatpush1.msra.mxu0 0.0
    %1511 = vmatprep.subr.mxu0 0.0
    %1512 = vmatpush1.msra.mxu0 0.0
    %1513 = vmatprep.subr.mxu0 0.0
    %1514 = vmatpush1.msra.mxu0 0.0
    %1515 = vmatprep.subr.mxu0 0.0
    %1516 = vmatpush1.msra.mxu0 0.0
    %1517 = vmatprep.mubr.f32.mxu0 0.0
    %1518 = vmatmul.mubr.f32.gmra.mrb[0].mxu0 %v1425
    %v1519 = vpop.f32.mrb[0].mxu0
    %v1520 = vadd.f32 0.0, %v1519
    %v1521 = vpop.f32.mrb[0].mxu0
    %1522 = vmatprep.mubr.f32.mxu0 0.0
    %1523 = vmatmul.mubr.f32.gmra.mrb[0].mxu0 %v1427
    %v1524 = vpop.f32.mrb[0].mxu0
    %v1525 = vadd.f32 0.0, %v1524
    %v1526 = vpop.f32.mrb[0].mxu0
    %1527 = vmatprep.mubr.f32.mxu0 0.0
    %1528 = vmatmul.mubr.f32.gmra.mrb[0].mxu0 %v1429
    %v1529 = vpop.f32.mrb[0].mxu0
    %v1530 = vadd.f32 0.0, %v1529
    %v1531 = vpop.f32.mrb[0].mxu0
    %1532 = vmatprep.mubr.f32.mxu0 0.0
    %1533 = vmatmul.mubr.f32.gmra.mrb[0].mxu0 %v1431
    %v1534 = vpop.f32.mrb[0].mxu0
    %v1535 = vadd.f32 0.0, %v1534
    %v1536 = vpop.f32.mrb[0].mxu0
    %1537 = vdwg.mxu0
    %1538 = vmatprep.subr.mxu0 0.0
    %1539 = vmatpush1.msra.mxu0 %v1408
    %1540 = vmatprep.subr.mxu0 0.0
    %1541 = vmatpush1.msra.mxu0 %v1409
    %1542 = vmatprep.subr.mxu0 0.0
    %1543 = vmatpush1.msra.mxu0 %v1410
    %1544 = vmatprep.subr.mxu0 0.0
    %1545 = vmatpush1.msra.mxu0 %v1411
    %1546 = vmatprep.subr.mxu0 0.0
    %1547 = vmatpush1.msra.mxu0 %v1412
    %1548 = vmatprep.subr.mxu0 0.0
    %1549 = vmatpush1.msra.mxu0 %v1413
    %1550 = vmatprep.subr.mxu0 0.0
    %1551 = vmatpush1.msra.mxu0 %v1414
    %1552 = vmatprep.subr.mxu0 0.0
    %1553 = vmatpush1.msra.mxu0 %v1415
    %1554 = vmatprep.subr.mxu0 0.0
    %1555 = vmatpush1.msra.mxu0 %v1416
    %1556 = vmatprep.subr.mxu0 0.0
    %1557 = vmatpush1.msra.mxu0 %v1417
    %1558 = vmatprep.subr.mxu0 0.0
    %1559 = vmatpush1.msra.mxu0 %v1418
    %1560 = vmatprep.subr.mxu0 0.0
    %1561 = vmatpush1.msra.mxu0 %v1419
    %1562 = vmatprep.subr.mxu0 0.0
    %1563 = vmatpush1.msra.mxu0 %v1420
    %1564 = vmatprep.subr.mxu0 0.0
    %1565 = vmatpush1.msra.mxu0 %v1421
    %1566 = vmatprep.subr.mxu0 0.0
    %1567 = vmatpush1.msra.mxu0 %v1422
    %1568 = vmatprep.subr.mxu0 0.0
    %1569 = vmatpush1.msra.mxu0 %v1423
    %1570 = vmatprep.subr.mxu0 0.0
    %1571 = vmatpush1.msra.mxu0 0.0
    %1572 = vmatprep.subr.mxu0 0.0
    %1573 = vmatpush1.msra.mxu0 0.0
    %1574 = vmatprep.subr.mxu0 0.0
    %1575 = vmatpush1.msra.mxu0 0.0
    %1576 = vmatprep.subr.mxu0 0.0
    %1577 = vmatpush1.msra.mxu0 0.0
    %1578 = vmatprep.subr.mxu0 0.0
    %1579 = vmatpush1.msra.mxu0 0.0
    %1580 = vmatprep.subr.mxu0 0.0
    %1581 = vmatpush1.msra.mxu0 0.0
    %1582 = vmatprep.subr.mxu0 0.0
    %1583 = vmatpush1.msra.mxu0 0.0
    %1584 = vmatprep.subr.mxu0 0.0
    %1585 = vmatpush1.msra.mxu0 0.0
    %1586 = vmatprep.subr.mxu0 0.0
    %1587 = vmatpush1.msra.mxu0 0.0
    %1588 = vmatprep.subr.mxu0 0.0
    %1589 = vmatpush1.msra.mxu0 0.0
    %1590 = vmatprep.subr.mxu0 0.0
    %1591 = vmatpush1.msra.mxu0 0.0
    %1592 = vmatprep.subr.mxu0 0.0
    %1593 = vmatpush1.msra.mxu0 0.0
    %1594 = vmatprep.subr.mxu0 0.0
    %1595 = vmatpush1.msra.mxu0 0.0
    %1596 = vmatprep.subr.mxu0 0.0
    %1597 = vmatpush1.msra.mxu0 0.0
    %1598 = vmatprep.subr.mxu0 0.0
    %1599 = vmatpush1.msra.mxu0 0.0
    %1600 = vmatprep.subr.mxu0 0.0
    %1601 = vmatpush1.msra.mxu0 0.0
    %1602 = vmatprep.mubr.f32.mxu0 0.0
    %1603 = vmatmul.mubr.f32.gmra.mrb[0].mxu0 %v1397
    %v1604 = vpop.f32.mrb[0].mxu0
    %v1605 = vadd.f32 %v1520, %v1604
    %v1606 = vpop.f32.mrb[0].mxu0
    %1607 = vmatprep.mubr.f32.mxu0 0.0
    %1608 = vmatmul.mubr.f32.gmra.mrb[0].mxu0 %v1399
    %v1609 = vpop.f32.mrb[0].mxu0
    %v1610 = vadd.f32 %v1525, %v1609
    %v1611 = vpop.f32.mrb[0].mxu0
    %1612 = vmatprep.mubr.f32.mxu0 0.0
    %1613 = vmatmul.mubr.f32.gmra.mrb[0].mxu0 %v1401
    %v1614 = vpop.f32.mrb[0].mxu0
    %v1615 = vadd.f32 %v1530, %v1614
    %v1616 = vpop.f32.mrb[0].mxu0
    %1617 = vmatprep.mubr.f32.mxu0 0.0
    %1618 = vmatmul.mubr.f32.gmra.mrb[0].mxu0 %v1403
    %v1619 = vpop.f32.mrb[0].mxu0
    %v1620 = vadd.f32 %v1535, %v1619
    %v1621 = vpop.f32.mrb[0].mxu0
    %1622 = vdwg.mxu0
    %s1623 = scalar_lea.vmem [#allocation12], 256
    %v1624 = vld [vmem:[%s1623] sm:$0xff]
    %v1625 = vld [vmem:[%s1623 + $0x8] sm:$0xff]
    %v1626 = vld [vmem:[%s1623 + $0x10] sm:$0xff]
    %v1627 = vld [vmem:[%s1623 + $0x18] sm:$0xff]
    %v1628 = vld [vmem:[%s1623 + $0x20] sm:$0xff]
    %v1629 = vld [vmem:[%s1623 + $0x28] sm:$0xff]
    %v1630 = vld [vmem:[%s1623 + $0x30] sm:$0xff]
    %v1631 = vld [vmem:[%s1623 + $0x38] sm:$0xff]
    %v1632 = vld [vmem:[%s1623 + $0x40] sm:$0xff]
    %v1633 = vld [vmem:[%s1623 + $0x48] sm:$0xff]
    %v1634 = vld [vmem:[%s1623 + $0x50] sm:$0xff]
    %v1635 = vld [vmem:[%s1623 + $0x58] sm:$0xff]
    %v1636 = vld [vmem:[%s1623 + $0x60] sm:$0xff]
    %v1637 = vld [vmem:[%s1623 + $0x68] sm:$0xff]
    %v1638 = vld [vmem:[%s1623 + $0x70] sm:$0xff]
    %v1639 = vld [vmem:[%s1623 + $0x78] sm:$0xff]
    %1640 = vmatprep.subr.mxu0 0.0
    %1641 = vmatpush1.msra.mxu0 %v1624
    %1642 = vmatprep.subr.mxu0 0.0
    %1643 = vmatpush1.msra.mxu0 %v1625
    %1644 = vmatprep.subr.mxu0 0.0
    %1645 = vmatpush1.msra.mxu0 %v1626
    %1646 = vmatprep.subr.mxu0 0.0
    %1647 = vmatpush1.msra.mxu0 %v1627
    %1648 = vmatprep.subr.mxu0 0.0
    %1649 = vmatpush1.msra.mxu0 %v1628
    %1650 = vmatprep.subr.mxu0 0.0
    %1651 = vmatpush1.msra.mxu0 %v1629
    %1652 = vmatprep.subr.mxu0 0.0
    %1653 = vmatpush1.msra.mxu0 %v1630
    %1654 = vmatprep.subr.mxu0 0.0
    %1655 = vmatpush1.msra.mxu0 %v1631
    %1656 = vmatprep.subr.mxu0 0.0
    %1657 = vmatpush1.msra.mxu0 %v1632
    %1658 = vmatprep.subr.mxu0 0.0
    %1659 = vmatpush1.msra.mxu0 %v1633
    %1660 = vmatprep.subr.mxu0 0.0
    %1661 = vmatpush1.msra.mxu0 %v1634
    %1662 = vmatprep.subr.mxu0 0.0
    %1663 = vmatpush1.msra.mxu0 %v1635
    %1664 = vmatprep.subr.mxu0 0.0
    %1665 = vmatpush1.msra.mxu0 %v1636
    %1666 = vmatprep.subr.mxu0 0.0
    %1667 = vmatpush1.msra.mxu0 %v1637
    %1668 = vmatprep.subr.mxu0 0.0
    %1669 = vmatpush1.msra.mxu0 %v1638
    %1670 = vmatprep.subr.mxu0 0.0
    %1671 = vmatpush1.msra.mxu0 %v1639
    %1672 = vmatprep.subr.mxu0 0.0
    %1673 = vmatpush1.msra.mxu0 0.0
    %1674 = vmatprep.subr.mxu0 0.0
    %1675 = vmatpush1.msra.mxu0 0.0
    %1676 = vmatprep.subr.mxu0 0.0
    %1677 = vmatpush1.msra.mxu0 0.0
    %1678 = vmatprep.subr.mxu0 0.0
    %1679 = vmatpush1.msra.mxu0 0.0
    %1680 = vmatprep.subr.mxu0 0.0
    %1681 = vmatpush1.msra.mxu0 0.0
    %1682 = vmatprep.subr.mxu0 0.0
    %1683 = vmatpush1.msra.mxu0 0.0
    %1684 = vmatprep.subr.mxu0 0.0
    %1685 = vmatpush1.msra.mxu0 0.0
    %1686 = vmatprep.subr.mxu0 0.0
    %1687 = vmatpush1.msra.mxu0 0.0
    %1688 = vmatprep.subr.mxu0 0.0
    %1689 = vmatpush1.msra.mxu0 0.0
    %1690 = vmatprep.subr.mxu0 0.0
    %1691 = vmatpush1.msra.mxu0 0.0
    %1692 = vmatprep.subr.mxu0 0.0
    %1693 = vmatpush1.msra.mxu0 0.0
    %1694 = vmatprep.subr.mxu0 0.0
    %1695 = vmatpush1.msra.mxu0 0.0
    %1696 = vmatprep.subr.mxu0 0.0
    %1697 = vmatpush1.msra.mxu0 0.0
    %1698 = vmatprep.subr.mxu0 0.0
    %1699 = vmatpush1.msra.mxu0 0.0
    %1700 = vmatprep.subr.mxu0 0.0
    %1701 = vmatpush1.msra.mxu0 0.0
    %1702 = vmatprep.subr.mxu0 0.0
    %1703 = vmatpush1.msra.mxu0 0.0
    %1704 = vmatprep.mubr.f32.mxu0 0.0
    %1705 = vmatmul.mubr.f32.gmra.mrb[0].mxu0 %v1387
    %v1706 = vpop.f32.mrb[0].mxu0
    %v1707 = vadd.f32 0.0, %v1706
    %v1708 = vpop.f32.mrb[0].mxu0
    %1709 = vmatprep.mubr.f32.mxu0 0.0
    %1710 = vmatmul.mubr.f32.gmra.mrb[0].mxu0 %v1388
    %v1711 = vpop.f32.mrb[0].mxu0
    %v1712 = vadd.f32 0.0, %v1711
    %v1713 = vpop.f32.mrb[0].mxu0
    %1714 = vmatprep.mubr.f32.mxu0 0.0
    %1715 = vmatmul.mubr.f32.gmra.mrb[0].mxu0 %v1389
    %v1716 = vpop.f32.mrb[0].mxu0
    %v1717 = vadd.f32 0.0, %v1716
    %v1718 = vpop.f32.mrb[0].mxu0
    %1719 = vmatprep.mubr.f32.mxu0 0.0
    %1720 = vmatmul.mubr.f32.gmra.mrb[0].mxu0 %v1390
    %v1721 = vpop.f32.mrb[0].mxu0
    %v1722 = vadd.f32 0.0, %v1721
    %v1723 = vpop.f32.mrb[0].mxu0
    %1724 = vdwg.mxu0
    %v1725 = vadd.f32 %v1605, %v1707
    %v1726 = vadd.f32 %v1610, %v1712
    %v1727 = vadd.f32 %v1615, %v1717
    %v1728 = vadd.f32 %v1620, %v1722
    %v1729 = vld [vmem:[%s10] sm:$0x1]
    %v1731 = vlaneseq
    %v1732 = vshrl.u32 %v1731, 7
    %v1733 = vsub.s32 0, %v1732
    %v1734 = vrot.slane %v1729, %v1733
    %v1736 = vadd.f32 %v1725, %v1734
    %v1737 = vadd.f32 %v1726, %v1734
    %v1738 = vadd.f32 %v1727, %v1734
    %v1739 = vadd.f32 %v1728, %v1734
    %v1740 = vmax.f32 %v1736, 0.0
    %v1741 = vmax.f32 %v1737, 0.0
    %v1742 = vmax.f32 %v1738, 0.0
    %v1743 = vmax.f32 %v1739, 0.0
    %v1744 = vadd.f32 %v1740, %v1027
    %v1745 = vadd.f32 %v1741, %v1028
    %v1746 = vadd.f32 %v1742, %v1030
    %v1747 = vadd.f32 %v1743, %v1031
    %1748 = vst [vmem:[#allocation2 + $0x8] sm:$0xff] %v1744
    %1749 = vst [vmem:[#allocation2 + $0x10] sm:$0xff] %v1745
    %1750 = vst [vmem:[#allocation2 + $0x20] sm:$0xff] %v1746
    %1751 = vst [vmem:[#allocation2 + $0x28] sm:$0xff] %v1747
    %v1752 = vld [vmem:[#allocation2] sm:$0xff]
    %v1753 = vld [vmem:[#allocation2 + $0x8] sm:$0xff]
    %v1754 = vld [vmem:[#allocation2 + $0x10] sm:$0xff]
    %v1755 = vld [vmem:[#allocation2 + $0x18] sm:$0xff]
    %v1756 = vld [vmem:[#allocation2 + $0x20] sm:$0xff]
    %v1757 = vld [vmem:[#allocation2 + $0x28] sm:$0xff]
    %v1758 = vld [vmem:[#allocation14] sm:$0xff]
    %v1759 = vld [vmem:[#allocation14 + $0x8] sm:$0xff]
    %v1760 = vld [vmem:[#allocation14 + $0x10] sm:$0xff]
    %v1761 = vld [vmem:[#allocation14 + $0x18] sm:$0xff]
    %v1762 = vld [vmem:[#allocation14 + $0x20] sm:$0xff]
    %v1763 = vld [vmem:[#allocation14 + $0x28] sm:$0xff]
    %v1764 = vld [vmem:[#allocation14 + $0x30] sm:$0xff]
    %v1765 = vld [vmem:[#allocation14 + $0x38] sm:$0xff]
    %v1766 = vld [vmem:[#allocation14 + $0x40] sm:$0xff]
    %v1767 = vld [vmem:[#allocation14 + $0x48] sm:$0xff]
    %v1768 = vld [vmem:[#allocation14 + $0x50] sm:$0xff]
    %v1769 = vld [vmem:[#allocation14 + $0x58] sm:$0xff]
    %v1770 = vld [vmem:[#allocation14 + $0x60] sm:$0xff]
    %v1771 = vld [vmem:[#allocation14 + $0x68] sm:$0xff]
    %v1772 = vld [vmem:[#allocation14 + $0x70] sm:$0xff]
    %v1773 = vld [vmem:[#allocation14 + $0x78] sm:$0xff]
    %v1780 = vrot.slane %v1752, 4
    %v1781 = vrot.slane %v1753, 4
    %v1782 = vsel %vm1038, %v1780, %v1781
    %v1783 = vrot.slane %v1754, 4
    %v1784 = vsel %vm1038, %v1781, %v1783
    %v1785 = vrot.slane %v1755, 4
    %v1786 = vrot.slane %v1756, 4
    %v1787 = vsel %vm1038, %v1785, %v1786
    %v1788 = vrot.slane %v1757, 4
    %v1789 = vsel %vm1038, %v1786, %v1788
    %s1794 = scalar_lea.vmem [#allocation14], 128
    %v1795 = vld [vmem:[%s1794] sm:$0xff]
    %v1796 = vld [vmem:[%s1794 + $0x8] sm:$0xff]
    %v1797 = vld [vmem:[%s1794 + $0x10] sm:$0xff]
    %v1798 = vld [vmem:[%s1794 + $0x18] sm:$0xff]
    %v1799 = vld [vmem:[%s1794 + $0x20] sm:$0xff]
    %v1800 = vld [vmem:[%s1794 + $0x28] sm:$0xff]
    %v1801 = vld [vmem:[%s1794 + $0x30] sm:$0xff]
    %v1802 = vld [vmem:[%s1794 + $0x38] sm:$0xff]
    %v1803 = vld [vmem:[%s1794 + $0x40] sm:$0xff]
    %v1804 = vld [vmem:[%s1794 + $0x48] sm:$0xff]
    %v1805 = vld [vmem:[%s1794 + $0x50] sm:$0xff]
    %v1806 = vld [vmem:[%s1794 + $0x58] sm:$0xff]
    %v1807 = vld [vmem:[%s1794 + $0x60] sm:$0xff]
    %v1808 = vld [vmem:[%s1794 + $0x68] sm:$0xff]
    %v1809 = vld [vmem:[%s1794 + $0x70] sm:$0xff]
    %v1810 = vld [vmem:[%s1794 + $0x78] sm:$0xff]
    %1811 = vmatprep.subr.mxu0 0.0
    %1812 = vmatpush1.msra.mxu0 %v1795
    %1813 = vmatprep.subr.mxu0 0.0
    %1814 = vmatpush1.msra.mxu0 %v1796
    %1815 = vmatprep.subr.mxu0 0.0
    %1816 = vmatpush1.msra.mxu0 %v1797
    %1817 = vmatprep.subr.mxu0 0.0
    %1818 = vmatpush1.msra.mxu0 %v1798
    %1819 = vmatprep.subr.mxu0 0.0
    %1820 = vmatpush1.msra.mxu0 %v1799
    %1821 = vmatprep.subr.mxu0 0.0
    %1822 = vmatpush1.msra.mxu0 %v1800
    %1823 = vmatprep.subr.mxu0 0.0
    %1824 = vmatpush1.msra.mxu0 %v1801
    %1825 = vmatprep.subr.mxu0 0.0
    %1826 = vmatpush1.msra.mxu0 %v1802
    %1827 = vmatprep.subr.mxu0 0.0
    %1828 = vmatpush1.msra.mxu0 %v1803
    %1829 = vmatprep.subr.mxu0 0.0
    %1830 = vmatpush1.msra.mxu0 %v1804
    %1831 = vmatprep.subr.mxu0 0.0
    %1832 = vmatpush1.msra.mxu0 %v1805
    %1833 = vmatprep.subr.mxu0 0.0
    %1834 = vmatpush1.msra.mxu0 %v1806
    %1835 = vmatprep.subr.mxu0 0.0
    %1836 = vmatpush1.msra.mxu0 %v1807
    %1837 = vmatprep.subr.mxu0 0.0
    %1838 = vmatpush1.msra.mxu0 %v1808
    %1839 = vmatprep.subr.mxu0 0.0
    %1840 = vmatpush1.msra.mxu0 %v1809
    %1841 = vmatprep.subr.mxu0 0.0
    %1842 = vmatpush1.msra.mxu0 %v1810
    %1843 = vmatprep.subr.mxu0 0.0
    %1844 = vmatpush1.msra.mxu0 0.0
    %1845 = vmatprep.subr.mxu0 0.0
    %1846 = vmatpush1.msra.mxu0 0.0
    %1847 = vmatprep.subr.mxu0 0.0
    %1848 = vmatpush1.msra.mxu0 0.0
    %1849 = vmatprep.subr.mxu0 0.0
    %1850 = vmatpush1.msra.mxu0 0.0
    %1851 = vmatprep.subr.mxu0 0.0
    %1852 = vmatpush1.msra.mxu0 0.0
    %1853 = vmatprep.subr.mxu0 0.0
    %1854 = vmatpush1.msra.mxu0 0.0
    %1855 = vmatprep.subr.mxu0 0.0
    %1856 = vmatpush1.msra.mxu0 0.0
    %1857 = vmatprep.subr.mxu0 0.0
    %1858 = vmatpush1.msra.mxu0 0.0
    %1859 = vmatprep.subr.mxu0 0.0
    %1860 = vmatpush1.msra.mxu0 0.0
    %1861 = vmatprep.subr.mxu0 0.0
    %1862 = vmatpush1.msra.mxu0 0.0
    %1863 = vmatprep.subr.mxu0 0.0
    %1864 = vmatpush1.msra.mxu0 0.0
    %1865 = vmatprep.subr.mxu0 0.0
    %1866 = vmatpush1.msra.mxu0 0.0
    %1867 = vmatprep.subr.mxu0 0.0
    %1868 = vmatpush1.msra.mxu0 0.0
    %1869 = vmatprep.subr.mxu0 0.0
    %1870 = vmatpush1.msra.mxu0 0.0
    %1871 = vmatprep.subr.mxu0 0.0
    %1872 = vmatpush1.msra.mxu0 0.0
    %1873 = vmatprep.subr.mxu0 0.0
    %1874 = vmatpush1.msra.mxu0 0.0
    %1875 = vmatprep.mubr.f32.mxu0 0.0
    %1876 = vmatmul.mubr.f32.gmra.mrb[0].mxu0 %v1782
    %v1877 = vpop.f32.mrb[0].mxu0
    %v1878 = vadd.f32 0.0, %v1877
    %v1879 = vpop.f32.mrb[0].mxu0
    %1880 = vmatprep.mubr.f32.mxu0 0.0
    %1881 = vmatmul.mubr.f32.gmra.mrb[0].mxu0 %v1784
    %v1882 = vpop.f32.mrb[0].mxu0
    %v1883 = vadd.f32 0.0, %v1882
    %v1884 = vpop.f32.mrb[0].mxu0
    %1885 = vmatprep.mubr.f32.mxu0 0.0
    %1886 = vmatmul.mubr.f32.gmra.mrb[0].mxu0 %v1787
    %v1887 = vpop.f32.mrb[0].mxu0
    %v1888 = vadd.f32 0.0, %v1887
    %v1889 = vpop.f32.mrb[0].mxu0
    %1890 = vmatprep.mubr.f32.mxu0 0.0
    %1891 = vmatmul.mubr.f32.gmra.mrb[0].mxu0 %v1789
    %v1892 = vpop.f32.mrb[0].mxu0
    %v1893 = vadd.f32 0.0, %v1892
    %v1894 = vpop.f32.mrb[0].mxu0
    %1895 = vdwg.mxu0
    %1896 = vmatprep.subr.mxu0 0.0
    %1897 = vmatpush1.msra.mxu0 %v1758
    %1898 = vmatprep.subr.mxu0 0.0
    %1899 = vmatpush1.msra.mxu0 %v1759
    %1900 = vmatprep.subr.mxu0 0.0
    %1901 = vmatpush1.msra.mxu0 %v1760
    %1902 = vmatprep.subr.mxu0 0.0
    %1903 = vmatpush1.msra.mxu0 %v1761
    %1904 = vmatprep.subr.mxu0 0.0
    %1905 = vmatpush1.msra.mxu0 %v1762
    %1906 = vmatprep.subr.mxu0 0.0
    %1907 = vmatpush1.msra.mxu0 %v1763
    %1908 = vmatprep.subr.mxu0 0.0
    %1909 = vmatpush1.msra.mxu0 %v1764
    %1910 = vmatprep.subr.mxu0 0.0
    %1911 = vmatpush1.msra.mxu0 %v1765
    %1912 = vmatprep.subr.mxu0 0.0
    %1913 = vmatpush1.msra.mxu0 %v1766
    %1914 = vmatprep.subr.mxu0 0.0
    %1915 = vmatpush1.msra.mxu0 %v1767
    %1916 = vmatprep.subr.mxu0 0.0
    %1917 = vmatpush1.msra.mxu0 %v1768
    %1918 = vmatprep.subr.mxu0 0.0
    %1919 = vmatpush1.msra.mxu0 %v1769
    %1920 = vmatprep.subr.mxu0 0.0
    %1921 = vmatpush1.msra.mxu0 %v1770
    %1922 = vmatprep.subr.mxu0 0.0
    %1923 = vmatpush1.msra.mxu0 %v1771
    %1924 = vmatprep.subr.mxu0 0.0
    %1925 = vmatpush1.msra.mxu0 %v1772
    %1926 = vmatprep.subr.mxu0 0.0
    %1927 = vmatpush1.msra.mxu0 %v1773
    %1928 = vmatprep.subr.mxu0 0.0
    %1929 = vmatpush1.msra.mxu0 0.0
    %1930 = vmatprep.subr.mxu0 0.0
    %1931 = vmatpush1.msra.mxu0 0.0
    %1932 = vmatprep.subr.mxu0 0.0
    %1933 = vmatpush1.msra.mxu0 0.0
    %1934 = vmatprep.subr.mxu0 0.0
    %1935 = vmatpush1.msra.mxu0 0.0
    %1936 = vmatprep.subr.mxu0 0.0
    %1937 = vmatpush1.msra.mxu0 0.0
    %1938 = vmatprep.subr.mxu0 0.0
    %1939 = vmatpush1.msra.mxu0 0.0
    %1940 = vmatprep.subr.mxu0 0.0
    %1941 = vmatpush1.msra.mxu0 0.0
    %1942 = vmatprep.subr.mxu0 0.0
    %1943 = vmatpush1.msra.mxu0 0.0
    %1944 = vmatprep.subr.mxu0 0.0
    %1945 = vmatpush1.msra.mxu0 0.0
    %1946 = vmatprep.subr.mxu0 0.0
    %1947 = vmatpush1.msra.mxu0 0.0
    %1948 = vmatprep.subr.mxu0 0.0
    %1949 = vmatpush1.msra.mxu0 0.0
    %1950 = vmatprep.subr.mxu0 0.0
    %1951 = vmatpush1.msra.mxu0 0.0
    %1952 = vmatprep.subr.mxu0 0.0
    %1953 = vmatpush1.msra.mxu0 0.0
    %1954 = vmatprep.subr.mxu0 0.0
    %1955 = vmatpush1.msra.mxu0 0.0
    %1956 = vmatprep.subr.mxu0 0.0
    %1957 = vmatpush1.msra.mxu0 0.0
    %1958 = vmatprep.subr.mxu0 0.0
    %1959 = vmatpush1.msra.mxu0 0.0
    %1960 = vmatprep.mubr.f32.mxu0 0.0
    %1961 = vmatmul.mubr.f32.gmra.mrb[0].mxu0 %v1752
    %v1962 = vpop.f32.mrb[0].mxu0
    %v1963 = vadd.f32 %v1878, %v1962
    %v1964 = vpop.f32.mrb[0].mxu0
    %1965 = vmatprep.mubr.f32.mxu0 0.0
    %1966 = vmatmul.mubr.f32.gmra.mrb[0].mxu0 %v1753
    %v1967 = vpop.f32.mrb[0].mxu0
    %v1968 = vadd.f32 %v1883, %v1967
    %v1969 = vpop.f32.mrb[0].mxu0
    %1970 = vmatprep.mubr.f32.mxu0 0.0
    %1971 = vmatmul.mubr.f32.gmra.mrb[0].mxu0 %v1755
    %v1972 = vpop.f32.mrb[0].mxu0
    %v1973 = vadd.f32 %v1888, %v1972
    %v1974 = vpop.f32.mrb[0].mxu0
    %1975 = vmatprep.mubr.f32.mxu0 0.0
    %1976 = vmatmul.mubr.f32.gmra.mrb[0].mxu0 %v1756
    %v1977 = vpop.f32.mrb[0].mxu0
    %v1978 = vadd.f32 %v1893, %v1977
    %v1979 = vpop.f32.mrb[0].mxu0
    %1980 = vdwg.mxu0
    %s1981 = scalar_lea.vmem [#allocation14], 256
    %v1982 = vld [vmem:[%s1981] sm:$0xff]
    %v1983 = vld [vmem:[%s1981 + $0x8] sm:$0xff]
    %v1984 = vld [vmem:[%s1981 + $0x10] sm:$0xff]
    %v1985 = vld [vmem:[%s1981 + $0x18] sm:$0xff]
    %v1986 = vld [vmem:[%s1981 + $0x20] sm:$0xff]
    %v1987 = vld [vmem:[%s1981 + $0x28] sm:$0xff]
    %v1988 = vld [vmem:[%s1981 + $0x30] sm:$0xff]
    %v1989 = vld [vmem:[%s1981 + $0x38] sm:$0xff]
    %v1990 = vld [vmem:[%s1981 + $0x40] sm:$0xff]
    %v1991 = vld [vmem:[%s1981 + $0x48] sm:$0xff]
    %v1992 = vld [vmem:[%s1981 + $0x50] sm:$0xff]
    %v1993 = vld [vmem:[%s1981 + $0x58] sm:$0xff]
    %v1994 = vld [vmem:[%s1981 + $0x60] sm:$0xff]
    %v1995 = vld [vmem:[%s1981 + $0x68] sm:$0xff]
    %v1996 = vld [vmem:[%s1981 + $0x70] sm:$0xff]
    %v1997 = vld [vmem:[%s1981 + $0x78] sm:$0xff]
    %1998 = vmatprep.subr.mxu0 0.0
    %1999 = vmatpush1.msra.mxu0 %v1982
    %2000 = vmatprep.subr.mxu0 0.0
    %2001 = vmatpush1.msra.mxu0 %v1983
    %2002 = vmatprep.subr.mxu0 0.0
    %2003 = vmatpush1.msra.mxu0 %v1984
    %2004 = vmatprep.subr.mxu0 0.0
    %2005 = vmatpush1.msra.mxu0 %v1985
    %2006 = vmatprep.subr.mxu0 0.0
    %2007 = vmatpush1.msra.mxu0 %v1986
    %2008 = vmatprep.subr.mxu0 0.0
    %2009 = vmatpush1.msra.mxu0 %v1987
    %2010 = vmatprep.subr.mxu0 0.0
    %2011 = vmatpush1.msra.mxu0 %v1988
    %2012 = vmatprep.subr.mxu0 0.0
    %2013 = vmatpush1.msra.mxu0 %v1989
    %2014 = vmatprep.subr.mxu0 0.0
    %2015 = vmatpush1.msra.mxu0 %v1990
    %2016 = vmatprep.subr.mxu0 0.0
    %2017 = vmatpush1.msra.mxu0 %v1991
    %2018 = vmatprep.subr.mxu0 0.0
    %2019 = vmatpush1.msra.mxu0 %v1992
    %2020 = vmatprep.subr.mxu0 0.0
    %2021 = vmatpush1.msra.mxu0 %v1993
    %2022 = vmatprep.subr.mxu0 0.0
    %2023 = vmatpush1.msra.mxu0 %v1994
    %2024 = vmatprep.subr.mxu0 0.0
    %2025 = vmatpush1.msra.mxu0 %v1995
    %2026 = vmatprep.subr.mxu0 0.0
    %2027 = vmatpush1.msra.mxu0 %v1996
    %2028 = vmatprep.subr.mxu0 0.0
    %2029 = vmatpush1.msra.mxu0 %v1997
    %2030 = vmatprep.subr.mxu0 0.0
    %2031 = vmatpush1.msra.mxu0 0.0
    %2032 = vmatprep.subr.mxu0 0.0
    %2033 = vmatpush1.msra.mxu0 0.0
    %2034 = vmatprep.subr.mxu0 0.0
    %2035 = vmatpush1.msra.mxu0 0.0
    %2036 = vmatprep.subr.mxu0 0.0
    %2037 = vmatpush1.msra.mxu0 0.0
    %2038 = vmatprep.subr.mxu0 0.0
    %2039 = vmatpush1.msra.mxu0 0.0
    %2040 = vmatprep.subr.mxu0 0.0
    %2041 = vmatpush1.msra.mxu0 0.0
    %2042 = vmatprep.subr.mxu0 0.0
    %2043 = vmatpush1.msra.mxu0 0.0
    %2044 = vmatprep.subr.mxu0 0.0
    %2045 = vmatpush1.msra.mxu0 0.0
    %2046 = vmatprep.subr.mxu0 0.0
    %2047 = vmatpush1.msra.mxu0 0.0
    %2048 = vmatprep.subr.mxu0 0.0
    %2049 = vmatpush1.msra.mxu0 0.0
    %2050 = vmatprep.subr.mxu0 0.0
    %2051 = vmatpush1.msra.mxu0 0.0
    %2052 = vmatprep.subr.mxu0 0.0
    %2053 = vmatpush1.msra.mxu0 0.0
    %2054 = vmatprep.subr.mxu0 0.0
    %2055 = vmatpush1.msra.mxu0 0.0
    %2056 = vmatprep.subr.mxu0 0.0
    %2057 = vmatpush1.msra.mxu0 0.0
    %2058 = vmatprep.subr.mxu0 0.0
    %2059 = vmatpush1.msra.mxu0 0.0
    %2060 = vmatprep.subr.mxu0 0.0
    %2061 = vmatpush1.msra.mxu0 0.0
    %2062 = vmatprep.mubr.f32.mxu0 0.0
    %2063 = vmatmul.mubr.f32.gmra.mrb[0].mxu0 %v1753
    %v2064 = vpop.f32.mrb[0].mxu0
    %v2065 = vadd.f32 0.0, %v2064
    %v2066 = vpop.f32.mrb[0].mxu0
    %2067 = vmatprep.mubr.f32.mxu0 0.0
    %2068 = vmatmul.mubr.f32.gmra.mrb[0].mxu0 %v1754
    %v2069 = vpop.f32.mrb[0].mxu0
    %v2070 = vadd.f32 0.0, %v2069
    %v2071 = vpop.f32.mrb[0].mxu0
    %2072 = vmatprep.mubr.f32.mxu0 0.0
    %2073 = vmatmul.mubr.f32.gmra.mrb[0].mxu0 %v1756
    %v2074 = vpop.f32.mrb[0].mxu0
    %v2075 = vadd.f32 0.0, %v2074
    %v2076 = vpop.f32.mrb[0].mxu0
    %2077 = vmatprep.mubr.f32.mxu0 0.0
    %2078 = vmatmul.mubr.f32.gmra.mrb[0].mxu0 %v1757
    %v2079 = vpop.f32.mrb[0].mxu0
    %v2080 = vadd.f32 0.0, %v2079
    %v2081 = vpop.f32.mrb[0].mxu0
    %2082 = vdwg.mxu0
    %v2083 = vadd.f32 %v1963, %v2065
    %v2084 = vadd.f32 %v1968, %v2070
    %v2085 = vadd.f32 %v1973, %v2075
    %v2086 = vadd.f32 %v1978, %v2080
    %v2087 = vld [vmem:[%s12] sm:$0x1]
    %v2089 = vlaneseq
    %v2090 = vshrl.u32 %v2089, 7
    %v2091 = vsub.s32 0, %v2090
    %v2092 = vrot.slane %v2087, %v2091
    %v2094 = vadd.f32 %v2083, %v2092
    %v2095 = vadd.f32 %v2084, %v2092
    %v2096 = vadd.f32 %v2085, %v2092
    %v2097 = vadd.f32 %v2086, %v2092
    %v2098 = vmax.f32 %v2094, 0.0
    %v2099 = vmax.f32 %v2095, 0.0
    %v2100 = vmax.f32 %v2096, 0.0
    %v2101 = vmax.f32 %v2097, 0.0
    %v2102 = vld [vmem:[#allocation15] sm:$0xff]
    %v2103 = vld [vmem:[#allocation15 + $0x8] sm:$0xff]
    %v2104 = vld [vmem:[#allocation15 + $0x10] sm:$0xff]
    %v2105 = vld [vmem:[#allocation15 + $0x18] sm:$0xff]
    %v2106 = vld [vmem:[#allocation15 + $0x20] sm:$0xff]
    %v2107 = vld [vmem:[#allocation15 + $0x28] sm:$0xff]
    %v2108 = vld [vmem:[#allocation15 + $0x30] sm:$0xff]
    %v2109 = vld [vmem:[#allocation15 + $0x38] sm:$0xff]
    %v2110 = vld [vmem:[#allocation15 + $0x40] sm:$0xff]
    %v2111 = vld [vmem:[#allocation15 + $0x48] sm:$0xff]
    %v2112 = vld [vmem:[#allocation15 + $0x50] sm:$0xff]
    %v2113 = vld [vmem:[#allocation15 + $0x58] sm:$0xff]
    %v2114 = vld [vmem:[#allocation15 + $0x60] sm:$0xff]
    %v2115 = vld [vmem:[#allocation15 + $0x68] sm:$0xff]
    %v2116 = vld [vmem:[#allocation15 + $0x70] sm:$0xff]
    %v2117 = vld [vmem:[#allocation15 + $0x78] sm:$0xff]
    %v2122 = vrot.slane %v2098, 4
    %v2123 = vsel %vm1038, %v1395, %v2122
    %v2124 = vrot.slane %v2099, 4
    %v2125 = vsel %vm1038, %v2122, %v2124
    %v2126 = vrot.slane %v2100, 4
    %v2127 = vsel %vm1038, %v1395, %v2126
    %v2128 = vrot.slane %v2101, 4
    %v2129 = vsel %vm1038, %v2126, %v2128
    %s2134 = scalar_lea.vmem [#allocation15], 128
    %v2135 = vld [vmem:[%s2134] sm:$0xff]
    %v2136 = vld [vmem:[%s2134 + $0x8] sm:$0xff]
    %v2137 = vld [vmem:[%s2134 + $0x10] sm:$0xff]
    %v2138 = vld [vmem:[%s2134 + $0x18] sm:$0xff]
    %v2139 = vld [vmem:[%s2134 + $0x20] sm:$0xff]
    %v2140 = vld [vmem:[%s2134 + $0x28] sm:$0xff]
    %v2141 = vld [vmem:[%s2134 + $0x30] sm:$0xff]
    %v2142 = vld [vmem:[%s2134 + $0x38] sm:$0xff]
    %v2143 = vld [vmem:[%s2134 + $0x40] sm:$0xff]
    %v2144 = vld [vmem:[%s2134 + $0x48] sm:$0xff]
    %v2145 = vld [vmem:[%s2134 + $0x50] sm:$0xff]
    %v2146 = vld [vmem:[%s2134 + $0x58] sm:$0xff]
    %v2147 = vld [vmem:[%s2134 + $0x60] sm:$0xff]
    %v2148 = vld [vmem:[%s2134 + $0x68] sm:$0xff]
    %v2149 = vld [vmem:[%s2134 + $0x70] sm:$0xff]
    %v2150 = vld [vmem:[%s2134 + $0x78] sm:$0xff]
    %2151 = vmatprep.subr.mxu0 0.0
    %2152 = vmatpush1.msra.mxu0 %v2135
    %2153 = vmatprep.subr.mxu0 0.0
    %2154 = vmatpush1.msra.mxu0 %v2136
    %2155 = vmatprep.subr.mxu0 0.0
    %2156 = vmatpush1.msra.mxu0 %v2137
    %2157 = vmatprep.subr.mxu0 0.0
    %2158 = vmatpush1.msra.mxu0 %v2138
    %2159 = vmatprep.subr.mxu0 0.0
    %2160 = vmatpush1.msra.mxu0 %v2139
    %2161 = vmatprep.subr.mxu0 0.0
    %2162 = vmatpush1.msra.mxu0 %v2140
    %2163 = vmatprep.subr.mxu0 0.0
    %2164 = vmatpush1.msra.mxu0 %v2141
    %2165 = vmatprep.subr.mxu0 0.0
    %2166 = vmatpush1.msra.mxu0 %v2142
    %2167 = vmatprep.subr.mxu0 0.0
    %2168 = vmatpush1.msra.mxu0 %v2143
    %2169 = vmatprep.subr.mxu0 0.0
    %2170 = vmatpush1.msra.mxu0 %v2144
    %2171 = vmatprep.subr.mxu0 0.0
    %2172 = vmatpush1.msra.mxu0 %v2145
    %2173 = vmatprep.subr.mxu0 0.0
    %2174 = vmatpush1.msra.mxu0 %v2146
    %2175 = vmatprep.subr.mxu0 0.0
    %2176 = vmatpush1.msra.mxu0 %v2147
    %2177 = vmatprep.subr.mxu0 0.0
    %2178 = vmatpush1.msra.mxu0 %v2148
    %2179 = vmatprep.subr.mxu0 0.0
    %2180 = vmatpush1.msra.mxu0 %v2149
    %2181 = vmatprep.subr.mxu0 0.0
    %2182 = vmatpush1.msra.mxu0 %v2150
    %2183 = vmatprep.subr.mxu0 0.0
    %2184 = vmatpush1.msra.mxu0 0.0
    %2185 = vmatprep.subr.mxu0 0.0
    %2186 = vmatpush1.msra.mxu0 0.0
    %2187 = vmatprep.subr.mxu0 0.0
    %2188 = vmatpush1.msra.mxu0 0.0
    %2189 = vmatprep.subr.mxu0 0.0
    %2190 = vmatpush1.msra.mxu0 0.0
    %2191 = vmatprep.subr.mxu0 0.0
    %2192 = vmatpush1.msra.mxu0 0.0
    %2193 = vmatprep.subr.mxu0 0.0
    %2194 = vmatpush1.msra.mxu0 0.0
    %2195 = vmatprep.subr.mxu0 0.0
    %2196 = vmatpush1.msra.mxu0 0.0
    %2197 = vmatprep.subr.mxu0 0.0
    %2198 = vmatpush1.msra.mxu0 0.0
    %2199 = vmatprep.subr.mxu0 0.0
    %2200 = vmatpush1.msra.mxu0 0.0
    %2201 = vmatprep.subr.mxu0 0.0
    %2202 = vmatpush1.msra.mxu0 0.0
    %2203 = vmatprep.subr.mxu0 0.0
    %2204 = vmatpush1.msra.mxu0 0.0
    %2205 = vmatprep.subr.mxu0 0.0
    %2206 = vmatpush1.msra.mxu0 0.0
    %2207 = vmatprep.subr.mxu0 0.0
    %2208 = vmatpush1.msra.mxu0 0.0
    %2209 = vmatprep.subr.mxu0 0.0
    %2210 = vmatpush1.msra.mxu0 0.0
    %2211 = vmatprep.subr.mxu0 0.0
    %2212 = vmatpush1.msra.mxu0 0.0
    %2213 = vmatprep.subr.mxu0 0.0
    %2214 = vmatpush1.msra.mxu0 0.0
    %2215 = vmatprep.mubr.f32.mxu0 0.0
    %2216 = vmatmul.mubr.f32.gmra.mrb[0].mxu0 %v2123
    %v2217 = vpop.f32.mrb[0].mxu0
    %v2218 = vadd.f32 0.0, %v2217
    %v2219 = vpop.f32.mrb[0].mxu0
    %2220 = vmatprep.mubr.f32.mxu0 0.0
    %2221 = vmatmul.mubr.f32.gmra.mrb[0].mxu0 %v2125
    %v2222 = vpop.f32.mrb[0].mxu0
    %v2223 = vadd.f32 0.0, %v2222
    %v2224 = vpop.f32.mrb[0].mxu0
    %2225 = vmatprep.mubr.f32.mxu0 0.0
    %2226 = vmatmul.mubr.f32.gmra.mrb[0].mxu0 %v2127
    %v2227 = vpop.f32.mrb[0].mxu0
    %v2228 = vadd.f32 0.0, %v2227
    %v2229 = vpop.f32.mrb[0].mxu0
    %2230 = vmatprep.mubr.f32.mxu0 0.0
    %2231 = vmatmul.mubr.f32.gmra.mrb[0].mxu0 %v2129
    %v2232 = vpop.f32.mrb[0].mxu0
    %v2233 = vadd.f32 0.0, %v2232
    %v2234 = vpop.f32.mrb[0].mxu0
    %2235 = vdwg.mxu0
    %2236 = vmatprep.subr.mxu0 0.0
    %2237 = vmatpush1.msra.mxu0 %v2102
    %2238 = vmatprep.subr.mxu0 0.0
    %2239 = vmatpush1.msra.mxu0 %v2103
    %2240 = vmatprep.subr.mxu0 0.0
    %2241 = vmatpush1.msra.mxu0 %v2104
    %2242 = vmatprep.subr.mxu0 0.0
    %2243 = vmatpush1.msra.mxu0 %v2105
    %2244 = vmatprep.subr.mxu0 0.0
    %2245 = vmatpush1.msra.mxu0 %v2106
    %2246 = vmatprep.subr.mxu0 0.0
    %2247 = vmatpush1.msra.mxu0 %v2107
    %2248 = vmatprep.subr.mxu0 0.0
    %2249 = vmatpush1.msra.mxu0 %v2108
    %2250 = vmatprep.subr.mxu0 0.0
    %2251 = vmatpush1.msra.mxu0 %v2109
    %2252 = vmatprep.subr.mxu0 0.0
    %2253 = vmatpush1.msra.mxu0 %v2110
    %2254 = vmatprep.subr.mxu0 0.0
    %2255 = vmatpush1.msra.mxu0 %v2111
    %2256 = vmatprep.subr.mxu0 0.0
    %2257 = vmatpush1.msra.mxu0 %v2112
    %2258 = vmatprep.subr.mxu0 0.0
    %2259 = vmatpush1.msra.mxu0 %v2113
    %2260 = vmatprep.subr.mxu0 0.0
    %2261 = vmatpush1.msra.mxu0 %v2114
    %2262 = vmatprep.subr.mxu0 0.0
    %2263 = vmatpush1.msra.mxu0 %v2115
    %2264 = vmatprep.subr.mxu0 0.0
    %2265 = vmatpush1.msra.mxu0 %v2116
    %2266 = vmatprep.subr.mxu0 0.0
    %2267 = vmatpush1.msra.mxu0 %v2117
    %2268 = vmatprep.subr.mxu0 0.0
    %2269 = vmatpush1.msra.mxu0 0.0
    %2270 = vmatprep.subr.mxu0 0.0
    %2271 = vmatpush1.msra.mxu0 0.0
    %2272 = vmatprep.subr.mxu0 0.0
    %2273 = vmatpush1.msra.mxu0 0.0
    %2274 = vmatprep.subr.mxu0 0.0
    %2275 = vmatpush1.msra.mxu0 0.0
    %2276 = vmatprep.subr.mxu0 0.0
    %2277 = vmatpush1.msra.mxu0 0.0
    %2278 = vmatprep.subr.mxu0 0.0
    %2279 = vmatpush1.msra.mxu0 0.0
    %2280 = vmatprep.subr.mxu0 0.0
    %2281 = vmatpush1.msra.mxu0 0.0
    %2282 = vmatprep.subr.mxu0 0.0
    %2283 = vmatpush1.msra.mxu0 0.0
    %2284 = vmatprep.subr.mxu0 0.0
    %2285 = vmatpush1.msra.mxu0 0.0
    %2286 = vmatprep.subr.mxu0 0.0
    %2287 = vmatpush1.msra.mxu0 0.0
    %2288 = vmatprep.subr.mxu0 0.0
    %2289 = vmatpush1.msra.mxu0 0.0
    %2290 = vmatprep.subr.mxu0 0.0
    %2291 = vmatpush1.msra.mxu0 0.0
    %2292 = vmatprep.subr.mxu0 0.0
    %2293 = vmatpush1.msra.mxu0 0.0
    %2294 = vmatprep.subr.mxu0 0.0
    %2295 = vmatpush1.msra.mxu0 0.0
    %2296 = vmatprep.subr.mxu0 0.0
    %2297 = vmatpush1.msra.mxu0 0.0
    %2298 = vmatprep.subr.mxu0 0.0
    %2299 = vmatpush1.msra.mxu0 0.0
    %2300 = vmatprep.mubr.f32.mxu0 0.0
    %2301 = vmatmul.mubr.f32.gmra.mrb[0].mxu0 0.0
    %v2302 = vpop.f32.mrb[0].mxu0
    %v2303 = vadd.f32 %v2218, %v2302
    %v2304 = vpop.f32.mrb[0].mxu0
    %2305 = vmatprep.mubr.f32.mxu0 0.0
    %2306 = vmatmul.mubr.f32.gmra.mrb[0].mxu0 %v2098
    %v2307 = vpop.f32.mrb[0].mxu0
    %v2308 = vadd.f32 %v2223, %v2307
    %v2309 = vpop.f32.mrb[0].mxu0
    %2310 = vmatprep.mubr.f32.mxu0 0.0
    %2311 = vmatmul.mubr.f32.gmra.mrb[0].mxu0 0.0
    %v2312 = vpop.f32.mrb[0].mxu0
    %v2313 = vadd.f32 %v2228, %v2312
    %v2314 = vpop.f32.mrb[0].mxu0
    %2315 = vmatprep.mubr.f32.mxu0 0.0
    %2316 = vmatmul.mubr.f32.gmra.mrb[0].mxu0 %v2100
    %v2317 = vpop.f32.mrb[0].mxu0
    %v2318 = vadd.f32 %v2233, %v2317
    %v2319 = vpop.f32.mrb[0].mxu0
    %2320 = vdwg.mxu0
    %s2321 = scalar_lea.vmem [#allocation15], 256
    %v2322 = vld [vmem:[%s2321] sm:$0xff]
    %v2323 = vld [vmem:[%s2321 + $0x8] sm:$0xff]
    %v2324 = vld [vmem:[%s2321 + $0x10] sm:$0xff]
    %v2325 = vld [vmem:[%s2321 + $0x18] sm:$0xff]
    %v2326 = vld [vmem:[%s2321 + $0x20] sm:$0xff]
    %v2327 = vld [vmem:[%s2321 + $0x28] sm:$0xff]
    %v2328 = vld [vmem:[%s2321 + $0x30] sm:$0xff]
    %v2329 = vld [vmem:[%s2321 + $0x38] sm:$0xff]
    %v2330 = vld [vmem:[%s2321 + $0x40] sm:$0xff]
    %v2331 = vld [vmem:[%s2321 + $0x48] sm:$0xff]
    %v2332 = vld [vmem:[%s2321 + $0x50] sm:$0xff]
    %v2333 = vld [vmem:[%s2321 + $0x58] sm:$0xff]
    %v2334 = vld [vmem:[%s2321 + $0x60] sm:$0xff]
    %v2335 = vld [vmem:[%s2321 + $0x68] sm:$0xff]
    %v2336 = vld [vmem:[%s2321 + $0x70] sm:$0xff]
    %v2337 = vld [vmem:[%s2321 + $0x78] sm:$0xff]
    %2338 = vmatprep.subr.mxu0 0.0
    %2339 = vmatpush1.msra.mxu0 %v2322
    %2340 = vmatprep.subr.mxu0 0.0
    %2341 = vmatpush1.msra.mxu0 %v2323
    %2342 = vmatprep.subr.mxu0 0.0
    %2343 = vmatpush1.msra.mxu0 %v2324
    %2344 = vmatprep.subr.mxu0 0.0
    %2345 = vmatpush1.msra.mxu0 %v2325
    %2346 = vmatprep.subr.mxu0 0.0
    %2347 = vmatpush1.msra.mxu0 %v2326
    %2348 = vmatprep.subr.mxu0 0.0
    %2349 = vmatpush1.msra.mxu0 %v2327
    %2350 = vmatprep.subr.mxu0 0.0
    %2351 = vmatpush1.msra.mxu0 %v2328
    %2352 = vmatprep.subr.mxu0 0.0
    %2353 = vmatpush1.msra.mxu0 %v2329
    %2354 = vmatprep.subr.mxu0 0.0
    %2355 = vmatpush1.msra.mxu0 %v2330
    %2356 = vmatprep.subr.mxu0 0.0
    %2357 = vmatpush1.msra.mxu0 %v2331
    %2358 = vmatprep.subr.mxu0 0.0
    %2359 = vmatpush1.msra.mxu0 %v2332
    %2360 = vmatprep.subr.mxu0 0.0
    %2361 = vmatpush1.msra.mxu0 %v2333
    %2362 = vmatprep.subr.mxu0 0.0
    %2363 = vmatpush1.msra.mxu0 %v2334
    %2364 = vmatprep.subr.mxu0 0.0
    %2365 = vmatpush1.msra.mxu0 %v2335
    %2366 = vmatprep.subr.mxu0 0.0
    %2367 = vmatpush1.msra.mxu0 %v2336
    %2368 = vmatprep.subr.mxu0 0.0
    %2369 = vmatpush1.msra.mxu0 %v2337
    %2370 = vmatprep.subr.mxu0 0.0
    %2371 = vmatpush1.msra.mxu0 0.0
    %2372 = vmatprep.subr.mxu0 0.0
    %2373 = vmatpush1.msra.mxu0 0.0
    %2374 = vmatprep.subr.mxu0 0.0
    %2375 = vmatpush1.msra.mxu0 0.0
    %2376 = vmatprep.subr.mxu0 0.0
    %2377 = vmatpush1.msra.mxu0 0.0
    %2378 = vmatprep.subr.mxu0 0.0
    %2379 = vmatpush1.msra.mxu0 0.0
    %2380 = vmatprep.subr.mxu0 0.0
    %2381 = vmatpush1.msra.mxu0 0.0
    %2382 = vmatprep.subr.mxu0 0.0
    %2383 = vmatpush1.msra.mxu0 0.0
    %2384 = vmatprep.subr.mxu0 0.0
    %2385 = vmatpush1.msra.mxu0 0.0
    %2386 = vmatprep.subr.mxu0 0.0
    %2387 = vmatpush1.msra.mxu0 0.0
    %2388 = vmatprep.subr.mxu0 0.0
    %2389 = vmatpush1.msra.mxu0 0.0
    %2390 = vmatprep.subr.mxu0 0.0
    %2391 = vmatpush1.msra.mxu0 0.0
    %2392 = vmatprep.subr.mxu0 0.0
    %2393 = vmatpush1.msra.mxu0 0.0
    %2394 = vmatprep.subr.mxu0 0.0
    %2395 = vmatpush1.msra.mxu0 0.0
    %2396 = vmatprep.subr.mxu0 0.0
    %2397 = vmatpush1.msra.mxu0 0.0
    %2398 = vmatprep.subr.mxu0 0.0
    %2399 = vmatpush1.msra.mxu0 0.0
    %2400 = vmatprep.subr.mxu0 0.0
    %2401 = vmatpush1.msra.mxu0 0.0
    %2402 = vmatprep.mubr.f32.mxu0 0.0
    %2403 = vmatmul.mubr.f32.gmra.mrb[0].mxu0 %v2098
    %v2404 = vpop.f32.mrb[0].mxu0
    %v2405 = vadd.f32 0.0, %v2404
    %v2406 = vpop.f32.mrb[0].mxu0
    %2407 = vmatprep.mubr.f32.mxu0 0.0
    %2408 = vmatmul.mubr.f32.gmra.mrb[0].mxu0 %v2099
    %v2409 = vpop.f32.mrb[0].mxu0
    %v2410 = vadd.f32 0.0, %v2409
    %v2411 = vpop.f32.mrb[0].mxu0
    %2412 = vmatprep.mubr.f32.mxu0 0.0
    %2413 = vmatmul.mubr.f32.gmra.mrb[0].mxu0 %v2100
    %v2414 = vpop.f32.mrb[0].mxu0
    %v2415 = vadd.f32 0.0, %v2414
    %v2416 = vpop.f32.mrb[0].mxu0
    %2417 = vmatprep.mubr.f32.mxu0 0.0
    %2418 = vmatmul.mubr.f32.gmra.mrb[0].mxu0 %v2101
    %v2419 = vpop.f32.mrb[0].mxu0
    %v2420 = vadd.f32 0.0, %v2419
    %v2421 = vpop.f32.mrb[0].mxu0
    %2422 = vdwg.mxu0
    %v2423 = vadd.f32 %v2303, %v2405
    %v2424 = vadd.f32 %v2308, %v2410
    %v2425 = vadd.f32 %v2313, %v2415
    %v2426 = vadd.f32 %v2318, %v2420
    %v2427 = vld [vmem:[%s14] sm:$0x1]
    %v2429 = vlaneseq
    %v2430 = vshrl.u32 %v2429, 7
    %v2431 = vsub.s32 0, %v2430
    %v2432 = vrot.slane %v2427, %v2431
    %v2434 = vadd.f32 %v2423, %v2432
    %v2435 = vadd.f32 %v2424, %v2432
    %v2436 = vadd.f32 %v2425, %v2432
    %v2437 = vadd.f32 %v2426, %v2432
    %v2438 = vld [vmem:[#allocation17] sm:$0xff]
    %v2439 = vld [vmem:[#allocation17 + $0x8] sm:$0xff]
    %v2440 = vld [vmem:[#allocation17 + $0x10] sm:$0xff]
    %v2441 = vld [vmem:[#allocation17 + $0x18] sm:$0xff]
    %v2442 = vld [vmem:[#allocation17 + $0x20] sm:$0xff]
    %v2443 = vld [vmem:[#allocation17 + $0x28] sm:$0xff]
    %v2444 = vld [vmem:[#allocation17 + $0x30] sm:$0xff]
    %v2445 = vld [vmem:[#allocation17 + $0x38] sm:$0xff]
    %v2446 = vld [vmem:[#allocation17 + $0x40] sm:$0xff]
    %v2447 = vld [vmem:[#allocation17 + $0x48] sm:$0xff]
    %v2448 = vld [vmem:[#allocation17 + $0x50] sm:$0xff]
    %v2449 = vld [vmem:[#allocation17 + $0x58] sm:$0xff]
    %v2450 = vld [vmem:[#allocation17 + $0x60] sm:$0xff]
    %v2451 = vld [vmem:[#allocation17 + $0x68] sm:$0xff]
    %v2452 = vld [vmem:[#allocation17 + $0x70] sm:$0xff]
    %v2453 = vld [vmem:[#allocation17 + $0x78] sm:$0xff]
    %v2454 = vld [vmem:[%s16] sm:$0x1]
    %v2456 = vlaneseq
    %v2457 = vshrl.u32 %v2456, 7
    %v2458 = vsub.s32 0, %v2457
    %v2459 = vrot.slane %v2454, %v2458
    %2461 = vmatprep.subr.mxu0 0.0
    %2462 = vmatpush1.msra.mxu0 %v2438
    %2463 = vmatprep.subr.mxu0 0.0
    %2464 = vmatpush1.msra.mxu0 %v2439
    %2465 = vmatprep.subr.mxu0 0.0
    %2466 = vmatpush1.msra.mxu0 %v2440
    %2467 = vmatprep.subr.mxu0 0.0
    %2468 = vmatpush1.msra.mxu0 %v2441
    %2469 = vmatprep.subr.mxu0 0.0
    %2470 = vmatpush1.msra.mxu0 %v2442
    %2471 = vmatprep.subr.mxu0 0.0
    %2472 = vmatpush1.msra.mxu0 %v2443
    %2473 = vmatprep.subr.mxu0 0.0
    %2474 = vmatpush1.msra.mxu0 %v2444
    %2475 = vmatprep.subr.mxu0 0.0
    %2476 = vmatpush1.msra.mxu0 %v2445
    %2477 = vmatprep.subr.mxu0 0.0
    %2478 = vmatpush1.msra.mxu0 %v2446
    %2479 = vmatprep.subr.mxu0 0.0
    %2480 = vmatpush1.msra.mxu0 %v2447
    %2481 = vmatprep.subr.mxu0 0.0
    %2482 = vmatpush1.msra.mxu0 %v2448
    %2483 = vmatprep.subr.mxu0 0.0
    %2484 = vmatpush1.msra.mxu0 %v2449
    %2485 = vmatprep.subr.mxu0 0.0
    %2486 = vmatpush1.msra.mxu0 %v2450
    %2487 = vmatprep.subr.mxu0 0.0
    %2488 = vmatpush1.msra.mxu0 %v2451
    %2489 = vmatprep.subr.mxu0 0.0
    %2490 = vmatpush1.msra.mxu0 %v2452
    %2491 = vmatprep.subr.mxu0 0.0
    %2492 = vmatpush1.msra.mxu0 %v2453
    %2493 = vmatprep.subr.mxu0 0.0
    %2494 = vmatpush1.msra.mxu0 0.0
    %2495 = vmatprep.subr.mxu0 0.0
    %2496 = vmatpush1.msra.mxu0 0.0
    %2497 = vmatprep.subr.mxu0 0.0
    %2498 = vmatpush1.msra.mxu0 0.0
    %2499 = vmatprep.subr.mxu0 0.0
    %2500 = vmatpush1.msra.mxu0 0.0
    %2501 = vmatprep.subr.mxu0 0.0
    %2502 = vmatpush1.msra.mxu0 0.0
    %2503 = vmatprep.subr.mxu0 0.0
    %2504 = vmatpush1.msra.mxu0 0.0
    %2505 = vmatprep.subr.mxu0 0.0
    %2506 = vmatpush1.msra.mxu0 0.0
    %2507 = vmatprep.subr.mxu0 0.0
    %2508 = vmatpush1.msra.mxu0 0.0
    %2509 = vmatprep.subr.mxu0 0.0
    %2510 = vmatpush1.msra.mxu0 0.0
    %2511 = vmatprep.subr.mxu0 0.0
    %2512 = vmatpush1.msra.mxu0 0.0
    %2513 = vmatprep.subr.mxu0 0.0
    %2514 = vmatpush1.msra.mxu0 0.0
    %2515 = vmatprep.subr.mxu0 0.0
    %2516 = vmatpush1.msra.mxu0 0.0
    %2517 = vmatprep.subr.mxu0 0.0
    %2518 = vmatpush1.msra.mxu0 0.0
    %2519 = vmatprep.subr.mxu0 0.0
    %2520 = vmatpush1.msra.mxu0 0.0
    %2521 = vmatprep.subr.mxu0 0.0
    %2522 = vmatpush1.msra.mxu0 0.0
    %2523 = vmatprep.subr.mxu0 0.0
    %2524 = vmatpush1.msra.mxu0 0.0
    %2525 = vmatprep.mubr.f32.mxu0 0.0
    %2526 = vmatmul.mubr.f32.gmra.mrb[0].mxu0 %v1753
    %v2527 = vpop.f32.mrb[0].mxu0
    %v2528 = vadd.f32 %v2459, %v2527
    %v2529 = vpop.f32.mrb[0].mxu0
    %2530 = vmatprep.mubr.f32.mxu0 0.0
    %2531 = vmatmul.mubr.f32.gmra.mrb[0].mxu0 %v1754
    %v2532 = vpop.f32.mrb[0].mxu0
    %v2533 = vadd.f32 %v2459, %v2532
    %v2534 = vpop.f32.mrb[0].mxu0
    %2535 = vmatprep.mubr.f32.mxu0 0.0
    %2536 = vmatmul.mubr.f32.gmra.mrb[0].mxu0 %v1756
    %v2537 = vpop.f32.mrb[0].mxu0
    %v2538 = vadd.f32 %v2459, %v2537
    %v2539 = vpop.f32.mrb[0].mxu0
    %2540 = vmatprep.mubr.f32.mxu0 0.0
    %2541 = vmatmul.mubr.f32.gmra.mrb[0].mxu0 %v1757
    %v2542 = vpop.f32.mrb[0].mxu0
    %v2543 = vadd.f32 %v2459, %v2542
    %v2544 = vpop.f32.mrb[0].mxu0
    %2545 = vdwg.mxu0
    %v2546 = vadd.f32 %v2434, %v2528
    %v2547 = vadd.f32 %v2435, %v2533
    %v2548 = vadd.f32 %v2436, %v2538
    %v2549 = vadd.f32 %v2437, %v2543
    %2550 = vst [vmem:[#allocation18] sm:$0xff] %v2546
    %2551 = vst [vmem:[#allocation18 + $0x8] sm:$0xff] %v2547
    %2552 = vst [vmem:[#allocation18 + $0x10] sm:$0xff] %v2548
    %2553 = vst [vmem:[#allocation18 + $0x18] sm:$0xff] %v2549
    // Predicated region
    $region106: #{tpu_custom_call.1} parent=1 // pred_check
      _
    $region107: #{tpu_custom_call.1} parent=1 // pred_check_branch
      %2555 = sbr.rel (0) target = $region109
    $region108: #{tpu_custom_call.1} parent=1 // pred_region
      %s2557 = ssub.s32 512, 512
      %2558 = vsyncadd [#allocation5], %s2557
      %s2559 = sshll.u32 [#allocation18], 4
      %s2560 = int_to_ptr.vmem [resolvable:$true] %s2559
      %2565 = dma.vmem_to_hbm [thread:$0]  %s2560, 512, %s17, [#allocation5], 128, 128, 8
    $region109: #{tpu_custom_call.1} parent=1 // pred_fallthru
      _
    // Predicated region
    $region110: #{tpu_custom_call.1} parent=1 // pred_check
      _
    $region111: #{tpu_custom_call.1} parent=1 // pred_check_branch
      %2567 = sbr.rel (0) target = $region113
    $region112: #{tpu_custom_call.1} parent=1 // pred_region
      %2568 = dma.done [#allocation5], 512
    $region113: #{tpu_custom_call.1} parent=1 // pred_fallthru
      _
    %2569 = vsyncpa [#allocation4], 1
    %2570 = vsyncpa [#allocation7], 1
    %2571 = vsyncpa [#allocation10], 1
    %2572 = vsyncpa [#allocation13], 1
    %2573 = vsyncpa [#allocation16], 1
    %2574 = vsyncpa [#allocation5], 1

</llo_original>
